<compile_context>
chip_gen: v7x
topology: tpu7x:2x2x1
jax: 0.10.0
libtpu: 0.0.40
codegen_flags: <defaults>
</compile_context>

<pallas_src>
import math

import jax
import jax.numpy as jnp
from jax.experimental import pallas as pl
from jax.experimental.pallas import tpu as pltpu

# ----------------------------- small config --------------------------------
B = 2            # batch
S = 8            # sequence length
D = 256          # hidden_size
H = 2            # num_attention_heads
KVH = 1          # num_key_value_heads  (GQA group = H // KVH = 2)
DH = D // H      # head_dim = 128 (lane aligned)
I = 512          # intermediate_size
V = 512          # vocab_size
L = 2            # number of decoder layers
RANK = 32        # query/key down-proj rank (4096 x rank in the original module)
EPS = 1e-6
ROPE_THETA = 10000.0

QKV_W = (H + 2 * KVH) * DH      # fused q|k|v output width = 512
GU_W = 2 * I                    # fused gate|up output width = 1024
GROUP = H // KVH
SCALE = 1.0 / math.sqrt(DH)
NEG_INF = -1e30                 # additive mask bias (scores stay f32)


# --------------------------- fused decoder kernel ---------------------------
def _fused_decoder_kernel(hidden0_ref, cos_ref, sin_ref, ln_ref, wqkv_ref,
                          wo_ref, wgu_ref, wd_ref, final_ln_ref, lm_head_ref,
                          logits_ref, kvcache_ref, x_vmem):
    """One grid step = one layer over the whole (B*S, D) token block.
    The residual stream lives in VMEM scratch across the layer axis; each
    layer's weights are DMA'd exactly once per forward pass."""
    li = pl.program_id(0)

    # Load embeddings into the resident activation scratch at the first layer.
    @pl.when(li == 0)
    def _():
        x_vmem[...] = hidden0_ref[...].astype(jnp.float32)

    cos = cos_ref[...]                 # (S, DH) f32
    sin_s = sin_ref[...]               # (S, DH) f32, sign-folded (first DH/2 lanes negated)
    ln_w = ln_ref[0]                   # (2, D)  f32: [input_ln, post_ln]
    input_ln = ln_w[0:1, :]
    post_ln = ln_w[1:2, :]

    def rmsnorm(v, w):                 # f32 math, LLaMA RMSNorm
        var = jnp.mean(v * v, axis=-1, keepdims=True)
        return v * jax.lax.rsqrt(var + EPS) * w

    def rope(t):                       # t: (S, DH) f32; rotate_half via XLU roll
        return t * cos + pltpu.roll(t, shift=DH // 2, axis=1) * sin_s

    x = x_vmem[...]                    # (B*S, D) f32 residual stream

    # --------------------------- attention block ---------------------------
    xn = rmsnorm(x, input_ln).astype(jnp.bfloat16)
    qkv = jnp.dot(xn, wqkv_ref[0], preferred_element_type=jnp.float32)  # (B*S, QKV_W)
    q = qkv[:, :H * DH] * SCALE                     # scale folded into q (f32)
    k = qkv[:, H * DH:(H + KVH) * DH]               # (B*S, KVH*DH)
    v = qkv[:, (H + KVH) * DH:]                     # (B*S, KVH*DH)

    # Fused kv-cache writeback: pre-RoPE projections (matches the reference,
    # which caches k/v before rotary is applied inside do_sdpa_attn; the GQA
    # repeat is done in the wrapper, outside the attention hot path).
    kvcache_ref[0] = jnp.concatenate([k, v], axis=-1).astype(kvcache_ref.dtype)

    # Additive causal bias built once per step, tiled for the stacked q heads.
    qi = jax.lax.broadcasted_iota(jnp.int32, (S, S), 0)
    kj = jax.lax.broadcasted_iota(jnp.int32, (S, S), 1)
    bias = jnp.where(qi >= kj, jnp.float32(0.0), jnp.float32(NEG_INF))   # (S, S)
    bias_g = jnp.concatenate([bias] * GROUP, axis=0)                     # (GROUP*S, S)

    batch_outs = []
    for b in range(B):                 # static unroll: attention stays per-sequence
        qb = q[b * S:(b + 1) * S]      # (S, H*DH) f32
        kb = k[b * S:(b + 1) * S]      # (S, KVH*DH)
        vb = v[b * S:(b + 1) * S]
        head_outs = [None] * H
        for g in range(KVH):           # GQA: one scores/PV matmul per kv head
            kg = rope(kb[:, g * DH:(g + 1) * DH]).astype(jnp.bfloat16)   # (S, DH)
            vg = vb[:, g * DH:(g + 1) * DH].astype(jnp.bfloat16)         # (S, DH)
            # Stack this kv head's query heads along rows -> (GROUP*S, DH).
            q_stack = jnp.concatenate(
                [rope(qb[:, h * DH:(h + 1) * DH])
                 for h in range(g * GROUP, (g + 1) * GROUP)],
                axis=0).astype(jnp.bfloat16)
            scores = jax.lax.dot_general(
                q_stack, kg, (((1,), (1,)), ((), ())),
                preferred_element_type=jnp.float32) + bias_g             # (GROUP*S, S) f32
            m = jnp.max(scores, axis=-1, keepdims=True)
            p = jnp.exp(scores - m)
            p = p * pl.reciprocal(jnp.sum(p, axis=-1, keepdims=True), approx=True)
            o = jnp.dot(p.astype(jnp.bfloat16), vg,
                        preferred_element_type=jnp.float32)              # (GROUP*S, DH)
            for j, h in enumerate(range(g * GROUP, (g + 1) * GROUP)):
                head_outs[h] = o[j * S:(j + 1) * S]                      # (S, DH)
        batch_outs.append(jnp.concatenate(head_outs, axis=-1))           # (S, H*DH)
    attn = jnp.concatenate(batch_outs, axis=0)                           # (B*S, H*DH)

    attn = jnp.dot(attn.astype(jnp.bfloat16), wo_ref[0],
                   preferred_element_type=jnp.float32)
    x = x + attn

    # ------------------------------ MLP block ------------------------------
    xn2 = rmsnorm(x, post_ln).astype(jnp.bfloat16)
    gu = jnp.dot(xn2, wgu_ref[0], preferred_element_type=jnp.float32)    # (B*S, 2I)
    g_act = gu[:, :I]
    u_act = gu[:, I:]
    hmid = (g_act * jax.nn.sigmoid(g_act)) * u_act                       # SiLU(g) * u, f32
    x = x + jnp.dot(hmid.astype(jnp.bfloat16), wd_ref[0],
                    preferred_element_type=jnp.float32)
    x_vmem[...] = x

    # ---------------- final norm + lm_head (last layer only) ---------------
    @pl.when(li == pl.num_programs(0) - 1)
    def _():
        xf = rmsnorm(x, final_ln_ref[...])
        logits_ref[...] = jnp.dot(xf.astype(jnp.bfloat16), lm_head_ref[...],
                                  preferred_element_type=jnp.float32)


def fused_forward(hidden0, cos, sin_signed, ln, wqkv, wo, wgu, wd, final_ln,
                  lm_head):
    """hidden0: (B*S, D) f32; cos/sin_signed: (S, DH) f32; stacked per-layer weights."""
    return pl.pallas_call(
        _fused_decoder_kernel,
        grid=(L,),
        in_specs=[
            pl.BlockSpec((B * S, D), lambda l: (0, 0)),            # hidden0
            pl.BlockSpec((S, DH), lambda l: (0, 0)),               # cos
            pl.BlockSpec((S, DH), lambda l: (0, 0)),               # sin (sign-folded)
            pl.BlockSpec((1, 2, D), lambda l: (l, 0, 0)),          # ln weights
            pl.BlockSpec((1, D, QKV_W), lambda l: (l, 0, 0)),      # wq|wk|wv
            pl.BlockSpec((1, H * DH, D), lambda l: (l, 0, 0)),     # wo
            pl.BlockSpec((1, D, GU_W), lambda l: (l, 0, 0)),       # wg|wu
            pl.BlockSpec((1, I, D), lambda l: (l, 0, 0)),          # wd
            pl.BlockSpec((1, D), lambda l: (0, 0)),                # final_ln
            pl.BlockSpec((D, V), lambda l: (0, 0)),                # lm_head
        ],
        out_specs=[
            pl.BlockSpec((B * S, V), lambda l: (0, 0)),                      # logits
            pl.BlockSpec((1, B * S, 2 * KVH * DH), lambda l: (l, 0, 0)),     # fused k|v cache
        ],
        out_shape=(
            jax.ShapeDtypeStruct((B * S, V), jnp.float32),
            jax.ShapeDtypeStruct((L, B * S, 2 * KVH * DH), jnp.float32),
        ),
        scratch_shapes=[pltpu.VMEM((B * S, D), jnp.float32)],
        compiler_params=pltpu.CompilerParams(
            # Single sequential layer axis; the residual stream is carried
            # through VMEM scratch.  No batch grid axis: at B=2 this kernel is
            # weight-DMA bound, so sharding batch across v7x's two TCs would
            # only duplicate the per-layer weight reads.
            dimension_semantics=("arbitrary",),
            vmem_limit_bytes=32 * 1024 * 1024),
    )(hidden0, cos, sin_signed, ln, wqkv, wo, wgu, wd, final_ln, lm_head)


# ------------------------------ glue (plain JAX) -----------------------------
def rope_tables(seq_len, head_dim):
    inv_freq = 1.0 / (ROPE_THETA ** (jnp.arange(0, head_dim, 2, dtype=jnp.float32)
                                     / head_dim))
    pos = jnp.arange(seq_len, dtype=jnp.float32)
    freqs = pos[:, None] * inv_freq[None, :]                 # (S, DH/2)
    emb = jnp.concatenate([freqs, freqs], axis=-1)           # (S, DH)
    cos = jnp.cos(emb)
    sin = jnp.sin(emb)
    # Fold rotate_half's sign into sin so the kernel uses a pure lane roll:
    # rotate_half(t) == roll(t, DH/2) * [-1]*(DH/2) ++ [+1]*(DH/2).
    sign = jnp.concatenate([-jnp.ones((head_dim // 2,), jnp.float32),
                            jnp.ones((head_dim // 2,), jnp.float32)])
    return cos, sin * sign[None, :]


def init_params(key):
    def dense(k, fan_in, fan_out, scale=0.02):
        return scale * jax.random.normal(k, (fan_in, fan_out), jnp.float32)

    def xavier(k, fan_in, fan_out):
        bound = math.sqrt(6.0 / (fan_in + fan_out))
        return jax.random.uniform(k, (fan_in, fan_out), jnp.float32,
                                  minval=-bound, maxval=bound)

    keys = jax.random.split(key, 2 + L)
    wqkv, wo, wgu, wd, ln, qdp, kdp = [], [], [], [], [], [], []
    for li in range(L):
        lk = jax.random.split(keys[2 + li], 10)
        wq = dense(lk[0], D, H * DH)
        wk = dense(lk[1], D, KVH * DH)
        wv = dense(lk[2], D, KVH * DH)
        wqkv.append(jnp.concatenate([wq, wk, wv], axis=1))          # fused QKV
        wo.append(dense(lk[3], H * DH, D))
        wgu.append(jnp.concatenate([dense(lk[4], D, I),
                                    dense(lk[5], D, I)], axis=1))   # fused G|U
        wd.append(dense(lk[6], I, D))
        ln.append(jnp.ones((2, D), jnp.float32))   # rows: [input_ln, post_ln]
        # Extra trainable params added by Decoder.__init__ (4096 x rank in the
        # original; scaled to this config's hidden size).
        # TODO(synk): do_sdpa_attn source not provided; in genacc these
        # down-projections do not alter the attention output, so they are
        # initialized but unused in this forward pass.
        qdp.append(xavier(lk[7], D, RANK))
        kdp.append(xavier(lk[8], D, RANK))

    return {
        "embed": 0.02 * jax.random.normal(keys[0], (V, D), jnp.float32),
        # lm_head kept bf16 for the MXU path; logits accumulate in f32.
        "lm_head": dense(keys[1], D, V).astype(jnp.bfloat16),
        "final_ln": jnp.ones((1, D), jnp.float32),
        "ln": jnp.stack(ln),                                  # (L, 2, D) f32
        "wqkv": jnp.stack(wqkv).astype(jnp.bfloat16),         # (L, D, 512)
        "wo": jnp.stack(wo).astype(jnp.bfloat16),             # (L, 256, 256)
        "wgu": jnp.stack(wgu).astype(jnp.bfloat16),           # (L, D, 1024)
        "wd": jnp.stack(wd).astype(jnp.bfloat16),             # (L, 512, 256)
        "query_down_proj": jnp.stack(qdp),                    # unused (see TODO)
        "key_down_proj": jnp.stack(kdp),                      # unused (see TODO)
    }


def decoder_forward(params, input_ids, labels=None):
    b, s = input_ids.shape
    # Embedding gather (tiny) stays in plain JAX.
    hidden0 = jnp.take(params["embed"], input_ids.reshape(-1), axis=0)  # (BS, D)
    cos, sin_signed = rope_tables(s, DH)

    logits_flat, kv_flat = fused_forward(
        hidden0, cos, sin_signed, params["ln"], params["wqkv"], params["wo"],
        params["wgu"], params["wd"], params["final_ln"], params["lm_head"])

    logits = logits_flat.reshape(b, s, V)

    # Reference caches K/V after repeat_kv (shape (B, H, S, DH)) and pre-RoPE;
    # the GQA repeat is done here (outside the attention hot path) to match it.
    kv_cache = []
    for li in range(L):
        kvl = kv_flat[li]                                      # (B*S, 2*KVH*DH)
        kh = kvl[:, :KVH * DH].reshape(b, s, KVH, DH).transpose(0, 2, 1, 3)
        vh = kvl[:, KVH * DH:].reshape(b, s, KVH, DH).transpose(0, 2, 1, 3)
        kv_cache.append((jnp.repeat(kh, H // KVH, axis=1),
                         jnp.repeat(vh, H // KVH, axis=1)))

    loss = None
    if labels is not None:
        shift_logits = logits[:, :-1, :].reshape(-1, V)
        shift_labels = labels[:, 1:].reshape(-1)
        logp = jax.nn.log_softmax(shift_logits, axis=-1)
        loss = -jnp.mean(
            jnp.take_along_axis(logp, shift_labels[:, None], axis=-1))
    return logits, loss, kv_cache


# ------------------------------------ main -----------------------------------
if __name__ == "__main__":
    key = jax.random.PRNGKey(0)
    pkey, ikey, lkey = jax.random.split(key, 3)
    params = init_params(pkey)
    input_ids = jax.random.randint(ikey, (B, S), 0, V, dtype=jnp.int32)
    labels = jax.random.randint(lkey, (B, S), 0, V, dtype=jnp.int32)

    logits, loss, kv_cache = decoder_forward(params, input_ids, labels)
    jax.block_until_ready(logits)
    jax.block_until_ready(loss)

    assert logits.shape == (B, S, V) and logits.dtype == jnp.float32
    assert kv_cache[0][0].shape == (B, H, S, DH)
    assert bool(jnp.isfinite(loss))
    print("KERNEL_OK")
</pallas_src>

<mosaic_0001>
module attributes {stable_mosaic.version = 11 : i64} {
  func.func @_fused_decoder_kernel(%arg0: i32, %arg1: memref<16x256xf32, #tpu.memory_space<vmem>>, %arg2: memref<8x128xf32, #tpu.memory_space<vmem>>, %arg3: memref<8x128xf32, #tpu.memory_space<vmem>>, %arg4: memref<1x2x256xf32, #tpu.memory_space<vmem>>, %arg5: memref<1x256x512xbf16, #tpu.memory_space<vmem>>, %arg6: memref<1x256x256xbf16, #tpu.memory_space<vmem>>, %arg7: memref<1x256x1024xbf16, #tpu.memory_space<vmem>>, %arg8: memref<1x512x256xbf16, #tpu.memory_space<vmem>>, %arg9: memref<1x256xf32, #tpu.memory_space<vmem>>, %arg10: memref<256x512xbf16, #tpu.memory_space<vmem>>, %arg11: memref<16x512xf32, #tpu.memory_space<vmem>>, %arg12: memref<1x16x256xf32, #tpu.memory_space<vmem>>, %arg13: memref<16x256xf32, #tpu.memory_space<vmem>>) attributes {dimension_semantics = [#tpu.dimension_semantics<arbitrary>], iteration_bounds = array<i64: 2>, scalar_prefetch = 0 : i64, scratch_operands = 1 : i64, tpu.core_type = #tpu.core_type<tc>, window_params = [{pipeline_mode = #tpu.pipeline_mode<synchronous>, transform_indices = @transform_0, window_bounds = array<i64: 16, 256>}, {pipeline_mode = #tpu.pipeline_mode<synchronous>, transform_indices = @transform_1, window_bounds = array<i64: 8, 128>}, {pipeline_mode = #tpu.pipeline_mode<synchronous>, transform_indices = @transform_2, window_bounds = array<i64: 8, 128>}, {transform_indices = @transform_3, window_bounds = array<i64: 1, 2, 256>}, {transform_indices = @transform_4, window_bounds = array<i64: 1, 256, 512>}, {transform_indices = @transform_5, window_bounds = array<i64: 1, 256, 256>}, {transform_indices = @transform_6, window_bounds = array<i64: 1, 256, 1024>}, {transform_indices = @transform_7, window_bounds = array<i64: 1, 512, 256>}, {pipeline_mode = #tpu.pipeline_mode<synchronous>, transform_indices = @transform_8, window_bounds = array<i64: 1, 256>}, {pipeline_mode = #tpu.pipeline_mode<synchronous>, transform_indices = @transform_9, window_bounds = array<i64: 256, 512>}, {pipeline_mode = #tpu.pipeline_mode<synchronous>, transform_indices = @transform_10, window_bounds = array<i64: 16, 512>}, {transform_indices = @transform_11, window_bounds = array<i64: 1, 16, 256>}]} {
    %c0_i32 = arith.constant 0 : i32
    %0 = arith.cmpi eq, %arg0, %c0_i32 : i32
    %1 = arith.extui %0 : i1 to i32
    %c0_i32_0 = arith.constant 0 : i32
    %2 = arith.cmpi ne, %1, %c0_i32_0 : i32
    scf.if %2 {
      %c0_53 = arith.constant 0 : index
      %c0_54 = arith.constant 0 : index
      %158 = vector.load %arg1[%c0_53, %c0_54] : memref<16x256xf32, #tpu.memory_space<vmem>>, vector<16x256xf32>
      %c0_55 = arith.constant 0 : index
      %c0_56 = arith.constant 0 : index
      %159 = vector.load %arg13[%c0_55, %c0_56] : memref<16x256xf32, #tpu.memory_space<vmem>>, vector<16x256xf32>
      tpu.vector_store %arg13[%c0_55, %c0_56], %158 {strides = array<i32>} : memref<16x256xf32, #tpu.memory_space<vmem>>, vector<16x256xf32>,
    } else {
    }
    %c0 = arith.constant 0 : index
    %c0_1 = arith.constant 0 : index
    %3 = vector.load %arg2[%c0, %c0_1] : memref<8x128xf32, #tpu.memory_space<vmem>>, vector<8x128xf32>
    %c0_2 = arith.constant 0 : index
    %c0_3 = arith.constant 0 : index
    %4 = vector.load %arg3[%c0_2, %c0_3] : memref<8x128xf32, #tpu.memory_space<vmem>>, vector<8x128xf32>
    %c0_4 = arith.constant 0 : index
    %c0_5 = arith.constant 0 : index
    %c0_6 = arith.constant 0 : index
    %5 = vector.load %arg4[%c0_4, %c0_5, %c0_6] : memref<1x2x256xf32, #tpu.memory_space<vmem>>, vector<1x2x256xf32>
    %6 = vector.shape_cast %5 : vector<1x2x256xf32> to vector<2x256xf32>
    %7 = vector.extract_strided_slice %6 {offsets = [0, 0], sizes = [1, 256], strides = [1, 1]} : vector<2x256xf32> to vector<1x256xf32>
    %8 = vector.extract_strided_slice %6 {offsets = [1, 0], sizes = [1, 256], strides = [1, 1]} : vector<2x256xf32> to vector<1x256xf32>
    %c0_7 = arith.constant 0 : index
    %c0_8 = arith.constant 0 : index
    %9 = vector.load %arg13[%c0_7, %c0_8] : memref<16x256xf32, #tpu.memory_space<vmem>>, vector<16x256xf32>
    %10 = arith.mulf %9, %9 : vector<16x256xf32>
    %cst = arith.constant dense<0.000000e+00> : vector<16xf32>
    %11 = vector.multi_reduction <add>, %10, %cst [1] : vector<16x256xf32> to vector<16xf32>
    %12 = vector.shape_cast %11 : vector<16xf32> to vector<16x1xf32>
    %cst_9 = arith.constant 2.560000e+02 : f32
    %13 = vector.broadcast %cst_9 : f32 to vector<16x1xf32>
    %14 = arith.divf %12, %13 : vector<16x1xf32>
    %cst_10 = arith.constant 9.99999997E-7 : f32
    %15 = vector.broadcast %cst_10 : f32 to vector<16x1xf32>
    %16 = arith.addf %14, %15 : vector<16x1xf32>
    %17 = math.rsqrt %16 : vector<16x1xf32>
    %18 = vector.broadcast %17 : vector<16x1xf32> to vector<16x256xf32>
    %19 = arith.mulf %9, %18 : vector<16x256xf32>
    %20 = vector.broadcast %7 : vector<1x256xf32> to vector<16x256xf32>
    %21 = arith.mulf %19, %20 : vector<16x256xf32>
    %22 = arith.truncf %21 : vector<16x256xf32> to vector<16x256xbf16>
    %c0_11 = arith.constant 0 : index
    %c0_12 = arith.constant 0 : index
    %c0_13 = arith.constant 0 : index
    %23 = vector.load %arg5[%c0_11, %c0_12, %c0_13] : memref<1x256x512xbf16, #tpu.memory_space<vmem>>, vector<1x256x512xbf16>
    %24 = vector.shape_cast %23 : vector<1x256x512xbf16> to vector<256x512xbf16>
    %cst_14 = arith.constant dense<0.000000e+00> : vector<16x512xf32>
    %25 = tpu.matmul %22, %24, %cst_14 {dimension_numbers = #tpu.dot_dimension_numbers<[1], [0], [0], [1], [0, 0, 1, 1], [], []>} : vector<16x256xbf16>, vector<256x512xbf16>, vector<16x512xf32> -> vector<16x512xf32>
    %26 = vector.extract_strided_slice %25 {offsets = [0, 0], sizes = [16, 256], strides = [1, 1]} : vector<16x512xf32> to vector<16x256xf32>
    %cst_15 = arith.constant 0.0883883461 : f32
    %27 = vector.broadcast %cst_15 : f32 to vector<16x256xf32>
    %28 = arith.mulf %26, %27 : vector<16x256xf32>
    %29 = vector.extract_strided_slice %25 {offsets = [0, 256], sizes = [16, 128], strides = [1, 1]} : vector<16x512xf32> to vector<16x128xf32>
    %30 = vector.extract_strided_slice %25 {offsets = [0, 384], sizes = [16, 128], strides = [1, 1]} : vector<16x512xf32> to vector<16x128xf32>
    %31 = tpu.concatenate %29, %30 in 1 : vector<16x128xf32>, vector<16x128xf32> -> vector<16x256xf32>
    %c0_16 = arith.constant 0 : index
    %c0_17 = arith.constant 0 : index
    %c0_18 = arith.constant 0 : index
    %32 = vector.load %arg12[%c0_16, %c0_17, %c0_18] : memref<1x16x256xf32, #tpu.memory_space<vmem>>, vector<1x16x256xf32>
    %33 = vector.shape_cast %32 : vector<1x16x256xf32> to vector<16x256xf32>
    %34 = vector.shape_cast %31 : vector<16x256xf32> to vector<1x16x256xf32>
    tpu.vector_store %arg12[%c0_16, %c0_17, %c0_18], %34 {strides = array<i32>} : memref<1x16x256xf32, #tpu.memory_space<vmem>>, vector<1x16x256xf32>,
    %35 = tpu.iota {dimensions = array<i32: 0>} : vector<8x8xi32>
    %36 = tpu.iota {dimensions = array<i32: 1>} : vector<8x8xi32>
    %37 = arith.cmpi sge, %35, %36 : vector<8x8xi32>
    %cst_19 = arith.constant 0.000000e+00 : f32
    %cst_20 = arith.constant -1.000000e+30 : f32
    %38 = vector.broadcast %cst_19 : f32 to vector<8x8xf32>
    %39 = vector.broadcast %cst_20 : f32 to vector<8x8xf32>
    %40 = arith.select %37, %38, %39 : vector<8x8xi1>, vector<8x8xf32>
    %41 = tpu.concatenate %40, %40 in 0 : vector<8x8xf32>, vector<8x8xf32> -> vector<16x8xf32>
    %42 = vector.extract_strided_slice %28 {offsets = [0, 0], sizes = [8, 256], strides = [1, 1]} : vector<16x256xf32> to vector<8x256xf32>
    %43 = vector.extract_strided_slice %29 {offsets = [0, 0], sizes = [8, 128], strides = [1, 1]} : vector<16x128xf32> to vector<8x128xf32>
    %44 = vector.extract_strided_slice %30 {offsets = [0, 0], sizes = [8, 128], strides = [1, 1]} : vector<16x128xf32> to vector<8x128xf32>
    %45 = arith.mulf %43, %3 : vector<8x128xf32>
    %c64_i32 = arith.constant 64 : i32
    %46 = tpu.dynamic_rotate %43 by %c64_i32 dim 1 : vector<8x128xf32>, i32 -> vector<8x128xf32>
    %47 = arith.mulf %46, %4 : vector<8x128xf32>
    %48 = arith.addf %45, %47 : vector<8x128xf32>
    %49 = arith.truncf %48 : vector<8x128xf32> to vector<8x128xbf16>
    %50 = arith.truncf %44 : vector<8x128xf32> to vector<8x128xbf16>
    %51 = vector.extract_strided_slice %42 {offsets = [0, 0], sizes = [8, 128], strides = [1, 1]} : vector<8x256xf32> to vector<8x128xf32>
    %52 = arith.mulf %51, %3 : vector<8x128xf32>
    %c64_i32_21 = arith.constant 64 : i32
    %53 = tpu.dynamic_rotate %51 by %c64_i32_21 dim 1 : vector<8x128xf32>, i32 -> vector<8x128xf32>
    %54 = arith.mulf %53, %4 : vector<8x128xf32>
    %55 = arith.addf %52, %54 : vector<8x128xf32>
    %56 = vector.extract_strided_slice %42 {offsets = [0, 128], sizes = [8, 128], strides = [1, 1]} : vector<8x256xf32> to vector<8x128xf32>
    %57 = arith.mulf %56, %3 : vector<8x128xf32>
    %c64_i32_22 = arith.constant 64 : i32
    %58 = tpu.dynamic_rotate %56 by %c64_i32_22 dim 1 : vector<8x128xf32>, i32 -> vector<8x128xf32>
    %59 = arith.mulf %58, %4 : vector<8x128xf32>
    %60 = arith.addf %57, %59 : vector<8x128xf32>
    %61 = tpu.concatenate %55, %60 in 0 : vector<8x128xf32>, vector<8x128xf32> -> vector<16x128xf32>
    %62 = arith.truncf %61 : vector<16x128xf32> to vector<16x128xbf16>
    %cst_23 = arith.constant dense<0.000000e+00> : vector<16x8xf32>
    %63 = tpu.matmul %62, %49, %cst_23 {dimension_numbers = #tpu.dot_dimension_numbers<[1], [1], [0], [0], [0, 0, 1, 0], [], []>} : vector<16x128xbf16>, vector<8x128xbf16>, vector<16x8xf32> -> vector<16x8xf32>
    %64 = arith.addf %63, %41 : vector<16x8xf32>
    %cst_24 = arith.constant dense<0xFF800000> : vector<16xf32>
    %65 = vector.multi_reduction <maximumf>, %64, %cst_24 [1] : vector<16x8xf32> to vector<16xf32>
    %66 = vector.shape_cast %65 : vector<16xf32> to vector<16x1xf32>
    %67 = vector.broadcast %66 : vector<16x1xf32> to vector<16x8xf32>
    %68 = arith.subf %64, %67 : vector<16x8xf32>
    %69 = math.exp %68 : vector<16x8xf32>
    %cst_25 = arith.constant dense<0.000000e+00> : vector<16xf32>
    %70 = vector.multi_reduction <add>, %69, %cst_25 [1] : vector<16x8xf32> to vector<16xf32>
    %71 = vector.shape_cast %70 : vector<16xf32> to vector<16x1xf32>
    %72 = tpu.reciprocal %71 {approx = true} : vector<16x1xf32> -> vector<16x1xf32>
    %73 = vector.broadcast %72 : vector<16x1xf32> to vector<16x8xf32>
    %74 = arith.mulf %69, %73 : vector<16x8xf32>
    %75 = arith.truncf %74 : vector<16x8xf32> to vector<16x8xbf16>
    %cst_26 = arith.constant dense<0.000000e+00> : vector<16x128xf32>
    %76 = tpu.matmul %75, %50, %cst_26 {dimension_numbers = #tpu.dot_dimension_numbers<[1], [0], [0], [1], [0, 0, 1, 1], [], []>} : vector<16x8xbf16>, vector<8x128xbf16>, vector<16x128xf32> -> vector<16x128xf32>
    %77 = vector.extract_strided_slice %76 {offsets = [0, 0], sizes = [8, 128], strides = [1, 1]} : vector<16x128xf32> to vector<8x128xf32>
    %78 = vector.extract_strided_slice %76 {offsets = [8, 0], sizes = [8, 128], strides = [1, 1]} : vector<16x128xf32> to vector<8x128xf32>
    %79 = tpu.concatenate %77, %78 in 1 : vector<8x128xf32>, vector<8x128xf32> -> vector<8x256xf32>
    %80 = vector.extract_strided_slice %28 {offsets = [8, 0], sizes = [8, 256], strides = [1, 1]} : vector<16x256xf32> to vector<8x256xf32>
    %81 = vector.extract_strided_slice %29 {offsets = [8, 0], sizes = [8, 128], strides = [1, 1]} : vector<16x128xf32> to vector<8x128xf32>
    %82 = vector.extract_strided_slice %30 {offsets = [8, 0], sizes = [8, 128], strides = [1, 1]} : vector<16x128xf32> to vector<8x128xf32>
    %83 = arith.mulf %81, %3 : vector<8x128xf32>
    %c64_i32_27 = arith.constant 64 : i32
    %84 = tpu.dynamic_rotate %81 by %c64_i32_27 dim 1 : vector<8x128xf32>, i32 -> vector<8x128xf32>
    %85 = arith.mulf %84, %4 : vector<8x128xf32>
    %86 = arith.addf %83, %85 : vector<8x128xf32>
    %87 = arith.truncf %86 : vector<8x128xf32> to vector<8x128xbf16>
    %88 = arith.truncf %82 : vector<8x128xf32> to vector<8x128xbf16>
    %89 = vector.extract_strided_slice %80 {offsets = [0, 0], sizes = [8, 128], strides = [1, 1]} : vector<8x256xf32> to vector<8x128xf32>
    %90 = arith.mulf %89, %3 : vector<8x128xf32>
    %c64_i32_28 = arith.constant 64 : i32
    %91 = tpu.dynamic_rotate %89 by %c64_i32_28 dim 1 : vector<8x128xf32>, i32 -> vector<8x128xf32>
    %92 = arith.mulf %91, %4 : vector<8x128xf32>
    %93 = arith.addf %90, %92 : vector<8x128xf32>
    %94 = vector.extract_strided_slice %80 {offsets = [0, 128], sizes = [8, 128], strides = [1, 1]} : vector<8x256xf32> to vector<8x128xf32>
    %95 = arith.mulf %94, %3 : vector<8x128xf32>
    %c64_i32_29 = arith.constant 64 : i32
    %96 = tpu.dynamic_rotate %94 by %c64_i32_29 dim 1 : vector<8x128xf32>, i32 -> vector<8x128xf32>
    %97 = arith.mulf %96, %4 : vector<8x128xf32>
    %98 = arith.addf %95, %97 : vector<8x128xf32>
    %99 = tpu.concatenate %93, %98 in 0 : vector<8x128xf32>, vector<8x128xf32> -> vector<16x128xf32>
    %100 = arith.truncf %99 : vector<16x128xf32> to vector<16x128xbf16>
    %cst_30 = arith.constant dense<0.000000e+00> : vector<16x8xf32>
    %101 = tpu.matmul %100, %87, %cst_30 {dimension_numbers = #tpu.dot_dimension_numbers<[1], [1], [0], [0], [0, 0, 1, 0], [], []>} : vector<16x128xbf16>, vector<8x128xbf16>, vector<16x8xf32> -> vector<16x8xf32>
    %102 = arith.addf %101, %41 : vector<16x8xf32>
    %cst_31 = arith.constant dense<0xFF800000> : vector<16xf32>
    %103 = vector.multi_reduction <maximumf>, %102, %cst_31 [1] : vector<16x8xf32> to vector<16xf32>
    %104 = vector.shape_cast %103 : vector<16xf32> to vector<16x1xf32>
    %105 = vector.broadcast %104 : vector<16x1xf32> to vector<16x8xf32>
    %106 = arith.subf %102, %105 : vector<16x8xf32>
    %107 = math.exp %106 : vector<16x8xf32>
    %cst_32 = arith.constant dense<0.000000e+00> : vector<16xf32>
    %108 = vector.multi_reduction <add>, %107, %cst_32 [1] : vector<16x8xf32> to vector<16xf32>
    %109 = vector.shape_cast %108 : vector<16xf32> to vector<16x1xf32>
    %110 = tpu.reciprocal %109 {approx = true} : vector<16x1xf32> -> vector<16x1xf32>
    %111 = vector.broadcast %110 : vector<16x1xf32> to vector<16x8xf32>
    %112 = arith.mulf %107, %111 : vector<16x8xf32>
    %113 = arith.truncf %112 : vector<16x8xf32> to vector<16x8xbf16>
    %cst_33 = arith.constant dense<0.000000e+00> : vector<16x128xf32>
    %114 = tpu.matmul %113, %88, %cst_33 {dimension_numbers = #tpu.dot_dimension_numbers<[1], [0], [0], [1], [0, 0, 1, 1], [], []>} : vector<16x8xbf16>, vector<8x128xbf16>, vector<16x128xf32> -> vector<16x128xf32>
    %115 = vector.extract_strided_slice %114 {offsets = [0, 0], sizes = [8, 128], strides = [1, 1]} : vector<16x128xf32> to vector<8x128xf32>
    %116 = vector.extract_strided_slice %114 {offsets = [8, 0], sizes = [8, 128], strides = [1, 1]} : vector<16x128xf32> to vector<8x128xf32>
    %117 = tpu.concatenate %115, %116 in 1 : vector<8x128xf32>, vector<8x128xf32> -> vector<8x256xf32>
    %118 = tpu.concatenate %79, %117 in 0 : vector<8x256xf32>, vector<8x256xf32> -> vector<16x256xf32>
    %119 = arith.truncf %118 : vector<16x256xf32> to vector<16x256xbf16>
    %c0_34 = arith.constant 0 : index
    %c0_35 = arith.constant 0 : index
    %c0_36 = arith.constant 0 : index
    %120 = vector.load %arg6[%c0_34, %c0_35, %c0_36] : memref<1x256x256xbf16, #tpu.memory_space<vmem>>, vector<1x256x256xbf16>
    %121 = vector.shape_cast %120 : vector<1x256x256xbf16> to vector<256x256xbf16>
    %cst_37 = arith.constant dense<0.000000e+00> : vector<16x256xf32>
    %122 = tpu.matmul %119, %121, %cst_37 {dimension_numbers = #tpu.dot_dimension_numbers<[1], [0], [0], [1], [0, 0, 1, 1], [], []>} : vector<16x256xbf16>, vector<256x256xbf16>, vector<16x256xf32> -> vector<16x256xf32>
    %123 = arith.addf %9, %122 : vector<16x256xf32>
    %124 = arith.mulf %123, %123 : vector<16x256xf32>
    %cst_38 = arith.constant dense<0.000000e+00> : vector<16xf32>
    %125 = vector.multi_reduction <add>, %124, %cst_38 [1] : vector<16x256xf32> to vector<16xf32>
    %126 = vector.shape_cast %125 : vector<16xf32> to vector<16x1xf32>
    %cst_39 = arith.constant 2.560000e+02 : f32
    %127 = vector.broadcast %cst_39 : f32 to vector<16x1xf32>
    %128 = arith.divf %126, %127 : vector<16x1xf32>
    %cst_40 = arith.constant 9.99999997E-7 : f32
    %129 = vector.broadcast %cst_40 : f32 to vector<16x1xf32>
    %130 = arith.addf %128, %129 : vector<16x1xf32>
    %131 = math.rsqrt %130 : vector<16x1xf32>
    %132 = vector.broadcast %131 : vector<16x1xf32> to vector<16x256xf32>
    %133 = arith.mulf %123, %132 : vector<16x256xf32>
    %134 = vector.broadcast %8 : vector<1x256xf32> to vector<16x256xf32>
    %135 = arith.mulf %133, %134 : vector<16x256xf32>
    %136 = arith.truncf %135 : vector<16x256xf32> to vector<16x256xbf16>
    %c0_41 = arith.constant 0 : index
    %c0_42 = arith.constant 0 : index
    %c0_43 = arith.constant 0 : index
    %137 = vector.load %arg7[%c0_41, %c0_42, %c0_43] : memref<1x256x1024xbf16, #tpu.memory_space<vmem>>, vector<1x256x1024xbf16>
    %138 = vector.shape_cast %137 : vector<1x256x1024xbf16> to vector<256x1024xbf16>
    %cst_44 = arith.constant dense<0.000000e+00> : vector<16x1024xf32>
    %139 = tpu.matmul %136, %138, %cst_44 {dimension_numbers = #tpu.dot_dimension_numbers<[1], [0], [0], [1], [0, 0, 1, 1], [], []>} : vector<16x256xbf16>, vector<256x1024xbf16>, vector<16x1024xf32> -> vector<16x1024xf32>
    %140 = vector.extract_strided_slice %139 {offsets = [0, 0], sizes = [16, 512], strides = [1, 1]} : vector<16x1024xf32> to vector<16x512xf32>
    %141 = vector.extract_strided_slice %139 {offsets = [0, 512], sizes = [16, 512], strides = [1, 1]} : vector<16x1024xf32> to vector<16x512xf32>
    %142 = arith.negf %140 : vector<16x512xf32>
    %143 = math.exp %142 : vector<16x512xf32>
    %cst_45 = arith.constant 1.000000e+00 : f32
    %144 = vector.broadcast %cst_45 : f32 to vector<16x512xf32>
    %145 = arith.addf %144, %143 : vector<16x512xf32>
    %146 = arith.divf %144, %145 : vector<16x512xf32>
    %147 = arith.mulf %140, %146 : vector<16x512xf32>
    %148 = arith.mulf %147, %141 : vector<16x512xf32>
    %149 = arith.truncf %148 : vector<16x512xf32> to vector<16x512xbf16>
    %c0_46 = arith.constant 0 : index
    %c0_47 = arith.constant 0 : index
    %c0_48 = arith.constant 0 : index
    %150 = vector.load %arg8[%c0_46, %c0_47, %c0_48] : memref<1x512x256xbf16, #tpu.memory_space<vmem>>, vector<1x512x256xbf16>
    %151 = vector.shape_cast %150 : vector<1x512x256xbf16> to vector<512x256xbf16>
    %cst_49 = arith.constant dense<0.000000e+00> : vector<16x256xf32>
    %152 = tpu.matmul %149, %151, %cst_49 {dimension_numbers = #tpu.dot_dimension_numbers<[1], [0], [0], [1], [0, 0, 1, 1], [], []>} : vector<16x512xbf16>, vector<512x256xbf16>, vector<16x256xf32> -> vector<16x256xf32>
    %153 = arith.addf %123, %152 : vector<16x256xf32>
    %c0_50 = arith.constant 0 : index
    %c0_51 = arith.constant 0 : index
    %154 = vector.load %arg13[%c0_50, %c0_51] : memref<16x256xf32, #tpu.memory_space<vmem>>, vector<16x256xf32>
    tpu.vector_store %arg13[%c0_50, %c0_51], %153 {strides = array<i32>} : memref<16x256xf32, #tpu.memory_space<vmem>>, vector<16x256xf32>,
    %c1_i32 = arith.constant 1 : i32
    %155 = arith.cmpi eq, %arg0, %c1_i32 : i32
    %156 = arith.extui %155 : i1 to i32
    %c0_i32_52 = arith.constant 0 : i32
    %157 = arith.cmpi ne, %156, %c0_i32_52 : i32
    scf.if %157 {
      %c0_53 = arith.constant 0 : index
      %c0_54 = arith.constant 0 : index
      %158 = vector.load %arg9[%c0_53, %c0_54] : memref<1x256xf32, #tpu.memory_space<vmem>>, vector<1x256xf32>
      %159 = arith.mulf %153, %153 : vector<16x256xf32>
      %cst_55 = arith.constant dense<0.000000e+00> : vector<16xf32>
      %160 = vector.multi_reduction <add>, %159, %cst_55 [1] : vector<16x256xf32> to vector<16xf32>
      %161 = vector.shape_cast %160 : vector<16xf32> to vector<16x1xf32>
      %cst_56 = arith.constant 2.560000e+02 : f32
      %162 = vector.broadcast %cst_56 : f32 to vector<16x1xf32>
      %163 = arith.divf %161, %162 : vector<16x1xf32>
      %cst_57 = arith.constant 9.99999997E-7 : f32
      %164 = vector.broadcast %cst_57 : f32 to vector<16x1xf32>
      %165 = arith.addf %163, %164 : vector<16x1xf32>
      %166 = math.rsqrt %165 : vector<16x1xf32>
      %167 = vector.broadcast %166 : vector<16x1xf32> to vector<16x256xf32>
      %168 = arith.mulf %153, %167 : vector<16x256xf32>
      %169 = vector.broadcast %158 : vector<1x256xf32> to vector<16x256xf32>
      %170 = arith.mulf %168, %169 : vector<16x256xf32>
      %171 = arith.truncf %170 : vector<16x256xf32> to vector<16x256xbf16>
      %c0_58 = arith.constant 0 : index
      %c0_59 = arith.constant 0 : index
      %172 = vector.load %arg10[%c0_58, %c0_59] : memref<256x512xbf16, #tpu.memory_space<vmem>>, vector<256x512xbf16>
      %cst_60 = arith.constant dense<0.000000e+00> : vector<16x512xf32>
      %173 = tpu.matmul %171, %172, %cst_60 {dimension_numbers = #tpu.dot_dimension_numbers<[1], [0], [0], [1], [0, 0, 1, 1], [], []>} : vector<16x256xbf16>, vector<256x512xbf16>, vector<16x512xf32> -> vector<16x512xf32>
      %c0_61 = arith.constant 0 : index
      %c0_62 = arith.constant 0 : index
      %174 = vector.load %arg11[%c0_61, %c0_62] : memref<16x512xf32, #tpu.memory_space<vmem>>, vector<16x512xf32>
      tpu.vector_store %arg11[%c0_61, %c0_62], %173 {strides = array<i32>} : memref<16x512xf32, #tpu.memory_space<vmem>>, vector<16x512xf32>,
    } else {
    }
    return
  }
  func.func @transform_0(%arg0: i32) -> (i32, i32) {
    %c0_i32 = arith.constant 0 : i32
    %c0_i32_0 = arith.constant 0 : i32
    %c0_i32_1 = arith.constant 0 : i32
    return %c0_i32, %c0_i32_0 : i32, i32
  }
  func.func @transform_1(%arg0: i32) -> (i32, i32) {
    %c0_i32 = arith.constant 0 : i32
    %c0_i32_0 = arith.constant 0 : i32
    %c0_i32_1 = arith.constant 0 : i32
    return %c0_i32, %c0_i32_0 : i32, i32
  }
  func.func @transform_2(%arg0: i32) -> (i32, i32) {
    %c0_i32 = arith.constant 0 : i32
    %c0_i32_0 = arith.constant 0 : i32
    %c0_i32_1 = arith.constant 0 : i32
    return %c0_i32, %c0_i32_0 : i32, i32
  }
  func.func @transform_3(%arg0: i32) -> (i32, i32, i32) {
    %c0_i32 = arith.constant 0 : i32
    %c0_i32_0 = arith.constant 0 : i32
    %c0_i32_1 = arith.constant 0 : i32
    return %arg0, %c0_i32, %c0_i32_0 : i32, i32, i32
  }
  func.func @transform_4(%arg0: i32) -> (i32, i32, i32) {
    %c0_i32 = arith.constant 0 : i32
    %c0_i32_0 = arith.constant 0 : i32
    %c0_i32_1 = arith.constant 0 : i32
    return %arg0, %c0_i32, %c0_i32_0 : i32, i32, i32
  }
  func.func @transform_5(%arg0: i32) -> (i32, i32, i32) {
    %c0_i32 = arith.constant 0 : i32
    %c0_i32_0 = arith.constant 0 : i32
    %c0_i32_1 = arith.constant 0 : i32
    return %arg0, %c0_i32, %c0_i32_0 : i32, i32, i32
  }
  func.func @transform_6(%arg0: i32) -> (i32, i32, i32) {
    %c0_i32 = arith.constant 0 : i32
    %c0_i32_0 = arith.constant 0 : i32
    %c0_i32_1 = arith.constant 0 : i32
    return %arg0, %c0_i32, %c0_i32_0 : i32, i32, i32
  }
  func.func @transform_7(%arg0: i32) -> (i32, i32, i32) {
    %c0_i32 = arith.constant 0 : i32
    %c0_i32_0 = arith.constant 0 : i32
    %c0_i32_1 = arith.constant 0 : i32
    return %arg0, %c0_i32, %c0_i32_0 : i32, i32, i32
  }
  func.func @transform_8(%arg0: i32) -> (i32, i32) {
    %c0_i32 = arith.constant 0 : i32
    %c0_i32_0 = arith.constant 0 : i32
    %c0_i32_1 = arith.constant 0 : i32
    return %c0_i32, %c0_i32_0 : i32, i32
  }
  func.func @transform_9(%arg0: i32) -> (i32, i32) {
    %c0_i32 = arith.constant 0 : i32
    %c0_i32_0 = arith.constant 0 : i32
    %c0_i32_1 = arith.constant 0 : i32
    return %c0_i32, %c0_i32_0 : i32, i32
  }
  func.func @transform_10(%arg0: i32) -> (i32, i32) {
    %c0_i32 = arith.constant 0 : i32
    %c0_i32_0 = arith.constant 0 : i32
    %c0_i32_1 = arith.constant 0 : i32
    return %c0_i32, %c0_i32_0 : i32, i32
  }
  func.func @transform_11(%arg0: i32) -> (i32, i32, i32) {
    %c0_i32 = arith.constant 0 : i32
    %c0_i32_0 = arith.constant 0 : i32
    %c0_i32_1 = arith.constant 0 : i32
    return %arg0, %c0_i32, %c0_i32_0 : i32, i32, i32
  }
}

</mosaic_0001>

<llo_original>
// kernel: tpu_custom_call.1
$region0: #{tpu_custom_call.1}
  #allocation0 [shape = 'u32[]', space=smem, size = 0x4, offset = 0x4, fixed_abs, tag = 'smem constant byte address 0x4 - core index']
  #allocation1 [shape = 'u32[144,128]{1,0:T(1,128)}', space=vmem, size = 0x12000, scoped, tag = 'internal scratch']
  #allocation2 [shape = 'f32[16,256]{1,0:T(8,128)}', space=vmem, size = 0x4000, scoped, tag = 'scratch operand']
  %s0 = inlined_call_operand.hbm [shape: f32[16,256], index: 0, kind: input, shape index: {}]
  %s1 = inlined_call_operand.hbm [shape: f32[8,128], index: 1, kind: input, shape index: {}]
  %s2 = inlined_call_operand.hbm [shape: f32[8,128], index: 2, kind: input, shape index: {}]
  %s3 = inlined_call_operand.vmem [shape: f32[2,2,256], index: 3, kind: input, shape index: {}]
  %s4 = inlined_call_operand.hbm [shape: bf16[2,256,512], index: 4, kind: input, shape index: {}]
  %s5 = inlined_call_operand.hbm [shape: bf16[2,256,256], index: 5, kind: input, shape index: {}]
  %s6 = inlined_call_operand.hbm [shape: bf16[2,256,1024], index: 6, kind: input, shape index: {}]
  %s7 = inlined_call_operand.hbm [shape: bf16[2,512,256], index: 7, kind: input, shape index: {}]
  %s8 = inlined_call_operand.vmem [shape: f32[1,256], index: 8, kind: input, shape index: {}]
  %s9 = inlined_call_operand.hbm [shape: bf16[256,512], index: 9, kind: input, shape index: {}]
  %s10 = inlined_call_operand.hbm [shape: f32[16,512], index: 10, kind: output, shape index: {0}]
  %s11 = inlined_call_operand.hbm [shape: f32[2,16,256], index: 11, kind: output, shape index: {1}]
  %12 = xla_tuple %s10, %s11
  %s13 = sld [smem:[#allocation0]]
  $region121: #{tpu_custom_call.1} parent=0
    _
  %s15 = ssub.s32 1, %s13
  %s16 = scalar_select 0, %s15, %s13
  $region1: #{tpu_custom_call.1} parent=0
    #allocation3 [shape = 'u8[16384]{0}', space=vmem, size = 0x4000, scoped, tag = 'input window, operand 0, single buffered']
    #allocation4 [shape = 's32[2]{0}', space=sflag, size = 0x8, scoped, tag = 'scoped memory for tpu_custom_call.1']
    #allocation5 [shape = 's32[2]{0}', space=sflag, size = 0x8, scoped, tag = 'scoped memory for tpu_custom_call.1']
    #allocation6 [shape = 'u8[4096]{0}', space=vmem, size = 0x1000, scoped, tag = 'input window, operand 1, single buffered']
    #allocation7 [shape = 's32[1]{0}', space=sflag, size = 0x4, scoped, tag = 'scoped memory for tpu_custom_call.1']
    #allocation8 [shape = 'u8[4096]{0}', space=vmem, size = 0x1000, scoped, tag = 'input window, operand 2, single buffered']
    #allocation9 [shape = 'u8[524288]{0}', space=vmem, size = 0x80000, scoped, tag = 'input window, operand 4']
    #allocation10 [shape = 's32[2]{0}', space=sflag, size = 0x8, scoped, tag = 'scoped memory for tpu_custom_call.1']
    #allocation11 [shape = 'u8[262144]{0}', space=vmem, size = 0x40000, scoped, tag = 'input window, operand 5']
    #allocation12 [shape = 'u8[1048576]{0}', space=vmem, size = 0x100000, scoped, tag = 'input window, operand 6']
    #allocation13 [shape = 's32[2]{0}', space=sflag, size = 0x8, scoped, tag = 'scoped memory for tpu_custom_call.1']
    #allocation14 [shape = 'u8[524288]{0}', space=vmem, size = 0x80000, scoped, tag = 'input window, operand 7']
    #allocation15 [shape = 'u8[262144]{0}', space=vmem, size = 0x40000, scoped, tag = 'input window, operand 9, single buffered']
    #allocation16 [shape = 's32[1]{0}', space=sflag, size = 0x4, scoped, tag = 'scoped memory for tpu_custom_call.1']
    #allocation17 [shape = 'u8[32768]{0}', space=vmem, size = 0x8000, scoped, tag = 'output window, operand 0, single buffered']
    #allocation18 [shape = 'u8[32768]{0}', space=vmem, size = 0x8000, scoped, tag = 'output window, operand 1']
    #allocation19 [shape = 's32[2]{0}', space=sflag, size = 0x8, scoped, tag = 'scoped memory for tpu_custom_call.1']
    %17 = vsyncpa [#allocation4], 0
    %18 = vsyncpa [#allocation7], 0
    %19 = vsyncpa [#allocation10], 0
    %s20 = scalar_lea.sflag [#allocation10], 1
    %21 = vsyncpa %s20, 0
    %22 = vsyncpa [#allocation13], 0
    %s23 = scalar_lea.sflag [#allocation13], 1
    %24 = vsyncpa %s23, 0
    %25 = vsyncpa [#allocation16], 0
    %26 = vsyncpa [#allocation5], 0
    %27 = vsyncpa [#allocation19], 0
    %s28 = scalar_lea.sflag [#allocation19], 1
    %29 = vsyncpa %s28, 0
    loop: start=0, step=1, limit=4
    $region2: #{tpu_custom_call.1} parent=1 // loop_pre_header
      _
    $region3: #{tpu_custom_call.1} parent=1 // loop_header
      %s31 = sphi 0, %s35
      %p32 = scmp.ge.s32.totalorder %s31, 4
      %s39 = sphi 0, %s39
      %s41 = sphi 0, %s39
      %s42 = sphi 0, %s41
      %s56 = sphi 0, %s42
      %s60 = sphi 0, %s60
      %s62 = sphi 0, %s60
      %s63 = sphi 0, %s62
      %s77 = sphi 0, %s63
      %s81 = sphi 0, %s81
      %s83 = sphi 0, %s81
      %s84 = sphi 0, %s83
      %s98 = sphi 0, %s84
      %s104 = sphi 0, %s106
      %s107 = sphi 0, %s104
      %s108 = sphi 0, %s107
      %s124 = sphi 0, %s108
      %s130 = sphi 0, %s132
      %s133 = sphi 0, %s130
      %s134 = sphi 0, %s133
      %s150 = sphi 0, %s134
      %s156 = sphi 0, %s158
      %s159 = sphi 0, %s156
      %s160 = sphi 0, %s159
      %s176 = sphi 0, %s160
      %s182 = sphi 0, %s184
      %s185 = sphi 0, %s182
      %s186 = sphi 0, %s185
      %s202 = sphi 0, %s186
      %s208 = sphi 0, %s210
      %s211 = sphi 0, %s208
      %s212 = sphi 0, %s211
      %s228 = sphi 0, %s212
      %s232 = sphi 0, %s232
      %s234 = sphi 0, %s232
      %s235 = sphi 0, %s234
      %s249 = sphi 0, %s235
      %s253 = sphi 0, %s253
      %s255 = sphi 0, %s253
      %s256 = sphi 0, %s255
      %s270 = sphi 0, %s256
      %s274 = sphi 0, %s274
      %s276 = sphi 0, %s274
      %s277 = sphi 0, %s276
      %s291 = sphi 0, %s277
      %s297 = sphi 0, %s299
      %s300 = sphi 0, %s297
      %s301 = sphi 0, %s300
      %s317 = sphi 0, %s301
    $region4: #{tpu_custom_call.1} parent=1 // loop_header_branch
      %34 = sbr.rel (%p32) target = $region8
    $region5: #{tpu_custom_call.1} parent=1 // loop_body
      %s36 = ssub.s32 %s31, 1
      %s37 = ssub.s32 %s31, 2
      %s38 = sadd.s32 %s31, 1
      %s40 = sadd.s32 %s39, 1
      %p43 = scmp.eq.s32.totalorder %s31, 1
      %p44 = scmp.ne.s32.totalorder %s39, %s41
      %p45 = scmp.eq.s32.totalorder %s31, 0
      %p46 = por %p44, %p45
      %p47 = scmp.ne.s32.totalorder %s39, %s41
      %p48 = scmp.eq.s32.totalorder %s36, 1
      %p49 = por %p47, %p48
      %p50 = scmp.ne.s32.totalorder %s41, %s42
      %p51 = scmp.eq.s32.totalorder %s36, 0
      %p52 = por %p50, %p51
      %p53 = scmp.ne.s32.totalorder %s41, %s42
      %p54 = scmp.eq.s32.totalorder %s37, 1
      %p55 = por %p53, %p54
      %p57 = scmp.ne.s32.totalorder %s42, %s56
      %p58 = scmp.eq.s32.totalorder %s37, 0
      %p59 = por %p57, %p58
      %s61 = sadd.s32 %s60, 1
      %p64 = scmp.eq.s32.totalorder %s31, 1
      %p65 = scmp.ne.s32.totalorder %s60, %s62
      %p66 = scmp.eq.s32.totalorder %s31, 0
      %p67 = por %p65, %p66
      %p68 = scmp.ne.s32.totalorder %s60, %s62
      %p69 = scmp.eq.s32.totalorder %s36, 1
      %p70 = por %p68, %p69
      %p71 = scmp.ne.s32.totalorder %s62, %s63
      %p72 = scmp.eq.s32.totalorder %s36, 0
      %p73 = por %p71, %p72
      %p74 = scmp.ne.s32.totalorder %s62, %s63
      %p75 = scmp.eq.s32.totalorder %s37, 1
      %p76 = por %p74, %p75
      %p78 = scmp.ne.s32.totalorder %s63, %s77
      %p79 = scmp.eq.s32.totalorder %s37, 0
      %p80 = por %p78, %p79
      %s82 = sadd.s32 %s81, 1
      %p85 = scmp.eq.s32.totalorder %s31, 1
      %p86 = scmp.ne.s32.totalorder %s81, %s83
      %p87 = scmp.eq.s32.totalorder %s31, 0
      %p88 = por %p86, %p87
      %p89 = scmp.ne.s32.totalorder %s81, %s83
      %p90 = scmp.eq.s32.totalorder %s36, 1
      %p91 = por %p89, %p90
      %p92 = scmp.ne.s32.totalorder %s83, %s84
      %p93 = scmp.eq.s32.totalorder %s36, 0
      %p94 = por %p92, %p93
      %p95 = scmp.ne.s32.totalorder %s83, %s84
      %p96 = scmp.eq.s32.totalorder %s37, 1
      %p97 = por %p95, %p96
      %p99 = scmp.ne.s32.totalorder %s84, %s98
      %p100 = scmp.eq.s32.totalorder %s37, 0
      %p101 = por %p99, %p100
      %s102 = ssub.s32 %s31, %s38
      %p103 = scmp.eq.s32.totalorder %s102, 0
      %s105 = sadd.s32 %s104, 1
      %s106 = scalar_select %p103, %s104, %s105
      %p109 = pneg %p103
      %p110 = scmp.eq.s32.totalorder %s31, 1
      %p111 = por %p109, %p110
      %p112 = scmp.ne.s32.totalorder %s104, %s107
      %p113 = scmp.eq.s32.totalorder %s31, 0
      %p114 = por %p112, %p113
      %p115 = scmp.ne.s32.totalorder %s104, %s107
      %p116 = scmp.eq.s32.totalorder %s36, 1
      %p117 = por %p115, %p116
      %p118 = scmp.ne.s32.totalorder %s107, %s108
      %p119 = scmp.eq.s32.totalorder %s36, 0
      %p120 = por %p118, %p119
      %p121 = scmp.ne.s32.totalorder %s107, %s108
      %p122 = scmp.eq.s32.totalorder %s37, 1
      %p123 = por %p121, %p122
      %p125 = scmp.ne.s32.totalorder %s108, %s124
      %p126 = scmp.eq.s32.totalorder %s37, 0
      %p127 = por %p125, %p126
      %s128 = ssub.s32 %s31, %s38
      %p129 = scmp.eq.s32.totalorder %s128, 0
      %s131 = sadd.s32 %s130, 1
      %s132 = scalar_select %p129, %s130, %s131
      %p135 = pneg %p129
      %p136 = scmp.eq.s32.totalorder %s31, 1
      %p137 = por %p135, %p136
      %p138 = scmp.ne.s32.totalorder %s130, %s133
      %p139 = scmp.eq.s32.totalorder %s31, 0
      %p140 = por %p138, %p139
      %p141 = scmp.ne.s32.totalorder %s130, %s133
      %p142 = scmp.eq.s32.totalorder %s36, 1
      %p143 = por %p141, %p142
      %p144 = scmp.ne.s32.totalorder %s133, %s134
      %p145 = scmp.eq.s32.totalorder %s36, 0
      %p146 = por %p144, %p145
      %p147 = scmp.ne.s32.totalorder %s133, %s134
      %p148 = scmp.eq.s32.totalorder %s37, 1
      %p149 = por %p147, %p148
      %p151 = scmp.ne.s32.totalorder %s134, %s150
      %p152 = scmp.eq.s32.totalorder %s37, 0
      %p153 = por %p151, %p152
      %s154 = ssub.s32 %s31, %s38
      %p155 = scmp.eq.s32.totalorder %s154, 0
      %s157 = sadd.s32 %s156, 1
      %s158 = scalar_select %p155, %s156, %s157
      %p161 = pneg %p155
      %p162 = scmp.eq.s32.totalorder %s31, 1
      %p163 = por %p161, %p162
      %p164 = scmp.ne.s32.totalorder %s156, %s159
      %p165 = scmp.eq.s32.totalorder %s31, 0
      %p166 = por %p164, %p165
      %p167 = scmp.ne.s32.totalorder %s156, %s159
      %p168 = scmp.eq.s32.totalorder %s36, 1
      %p169 = por %p167, %p168
      %p170 = scmp.ne.s32.totalorder %s159, %s160
      %p171 = scmp.eq.s32.totalorder %s36, 0
      %p172 = por %p170, %p171
      %p173 = scmp.ne.s32.totalorder %s159, %s160
      %p174 = scmp.eq.s32.totalorder %s37, 1
      %p175 = por %p173, %p174
      %p177 = scmp.ne.s32.totalorder %s160, %s176
      %p178 = scmp.eq.s32.totalorder %s37, 0
      %p179 = por %p177, %p178
      %s180 = ssub.s32 %s31, %s38
      %p181 = scmp.eq.s32.totalorder %s180, 0
      %s183 = sadd.s32 %s182, 1
      %s184 = scalar_select %p181, %s182, %s183
      %p187 = pneg %p181
      %p188 = scmp.eq.s32.totalorder %s31, 1
      %p189 = por %p187, %p188
      %p190 = scmp.ne.s32.totalorder %s182, %s185
      %p191 = scmp.eq.s32.totalorder %s31, 0
      %p192 = por %p190, %p191
      %p193 = scmp.ne.s32.totalorder %s182, %s185
      %p194 = scmp.eq.s32.totalorder %s36, 1
      %p195 = por %p193, %p194
      %p196 = scmp.ne.s32.totalorder %s185, %s186
      %p197 = scmp.eq.s32.totalorder %s36, 0
      %p198 = por %p196, %p197
      %p199 = scmp.ne.s32.totalorder %s185, %s186
      %p200 = scmp.eq.s32.totalorder %s37, 1
      %p201 = por %p199, %p200
      %p203 = scmp.ne.s32.totalorder %s186, %s202
      %p204 = scmp.eq.s32.totalorder %s37, 0
      %p205 = por %p203, %p204
      %s206 = ssub.s32 %s31, %s38
      %p207 = scmp.eq.s32.totalorder %s206, 0
      %s209 = sadd.s32 %s208, 1
      %s210 = scalar_select %p207, %s208, %s209
      %p213 = pneg %p207
      %p214 = scmp.eq.s32.totalorder %s31, 1
      %p215 = por %p213, %p214
      %p216 = scmp.ne.s32.totalorder %s208, %s211
      %p217 = scmp.eq.s32.totalorder %s31, 0
      %p218 = por %p216, %p217
      %p219 = scmp.ne.s32.totalorder %s208, %s211
      %p220 = scmp.eq.s32.totalorder %s36, 1
      %p221 = por %p219, %p220
      %p222 = scmp.ne.s32.totalorder %s211, %s212
      %p223 = scmp.eq.s32.totalorder %s36, 0
      %p224 = por %p222, %p223
      %p225 = scmp.ne.s32.totalorder %s211, %s212
      %p226 = scmp.eq.s32.totalorder %s37, 1
      %p227 = por %p225, %p226
      %p229 = scmp.ne.s32.totalorder %s212, %s228
      %p230 = scmp.eq.s32.totalorder %s37, 0
      %p231 = por %p229, %p230
      %s233 = sadd.s32 %s232, 1
      %p236 = scmp.eq.s32.totalorder %s31, 1
      %p237 = scmp.ne.s32.totalorder %s232, %s234
      %p238 = scmp.eq.s32.totalorder %s31, 0
      %p239 = por %p237, %p238
      %p240 = scmp.ne.s32.totalorder %s232, %s234
      %p241 = scmp.eq.s32.totalorder %s36, 1
      %p242 = por %p240, %p241
      %p243 = scmp.ne.s32.totalorder %s234, %s235
      %p244 = scmp.eq.s32.totalorder %s36, 0
      %p245 = por %p243, %p244
      %p246 = scmp.ne.s32.totalorder %s234, %s235
      %p247 = scmp.eq.s32.totalorder %s37, 1
      %p248 = por %p246, %p247
      %p250 = scmp.ne.s32.totalorder %s235, %s249
      %p251 = scmp.eq.s32.totalorder %s37, 0
      %p252 = por %p250, %p251
      %s254 = sadd.s32 %s253, 1
      %p257 = scmp.eq.s32.totalorder %s31, 1
      %p258 = scmp.ne.s32.totalorder %s253, %s255
      %p259 = scmp.eq.s32.totalorder %s31, 0
      %p260 = por %p258, %p259
      %p261 = scmp.ne.s32.totalorder %s253, %s255
      %p262 = scmp.eq.s32.totalorder %s36, 1
      %p263 = por %p261, %p262
      %p264 = scmp.ne.s32.totalorder %s255, %s256
      %p265 = scmp.eq.s32.totalorder %s36, 0
      %p266 = por %p264, %p265
      %p267 = scmp.ne.s32.totalorder %s255, %s256
      %p268 = scmp.eq.s32.totalorder %s37, 1
      %p269 = por %p267, %p268
      %p271 = scmp.ne.s32.totalorder %s256, %s270
      %p272 = scmp.eq.s32.totalorder %s37, 0
      %p273 = por %p271, %p272
      %s275 = sadd.s32 %s274, 1
      %p278 = scmp.eq.s32.totalorder %s31, 1
      %p279 = scmp.ne.s32.totalorder %s274, %s276
      %p280 = scmp.eq.s32.totalorder %s31, 0
      %p281 = por %p279, %p280
      %p282 = scmp.ne.s32.totalorder %s274, %s276
      %p283 = scmp.eq.s32.totalorder %s36, 1
      %p284 = por %p282, %p283
      %p285 = scmp.ne.s32.totalorder %s276, %s277
      %p286 = scmp.eq.s32.totalorder %s36, 0
      %p287 = por %p285, %p286
      %p288 = scmp.ne.s32.totalorder %s276, %s277
      %p289 = scmp.eq.s32.totalorder %s37, 1
      %p290 = por %p288, %p289
      %p292 = scmp.ne.s32.totalorder %s277, %s291
      %p293 = scmp.eq.s32.totalorder %s37, 0
      %p294 = por %p292, %p293
      %s295 = ssub.s32 %s31, %s38
      %p296 = scmp.eq.s32.totalorder %s295, 0
      %s298 = sadd.s32 %s297, 1
      %s299 = scalar_select %p296, %s297, %s298
      %p302 = pneg %p296
      %p303 = scmp.eq.s32.totalorder %s31, 1
      %p304 = por %p302, %p303
      %p305 = scmp.ne.s32.totalorder %s297, %s300
      %p306 = scmp.eq.s32.totalorder %s31, 0
      %p307 = por %p305, %p306
      %p308 = scmp.ne.s32.totalorder %s297, %s300
      %p309 = scmp.eq.s32.totalorder %s36, 1
      %p310 = por %p308, %p309
      %p311 = scmp.ne.s32.totalorder %s300, %s301
      %p312 = scmp.eq.s32.totalorder %s36, 0
      %p313 = por %p311, %p312
      %p314 = scmp.ne.s32.totalorder %s300, %s301
      %p315 = scmp.eq.s32.totalorder %s37, 1
      %p316 = por %p314, %p315
      %p318 = scmp.ne.s32.totalorder %s301, %s317
      %p319 = scmp.eq.s32.totalorder %s37, 0
      %p320 = por %p318, %p319
      %p321 = scmp.le.s32.totalorder 1, %s31
      %p322 = scmp.lt.s32.totalorder %s31, 3
      %p323 = pnand %p321, %p322
      %p324 = pneg %p323
      // Predicated region
      $region9: #{tpu_custom_call.1} parent=5 // pred_check
        _
      $region10: #{tpu_custom_call.1} parent=5 // pred_check_branch
        %326 = sbr.rel (%p323) target = $region12
      $region11: #{tpu_custom_call.1} parent=5 // pred_region
        %s327 = ssub.s32 %s31, 1
        // Predicated region
        $region13: #{tpu_custom_call.1} parent=11 // pred_check
          %p328 = pneg %p52
        $region14: #{tpu_custom_call.1} parent=11 // pred_check_branch
          %330 = sbr.rel (%p328) target = $region16
        $region15: #{tpu_custom_call.1} parent=11 // pred_region
          %s332 = ssub.s32 512, 512
          %333 = vsyncadd [#allocation4], %s332
          %s334 = sshll.u32 [#allocation3], 4
          %s335 = int_to_ptr.vmem [resolvable:$true] %s334
          %340 = dma.hbm_to_vmem [thread:$0]  %s0, 512, %s335, [#allocation4], 256, 256, 16
        $region16: #{tpu_custom_call.1} parent=11 // pred_fallthru
          _
        // Predicated region
        $region17: #{tpu_custom_call.1} parent=11 // pred_check
          %p341 = pneg %p73
        $region18: #{tpu_custom_call.1} parent=11 // pred_check_branch
          %343 = sbr.rel (%p341) target = $region20
        $region19: #{tpu_custom_call.1} parent=11 // pred_region
          %s345 = ssub.s32 128, 128
          %346 = vsyncadd [#allocation7], %s345
          %s348 = sshll.u32 [#allocation6], 4
          %s349 = int_to_ptr.vmem [resolvable:$true] %s348
          %351 = dma.hbm_to_vmem [thread:$0]  %s1, 128, %s349, [#allocation7]
        $region20: #{tpu_custom_call.1} parent=11 // pred_fallthru
          _
        // Predicated region
        $region21: #{tpu_custom_call.1} parent=11 // pred_check
          %p352 = pneg %p94
        $region22: #{tpu_custom_call.1} parent=11 // pred_check_branch
          %354 = sbr.rel (%p352) target = $region24
        $region23: #{tpu_custom_call.1} parent=11 // pred_region
          %s356 = ssub.s32 128, 128
          %357 = vsyncadd [#allocation7], %s356
          %s359 = sshll.u32 [#allocation8], 4
          %s360 = int_to_ptr.vmem [resolvable:$true] %s359
          %362 = dma.hbm_to_vmem [thread:$0]  %s2, 128, %s360, [#allocation7]
        $region24: #{tpu_custom_call.1} parent=11 // pred_fallthru
          _
        // Predicated region
        $region25: #{tpu_custom_call.1} parent=11 // pred_check
          %p363 = pneg %p245
        $region26: #{tpu_custom_call.1} parent=11 // pred_check_branch
          %365 = sbr.rel (%p363) target = $region28
        $region27: #{tpu_custom_call.1} parent=11 // pred_region
          _
        $region28: #{tpu_custom_call.1} parent=11 // pred_fallthru
          _
        // Predicated region
        $region29: #{tpu_custom_call.1} parent=11 // pred_check
          %p366 = pneg %p266
        $region30: #{tpu_custom_call.1} parent=11 // pred_check_branch
          %368 = sbr.rel (%p366) target = $region32
        $region31: #{tpu_custom_call.1} parent=11 // pred_region
          %s370 = ssub.s32 8192, 8192
          %371 = vsyncadd [#allocation16], %s370
          %s372 = sshll.u32 [#allocation15], 4
          %s373 = int_to_ptr.vmem [resolvable:$true] %s372
          %378 = dma.hbm_to_vmem [thread:$0]  %s9, 8192, %s373, [#allocation16], 256, 256, 16
        $region32: #{tpu_custom_call.1} parent=11 // pred_fallthru
          _
      $region12: #{tpu_custom_call.1} parent=5 // pred_fallthru
        _
      %p379 = scmp.lt.s32.totalorder %s31, 2
      // Predicated region
      $region33: #{tpu_custom_call.1} parent=5 // pred_check
        %p380 = pneg %p379
      $region34: #{tpu_custom_call.1} parent=5 // pred_check_branch
        %382 = sbr.rel (%p380) target = $region36
      $region35: #{tpu_custom_call.1} parent=5 // pred_region
        // Predicated region
        $region37: #{tpu_custom_call.1} parent=35 // pred_check
          %p383 = pneg %p114
        $region38: #{tpu_custom_call.1} parent=35 // pred_check_branch
          %385 = sbr.rel (%p383) target = $region40
        $region39: #{tpu_custom_call.1} parent=35 // pred_region
          %p386 = scmp.lt.s32.totalorder %s31, 1
          %s387 = scalar_select %p386, %s31, 1
          %s388 = smul.addr %s387, 2
          %s389 = smul.addr %s388, 2
          %s390 = scalar_lea.vmem %s3, %s389
        $region40: #{tpu_custom_call.1} parent=35 // pred_fallthru
          _
        // Predicated region
        $region41: #{tpu_custom_call.1} parent=35 // pred_check
          %p391 = pneg %p140
        $region42: #{tpu_custom_call.1} parent=35 // pred_check_branch
          %393 = sbr.rel (%p391) target = $region44
        $region43: #{tpu_custom_call.1} parent=35 // pred_region
          %s394 = sand.u32 %s31, 1
          %s395 = scalar_lea.sflag [#allocation10], %s394
          %s396 = sand.u32 %s130, 1
          %s397 = smul.addr %s396, 512
          %s398 = scalar_lea.vmem [#allocation9], %s397
          %s400 = ssub.s32 8192, 8192
          %401 = vsyncadd %s395, %s400
          %s402 = smul.addr %s31, 128
          %s403 = smul.addr %s402, 64
          %s404 = scalar_lea.hbm %s4, %s403
          %s405 = sshll.u32 %s398, 4
          %s406 = int_to_ptr.vmem [resolvable:$true] %s405
          %411 = dma.hbm_to_vmem [thread:$0]  %s404, 8192, %s406, %s395, 256, 256, 16
        $region44: #{tpu_custom_call.1} parent=35 // pred_fallthru
          _
        // Predicated region
        $region45: #{tpu_custom_call.1} parent=35 // pred_check
          %p412 = pneg %p166
        $region46: #{tpu_custom_call.1} parent=35 // pred_check_branch
          %414 = sbr.rel (%p412) target = $region48
        $region47: #{tpu_custom_call.1} parent=35 // pred_region
          %s415 = sand.u32 %s31, 1
          %s416 = scalar_lea.sflag [#allocation10], %s415
          %s417 = sand.u32 %s156, 1
          %s418 = smul.addr %s417, 256
          %s419 = scalar_lea.vmem [#allocation11], %s418
          %s421 = ssub.s32 4096, 4096
          %422 = vsyncadd %s416, %s421
          %s423 = smul.addr %s31, 64
          %s424 = smul.addr %s423, 64
          %s425 = scalar_lea.hbm %s5, %s424
          %s426 = sshll.u32 %s419, 4
          %s427 = int_to_ptr.vmem [resolvable:$true] %s426
          %432 = dma.hbm_to_vmem [thread:$0]  %s425, 4096, %s427, %s416, 128, 128, 8
        $region48: #{tpu_custom_call.1} parent=35 // pred_fallthru
          _
        // Predicated region
        $region49: #{tpu_custom_call.1} parent=35 // pred_check
          %p433 = pneg %p192
        $region50: #{tpu_custom_call.1} parent=35 // pred_check_branch
          %435 = sbr.rel (%p433) target = $region52
        $region51: #{tpu_custom_call.1} parent=35 // pred_region
          %s436 = sand.u32 %s31, 1
          %s437 = scalar_lea.sflag [#allocation13], %s436
          %s438 = sand.u32 %s182, 1
          %s439 = smul.addr %s438, 1024
          %s440 = scalar_lea.vmem [#allocation12], %s439
          %s442 = ssub.s32 16384, 16384
          %443 = vsyncadd %s437, %s442
          %s444 = smul.addr %s31, 256
          %s445 = smul.addr %s444, 64
          %s446 = scalar_lea.hbm %s6, %s445
          %s447 = sshll.u32 %s440, 4
          %s448 = int_to_ptr.vmem [resolvable:$true] %s447
          %453 = dma.hbm_to_vmem [thread:$0]  %s446, 16384, %s448, %s437, 512, 512, 32
        $region52: #{tpu_custom_call.1} parent=35 // pred_fallthru
          _
        // Predicated region
        $region53: #{tpu_custom_call.1} parent=35 // pred_check
          %p454 = pneg %p218
        $region54: #{tpu_custom_call.1} parent=35 // pred_check_branch
          %456 = sbr.rel (%p454) target = $region56
        $region55: #{tpu_custom_call.1} parent=35 // pred_region
          %s457 = sand.u32 %s31, 1
          %s458 = scalar_lea.sflag [#allocation13], %s457
          %s459 = sand.u32 %s208, 1
          %s460 = smul.addr %s459, 512
          %s461 = scalar_lea.vmem [#allocation14], %s460
          %s463 = ssub.s32 8192, 8192
          %464 = vsyncadd %s458, %s463
          %s465 = smul.addr %s31, 128
          %s466 = smul.addr %s465, 64
          %s467 = scalar_lea.hbm %s7, %s466
          %s468 = sshll.u32 %s461, 4
          %s469 = int_to_ptr.vmem [resolvable:$true] %s468
          %474 = dma.hbm_to_vmem [thread:$0]  %s467, 8192, %s469, %s458, 128, 128, 8
        $region56: #{tpu_custom_call.1} parent=35 // pred_fallthru
          _
      $region36: #{tpu_custom_call.1} parent=5 // pred_fallthru
        _
      %p475 = scmp.le.s32.totalorder 1, %s31
      %p476 = scmp.lt.s32.totalorder %s31, 3
      %p477 = pnand %p475, %p476
      %p478 = pneg %p477
      // Predicated region
      $region57: #{tpu_custom_call.1} parent=5 // pred_check
        _
      $region58: #{tpu_custom_call.1} parent=5 // pred_check_branch
        %480 = sbr.rel (%p477) target = $region60
      $region59: #{tpu_custom_call.1} parent=5 // pred_region
        %s481 = ssub.s32 %s31, 1
        // Predicated region
        $region61: #{tpu_custom_call.1} parent=59 // pred_check
          %p482 = pneg %p52
        $region62: #{tpu_custom_call.1} parent=59 // pred_check_branch
          %484 = sbr.rel (%p482) target = $region64
        $region63: #{tpu_custom_call.1} parent=59 // pred_region
          %485 = dma.done [#allocation4], 512
        $region64: #{tpu_custom_call.1} parent=59 // pred_fallthru
          _
        // Predicated region
        $region65: #{tpu_custom_call.1} parent=59 // pred_check
          %p486 = pneg %p73
        $region66: #{tpu_custom_call.1} parent=59 // pred_check_branch
          %488 = sbr.rel (%p486) target = $region68
        $region67: #{tpu_custom_call.1} parent=59 // pred_region
          %489 = dma.done [#allocation7], 128
        $region68: #{tpu_custom_call.1} parent=59 // pred_fallthru
          _
        // Predicated region
        $region69: #{tpu_custom_call.1} parent=59 // pred_check
          %p490 = pneg %p94
        $region70: #{tpu_custom_call.1} parent=59 // pred_check_branch
          %492 = sbr.rel (%p490) target = $region72
        $region71: #{tpu_custom_call.1} parent=59 // pred_region
          %493 = dma.done [#allocation7], 128
        $region72: #{tpu_custom_call.1} parent=59 // pred_fallthru
          _
        %s494 = sand.u32 %s36, 1
        %s495 = scalar_lea.sflag [#allocation10], %s494
        %s496 = sand.u32 %s133, 1
        %s497 = smul.addr %s496, 512
        %s498 = scalar_lea.vmem [#allocation9], %s497
        // Predicated region
        $region73: #{tpu_custom_call.1} parent=59 // pred_check
          %p499 = pneg %p146
        $region74: #{tpu_custom_call.1} parent=59 // pred_check_branch
          %501 = sbr.rel (%p499) target = $region76
        $region75: #{tpu_custom_call.1} parent=59 // pred_region
          %502 = dma.done %s495, 8192
        $region76: #{tpu_custom_call.1} parent=59 // pred_fallthru
          _
        %s503 = sand.u32 %s36, 1
        %s504 = scalar_lea.sflag [#allocation10], %s503
        %s505 = sand.u32 %s159, 1
        %s506 = smul.addr %s505, 256
        %s507 = scalar_lea.vmem [#allocation11], %s506
        // Predicated region
        $region77: #{tpu_custom_call.1} parent=59 // pred_check
          %p508 = pneg %p172
        $region78: #{tpu_custom_call.1} parent=59 // pred_check_branch
          %510 = sbr.rel (%p508) target = $region80
        $region79: #{tpu_custom_call.1} parent=59 // pred_region
          %511 = dma.done %s504, 4096
        $region80: #{tpu_custom_call.1} parent=59 // pred_fallthru
          _
        %s512 = sand.u32 %s36, 1
        %s513 = scalar_lea.sflag [#allocation13], %s512
        %s514 = sand.u32 %s185, 1
        %s515 = smul.addr %s514, 1024
        %s516 = scalar_lea.vmem [#allocation12], %s515
        // Predicated region
        $region81: #{tpu_custom_call.1} parent=59 // pred_check
          %p517 = pneg %p198
        $region82: #{tpu_custom_call.1} parent=59 // pred_check_branch
          %519 = sbr.rel (%p517) target = $region84
        $region83: #{tpu_custom_call.1} parent=59 // pred_region
          %520 = dma.done %s513, 16384
        $region84: #{tpu_custom_call.1} parent=59 // pred_fallthru
          _
        %s521 = sand.u32 %s36, 1
        %s522 = scalar_lea.sflag [#allocation13], %s521
        %s523 = sand.u32 %s211, 1
        %s524 = smul.addr %s523, 512
        %s525 = scalar_lea.vmem [#allocation14], %s524
        // Predicated region
        $region85: #{tpu_custom_call.1} parent=59 // pred_check
          %p526 = pneg %p224
        $region86: #{tpu_custom_call.1} parent=59 // pred_check_branch
          %528 = sbr.rel (%p526) target = $region88
        $region87: #{tpu_custom_call.1} parent=59 // pred_region
          %529 = dma.done %s522, 8192
        $region88: #{tpu_custom_call.1} parent=59 // pred_fallthru
          _
        // Predicated region
        $region89: #{tpu_custom_call.1} parent=59 // pred_check
          %p530 = pneg %p266
        $region90: #{tpu_custom_call.1} parent=59 // pred_check_branch
          %532 = sbr.rel (%p530) target = $region92
        $region91: #{tpu_custom_call.1} parent=59 // pred_region
          %533 = dma.done [#allocation16], 8192
        $region92: #{tpu_custom_call.1} parent=59 // pred_fallthru
          _
        %p534 = pneg %p52
        %p535 = pneg %p49
        %p536 = pneg %p73
        %p537 = pneg %p70
        %p538 = pneg %p94
        %p539 = pneg %p91
        %p540 = scmp.lt.s32.totalorder %s36, 1
        %s541 = scalar_select %p540, %s36, 1
        %s542 = smul.addr %s541, 2
        %s543 = smul.addr %s542, 2
        %s544 = scalar_lea.vmem %s3, %s543
        %p545 = pneg %p120
        %p546 = pneg %p117
        %s547 = sand.u32 %s36, 1
        %s548 = scalar_lea.sflag [#allocation10], %s547
        %s549 = sand.u32 %s133, 1
        %s550 = smul.addr %s549, 512
        %s551 = scalar_lea.vmem [#allocation9], %s550
        %p552 = pneg %p146
        %p553 = pneg %p143
        %s554 = sand.u32 %s36, 1
        %s555 = scalar_lea.sflag [#allocation10], %s554
        %s556 = sand.u32 %s159, 1
        %s557 = smul.addr %s556, 256
        %s558 = scalar_lea.vmem [#allocation11], %s557
        %p559 = pneg %p172
        %p560 = pneg %p169
        %s561 = sand.u32 %s36, 1
        %s562 = scalar_lea.sflag [#allocation13], %s561
        %s563 = sand.u32 %s185, 1
        %s564 = smul.addr %s563, 1024
        %s565 = scalar_lea.vmem [#allocation12], %s564
        %p566 = pneg %p198
        %p567 = pneg %p195
        %s568 = sand.u32 %s36, 1
        %s569 = scalar_lea.sflag [#allocation13], %s568
        %s570 = sand.u32 %s211, 1
        %s571 = smul.addr %s570, 512
        %s572 = scalar_lea.vmem [#allocation14], %s571
        %p573 = pneg %p224
        %p574 = pneg %p221
        %p575 = pneg %p245
        %p576 = pneg %p242
        %p577 = pneg %p266
        %p578 = pneg %p263
        %p579 = pneg %p287
        %p580 = pneg %p284
        %p581 = pneg %p313
        %p582 = pneg %p310
        %s583 = sand.u32 %s300, 1
        %s584 = scalar_lea.sflag [#allocation19], %s583
        %s585 = sand.u32 %s300, 1
        %s586 = smul.addr %s585, 32
        %s587 = scalar_lea.vmem [#allocation18], %s586
        %p588 = scmp.lt.s32.totalorder %s36, 1
        %s589 = scalar_select %p588, %s36, 1
        %s590 = smul.addr %s589, 2
        %s591 = smul.addr %s590, 2
        %s592 = scalar_lea.vmem %s3, %s591
        %p594 = scmp.eq.s32.totalorder %s36, 0
        // Predicated region
        $region93: #{tpu_custom_call.1} parent=59 // pred_check
          %p595 = pneg %p594
        $region94: #{tpu_custom_call.1} parent=59 // pred_check_branch
          %597 = sbr.rel (%p595) target = $region96
        $region95: #{tpu_custom_call.1} parent=59 // pred_region
          %v598 = vld [vmem:[#allocation3] sm:$0xff]
          %v599 = vld [vmem:[#allocation3 + $0x8] sm:$0xff]
          %v600 = vld [vmem:[#allocation3 + $0x10] sm:$0xff]
          %v601 = vld [vmem:[#allocation3 + $0x18] sm:$0xff]
          %602 = vst [vmem:[#allocation2] sm:$0xff] %v598
          %603 = vst [vmem:[#allocation2 + $0x8] sm:$0xff] %v599
          %604 = vst [vmem:[#allocation2 + $0x10] sm:$0xff] %v600
          %605 = vst [vmem:[#allocation2 + $0x18] sm:$0xff] %v601
        $region96: #{tpu_custom_call.1} parent=59 // pred_fallthru
          _
        %v606 = vld [vmem:[#allocation6] sm:$0xff]
        %v607 = vld [vmem:[#allocation8] sm:$0xff]
        %v608 = vld [vmem:[%s592] sm:$0xf]
        %v609 = vld [vmem:[#allocation2] sm:$0xff]
        %v610 = vld [vmem:[#allocation2 + $0x8] sm:$0xff]
        %v611 = vld [vmem:[#allocation2 + $0x10] sm:$0xff]
        %v612 = vld [vmem:[#allocation2 + $0x18] sm:$0xff]
        %v613 = vmul.f32 %v609, %v609
        %v614 = vmul.f32 %v610, %v610
        %v615 = vmul.f32 %v611, %v611
        %v616 = vmul.f32 %v612, %v612
        %v617 = vadd.f32 %v613, %v614
        %618 = vadd.xlane.f32.xlu0 %v617
        %v619 = vpop.xlane.xlu0 %618
        %v620 = vadd.f32 %v615, %v616
        %621 = vadd.xlane.f32.xlu0 %v620
        %v622 = vpop.xlane.xlu0 %621
        %v623 = vrcp.pop 256.0
        %v624 = vmul.f32 %v619, %v623
        %v625 = vmul.f32 %v622, %v623
        %v626 = vadd.f32 %v624, 1e-06
        %v627 = vadd.f32 %v625, 1e-06
        %v628 = vrsqrt.pop %v626
        %v629 = vrsqrt.pop %v627
        %v630 = vmul.f32 %v609, %v628
        %v631 = vmul.f32 %v610, %v628
        %v632 = vmul.f32 %v611, %v629
        %v633 = vmul.f32 %v612, %v629
        %v635 = vlaneseq
        %v636 = vshrl.u32 %v635, 7
        %v637 = vsub.s32 0, %v636
        %v638 = vrot.slane %v608, %v637
        %v639 = vlaneseq
        %v640 = vshrl.u32 %v639, 7
        %v641 = vsub.s32 2, %v640
        %v642 = vrot.slane %v608, %v641
        %v645 = vlaneseq
        %v646 = vshrl.u32 %v645, 7
        %v647 = vsub.s32 0, %v646
        %v648 = vrot.slane %v638, %v647
        %v649 = vlaneseq
        %v650 = vshrl.u32 %v649, 7
        %v651 = vsub.s32 0, %v650
        %v652 = vrot.slane %v642, %v651
        %v653 = vmul.f32 %v630, %v648
        %v654 = vmul.f32 %v631, %v652
        %v655 = vmul.f32 %v632, %v648
        %v656 = vmul.f32 %v633, %v652
        %v657 = vpack.c.bf16 %v655, %v653
        %v658 = vpack.c.bf16 %v656, %v654
        %v659 = vld [vmem:[%s498] sm:$0xff]
        %v660 = vld [vmem:[%s498 + $0x8] sm:$0xff]
        %v661 = vld [vmem:[%s498 + $0x10] sm:$0xff]
        %v662 = vld [vmem:[%s498 + $0x18] sm:$0xff]
        %v663 = vld [vmem:[%s498 + $0x20] sm:$0xff]
        %v664 = vld [vmem:[%s498 + $0x28] sm:$0xff]
        %v665 = vld [vmem:[%s498 + $0x30] sm:$0xff]
        %v666 = vld [vmem:[%s498 + $0x38] sm:$0xff]
        %v667 = vld [vmem:[%s498 + $0x40] sm:$0xff]
        %v668 = vld [vmem:[%s498 + $0x48] sm:$0xff]
        %v669 = vld [vmem:[%s498 + $0x50] sm:$0xff]
        %v670 = vld [vmem:[%s498 + $0x58] sm:$0xff]
        %v671 = vld [vmem:[%s498 + $0x60] sm:$0xff]
        %v672 = vld [vmem:[%s498 + $0x68] sm:$0xff]
        %v673 = vld [vmem:[%s498 + $0x70] sm:$0xff]
        %v674 = vld [vmem:[%s498 + $0x78] sm:$0xff]
        %v675 = vld [vmem:[%s498 + $0x80] sm:$0xff]
        %v676 = vld [vmem:[%s498 + $0x88] sm:$0xff]
        %v677 = vld [vmem:[%s498 + $0x90] sm:$0xff]
        %v678 = vld [vmem:[%s498 + $0x98] sm:$0xff]
        %v679 = vld [vmem:[%s498 + $0xa0] sm:$0xff]
        %v680 = vld [vmem:[%s498 + $0xa8] sm:$0xff]
        %v681 = vld [vmem:[%s498 + $0xb0] sm:$0xff]
        %v682 = vld [vmem:[%s498 + $0xb8] sm:$0xff]
        %v683 = vld [vmem:[%s498 + $0xc0] sm:$0xff]
        %v684 = vld [vmem:[%s498 + $0xc8] sm:$0xff]
        %v685 = vld [vmem:[%s498 + $0xd0] sm:$0xff]
        %v686 = vld [vmem:[%s498 + $0xd8] sm:$0xff]
        %v687 = vld [vmem:[%s498 + $0xe0] sm:$0xff]
        %v688 = vld [vmem:[%s498 + $0xe8] sm:$0xff]
        %v689 = vld [vmem:[%s498 + $0xf0] sm:$0xff]
        %v690 = vld [vmem:[%s498 + $0xf8] sm:$0xff]
        %v691 = vld [vmem:[%s498 + $0x100] sm:$0xff]
        %v692 = vld [vmem:[%s498 + $0x108] sm:$0xff]
        %v693 = vld [vmem:[%s498 + $0x110] sm:$0xff]
        %v694 = vld [vmem:[%s498 + $0x118] sm:$0xff]
        %v695 = vld [vmem:[%s498 + $0x120] sm:$0xff]
        %v696 = vld [vmem:[%s498 + $0x128] sm:$0xff]
        %v697 = vld [vmem:[%s498 + $0x130] sm:$0xff]
        %v698 = vld [vmem:[%s498 + $0x138] sm:$0xff]
        %v699 = vld [vmem:[%s498 + $0x140] sm:$0xff]
        %v700 = vld [vmem:[%s498 + $0x148] sm:$0xff]
        %v701 = vld [vmem:[%s498 + $0x150] sm:$0xff]
        %v702 = vld [vmem:[%s498 + $0x158] sm:$0xff]
        %v703 = vld [vmem:[%s498 + $0x160] sm:$0xff]
        %v704 = vld [vmem:[%s498 + $0x168] sm:$0xff]
        %v705 = vld [vmem:[%s498 + $0x170] sm:$0xff]
        %v706 = vld [vmem:[%s498 + $0x178] sm:$0xff]
        %v707 = vld [vmem:[%s498 + $0x180] sm:$0xff]
        %v708 = vld [vmem:[%s498 + $0x188] sm:$0xff]
        %v709 = vld [vmem:[%s498 + $0x190] sm:$0xff]
        %v710 = vld [vmem:[%s498 + $0x198] sm:$0xff]
        %v711 = vld [vmem:[%s498 + $0x1a0] sm:$0xff]
        %v712 = vld [vmem:[%s498 + $0x1a8] sm:$0xff]
        %v713 = vld [vmem:[%s498 + $0x1b0] sm:$0xff]
        %v714 = vld [vmem:[%s498 + $0x1b8] sm:$0xff]
        %v715 = vld [vmem:[%s498 + $0x1c0] sm:$0xff]
        %v716 = vld [vmem:[%s498 + $0x1c8] sm:$0xff]
        %v717 = vld [vmem:[%s498 + $0x1d0] sm:$0xff]
        %v718 = vld [vmem:[%s498 + $0x1d8] sm:$0xff]
        %v719 = vld [vmem:[%s498 + $0x1e0] sm:$0xff]
        %v720 = vld [vmem:[%s498 + $0x1e8] sm:$0xff]
        %v721 = vld [vmem:[%s498 + $0x1f0] sm:$0xff]
        %v722 = vld [vmem:[%s498 + $0x1f8] sm:$0xff]
        %v787 = vunpack.c.l.b16 %v659
        %v788 = vunpack.c.h.b16 %v659
        %v789 = vunpack.c.l.b16 %v660
        %v790 = vunpack.c.h.b16 %v660
        %v791 = vunpack.c.l.b16 %v661
        %v792 = vunpack.c.h.b16 %v661
        %v793 = vunpack.c.l.b16 %v662
        %v794 = vunpack.c.h.b16 %v662
        %v795 = vunpack.c.l.b16 %v663
        %v796 = vunpack.c.h.b16 %v663
        %v797 = vunpack.c.l.b16 %v664
        %v798 = vunpack.c.h.b16 %v664
        %v799 = vunpack.c.l.b16 %v665
        %v800 = vunpack.c.h.b16 %v665
        %v801 = vunpack.c.l.b16 %v666
        %v802 = vunpack.c.h.b16 %v666
        %v803 = vunpack.c.l.b16 %v667
        %v804 = vunpack.c.h.b16 %v667
        %v805 = vunpack.c.l.b16 %v668
        %v806 = vunpack.c.h.b16 %v668
        %v807 = vunpack.c.l.b16 %v669
        %v808 = vunpack.c.h.b16 %v669
        %v809 = vunpack.c.l.b16 %v670
        %v810 = vunpack.c.h.b16 %v670
        %v811 = vunpack.c.l.b16 %v671
        %v812 = vunpack.c.h.b16 %v671
        %v813 = vunpack.c.l.b16 %v672
        %v814 = vunpack.c.h.b16 %v672
        %v815 = vunpack.c.l.b16 %v673
        %v816 = vunpack.c.h.b16 %v673
        %v817 = vunpack.c.l.b16 %v674
        %v818 = vunpack.c.h.b16 %v674
        %v819 = vunpack.c.l.b16 %v675
        %v820 = vunpack.c.h.b16 %v675
        %v821 = vunpack.c.l.b16 %v676
        %v822 = vunpack.c.h.b16 %v676
        %v823 = vunpack.c.l.b16 %v677
        %v824 = vunpack.c.h.b16 %v677
        %v825 = vunpack.c.l.b16 %v678
        %v826 = vunpack.c.h.b16 %v678
        %v827 = vunpack.c.l.b16 %v679
        %v828 = vunpack.c.h.b16 %v679
        %v829 = vunpack.c.l.b16 %v680
        %v830 = vunpack.c.h.b16 %v680
        %v831 = vunpack.c.l.b16 %v681
        %v832 = vunpack.c.h.b16 %v681
        %v833 = vunpack.c.l.b16 %v682
        %v834 = vunpack.c.h.b16 %v682
        %v835 = vunpack.c.l.b16 %v683
        %v836 = vunpack.c.h.b16 %v683
        %v837 = vunpack.c.l.b16 %v684
        %v838 = vunpack.c.h.b16 %v684
        %v839 = vunpack.c.l.b16 %v685
        %v840 = vunpack.c.h.b16 %v685
        %v841 = vunpack.c.l.b16 %v686
        %v842 = vunpack.c.h.b16 %v686
        %v843 = vunpack.c.l.b16 %v687
        %v844 = vunpack.c.h.b16 %v687
        %v845 = vunpack.c.l.b16 %v688
        %v846 = vunpack.c.h.b16 %v688
        %v847 = vunpack.c.l.b16 %v689
        %v848 = vunpack.c.h.b16 %v689
        %v849 = vunpack.c.l.b16 %v690
        %v850 = vunpack.c.h.b16 %v690
        %v851 = vunpack.c.l.b16 %v691
        %v852 = vunpack.c.h.b16 %v691
        %v853 = vunpack.c.l.b16 %v692
        %v854 = vunpack.c.h.b16 %v692
        %v855 = vunpack.c.l.b16 %v693
        %v856 = vunpack.c.h.b16 %v693
        %v857 = vunpack.c.l.b16 %v694
        %v858 = vunpack.c.h.b16 %v694
        %v859 = vunpack.c.l.b16 %v695
        %v860 = vunpack.c.h.b16 %v695
        %v861 = vunpack.c.l.b16 %v696
        %v862 = vunpack.c.h.b16 %v696
        %v863 = vunpack.c.l.b16 %v697
        %v864 = vunpack.c.h.b16 %v697
        %v865 = vunpack.c.l.b16 %v698
        %v866 = vunpack.c.h.b16 %v698
        %v867 = vunpack.c.l.b16 %v699
        %v868 = vunpack.c.h.b16 %v699
        %v869 = vunpack.c.l.b16 %v700
        %v870 = vunpack.c.h.b16 %v700
        %v871 = vunpack.c.l.b16 %v701
        %v872 = vunpack.c.h.b16 %v701
        %v873 = vunpack.c.l.b16 %v702
        %v874 = vunpack.c.h.b16 %v702
        %v875 = vunpack.c.l.b16 %v703
        %v876 = vunpack.c.h.b16 %v703
        %v877 = vunpack.c.l.b16 %v704
        %v878 = vunpack.c.h.b16 %v704
        %v879 = vunpack.c.l.b16 %v705
        %v880 = vunpack.c.h.b16 %v705
        %v881 = vunpack.c.l.b16 %v706
        %v882 = vunpack.c.h.b16 %v706
        %v883 = vunpack.c.l.b16 %v707
        %v884 = vunpack.c.h.b16 %v707
        %v885 = vunpack.c.l.b16 %v708
        %v886 = vunpack.c.h.b16 %v708
        %v887 = vunpack.c.l.b16 %v709
        %v888 = vunpack.c.h.b16 %v709
        %v889 = vunpack.c.l.b16 %v710
        %v890 = vunpack.c.h.b16 %v710
        %v891 = vunpack.c.l.b16 %v711
        %v892 = vunpack.c.h.b16 %v711
        %v893 = vunpack.c.l.b16 %v712
        %v894 = vunpack.c.h.b16 %v712
        %v895 = vunpack.c.l.b16 %v713
        %v896 = vunpack.c.h.b16 %v713
        %v897 = vunpack.c.l.b16 %v714
        %v898 = vunpack.c.h.b16 %v714
        %v899 = vunpack.c.l.b16 %v715
        %v900 = vunpack.c.h.b16 %v715
        %v901 = vunpack.c.l.b16 %v716
        %v902 = vunpack.c.h.b16 %v716
        %v903 = vunpack.c.l.b16 %v717
        %v904 = vunpack.c.h.b16 %v717
        %v905 = vunpack.c.l.b16 %v718
        %v906 = vunpack.c.h.b16 %v718
        %v907 = vunpack.c.l.b16 %v719
        %v908 = vunpack.c.h.b16 %v719
        %v909 = vunpack.c.l.b16 %v720
        %v910 = vunpack.c.h.b16 %v720
        %v911 = vunpack.c.l.b16 %v721
        %v912 = vunpack.c.h.b16 %v721
        %v913 = vunpack.c.l.b16 %v722
        %v914 = vunpack.c.h.b16 %v722
        %v915 = vpack.c.b16 %v791, %v787
        %v916 = vpack.c.b16 %v792, %v788
        %v917 = vpack.c.b16 %v793, %v789
        %v918 = vpack.c.b16 %v794, %v790
        %v919 = vpack.c.b16 %v799, %v795
        %v920 = vpack.c.b16 %v800, %v796
        %v921 = vpack.c.b16 %v801, %v797
        %v922 = vpack.c.b16 %v802, %v798
        %v923 = vpack.c.b16 %v807, %v803
        %v924 = vpack.c.b16 %v808, %v804
        %v925 = vpack.c.b16 %v809, %v805
        %v926 = vpack.c.b16 %v810, %v806
        %v927 = vpack.c.b16 %v815, %v811
        %v928 = vpack.c.b16 %v816, %v812
        %v929 = vpack.c.b16 %v817, %v813
        %v930 = vpack.c.b16 %v818, %v814
        %v931 = vpack.c.b16 %v823, %v819
        %v932 = vpack.c.b16 %v824, %v820
        %v933 = vpack.c.b16 %v825, %v821
        %v934 = vpack.c.b16 %v826, %v822
        %v935 = vpack.c.b16 %v831, %v827
        %v936 = vpack.c.b16 %v832, %v828
        %v937 = vpack.c.b16 %v833, %v829
        %v938 = vpack.c.b16 %v834, %v830
        %v939 = vpack.c.b16 %v839, %v835
        %v940 = vpack.c.b16 %v840, %v836
        %v941 = vpack.c.b16 %v841, %v837
        %v942 = vpack.c.b16 %v842, %v838
        %v943 = vpack.c.b16 %v847, %v843
        %v944 = vpack.c.b16 %v848, %v844
        %v945 = vpack.c.b16 %v849, %v845
        %v946 = vpack.c.b16 %v850, %v846
        %v947 = vpack.c.b16 %v855, %v851
        %v948 = vpack.c.b16 %v856, %v852
        %v949 = vpack.c.b16 %v857, %v853
        %v950 = vpack.c.b16 %v858, %v854
        %v951 = vpack.c.b16 %v863, %v859
        %v952 = vpack.c.b16 %v864, %v860
        %v953 = vpack.c.b16 %v865, %v861
        %v954 = vpack.c.b16 %v866, %v862
        %v955 = vpack.c.b16 %v871, %v867
        %v956 = vpack.c.b16 %v872, %v868
        %v957 = vpack.c.b16 %v873, %v869
        %v958 = vpack.c.b16 %v874, %v870
        %v959 = vpack.c.b16 %v879, %v875
        %v960 = vpack.c.b16 %v880, %v876
        %v961 = vpack.c.b16 %v881, %v877
        %v962 = vpack.c.b16 %v882, %v878
        %v963 = vpack.c.b16 %v887, %v883
        %v964 = vpack.c.b16 %v888, %v884
        %v965 = vpack.c.b16 %v889, %v885
        %v966 = vpack.c.b16 %v890, %v886
        %v967 = vpack.c.b16 %v895, %v891
        %v968 = vpack.c.b16 %v896, %v892
        %v969 = vpack.c.b16 %v897, %v893
        %v970 = vpack.c.b16 %v898, %v894
        %v971 = vpack.c.b16 %v903, %v899
        %v972 = vpack.c.b16 %v904, %v900
        %v973 = vpack.c.b16 %v905, %v901
        %v974 = vpack.c.b16 %v906, %v902
        %v975 = vpack.c.b16 %v911, %v907
        %v976 = vpack.c.b16 %v912, %v908
        %v977 = vpack.c.b16 %v913, %v909
        %v978 = vpack.c.b16 %v914, %v910
        %1043 = vmatprep.subr.bf16.mxu0 %v916
        %1044 = vmatpush1.bf16.msra.mxu0 %v915
        %1045 = vmatprep.subr.bf16.mxu0 %v920
        %1046 = vmatpush1.bf16.msra.mxu0 %v919
        %1047 = vmatprep.subr.bf16.mxu0 %v924
        %1048 = vmatpush1.bf16.msra.mxu0 %v923
        %1049 = vmatprep.subr.bf16.mxu0 %v928
        %1050 = vmatpush1.bf16.msra.mxu0 %v927
        %1051 = vmatprep.subr.bf16.mxu0 %v932
        %1052 = vmatpush1.bf16.msra.mxu0 %v931
        %1053 = vmatprep.subr.bf16.mxu0 %v936
        %1054 = vmatpush1.bf16.msra.mxu0 %v935
        %1055 = vmatprep.subr.bf16.mxu0 %v940
        %1056 = vmatpush1.bf16.msra.mxu0 %v939
        %1057 = vmatprep.subr.bf16.mxu0 %v944
        %1058 = vmatpush1.bf16.msra.mxu0 %v943
        %1059 = vmatprep.subr.bf16.mxu0 %v948
        %1060 = vmatpush1.bf16.msra.mxu0 %v947
        %1061 = vmatprep.subr.bf16.mxu0 %v952
        %1062 = vmatpush1.bf16.msra.mxu0 %v951
        %1063 = vmatprep.subr.bf16.mxu0 %v956
        %1064 = vmatpush1.bf16.msra.mxu0 %v955
        %1065 = vmatprep.subr.bf16.mxu0 %v960
        %1066 = vmatpush1.bf16.msra.mxu0 %v959
        %1067 = vmatprep.subr.bf16.mxu0 %v964
        %1068 = vmatpush1.bf16.msra.mxu0 %v963
        %1069 = vmatprep.subr.bf16.mxu0 %v968
        %1070 = vmatpush1.bf16.msra.mxu0 %v967
        %1071 = vmatprep.subr.bf16.mxu0 %v972
        %1072 = vmatpush1.bf16.msra.mxu0 %v971
        %1073 = vmatprep.subr.bf16.mxu0 %v976
        %1074 = vmatpush1.bf16.msra.mxu0 %v975
        %1075 = vmatprep.mubr.bf16.mxu0 %v658
        %1076 = vmatmul.mubr.bf16.gmra.mrb[0].mxu0 %v657
        %v1077 = vpop.f32.mrb[0].mxu0
        %v1078 = vadd.f32 0.0, %v1077
        %v1079 = vpop.f32.mrb[0].mxu0
        %v1080 = vadd.f32 0.0, %v1079
        %v1081 = vpop.f32.mrb[0].mxu0
        %v1082 = vadd.f32 0.0, %v1081
        %v1083 = vpop.f32.mrb[0].mxu0
        %v1084 = vadd.f32 0.0, %v1083
        %1085 = vdwg.mxu0
        %1086 = vmatprep.subr.bf16.mxu0 %v918
        %1087 = vmatpush1.bf16.msra.mxu0 %v917
        %1088 = vmatprep.subr.bf16.mxu0 %v922
        %1089 = vmatpush1.bf16.msra.mxu0 %v921
        %1090 = vmatprep.subr.bf16.mxu0 %v926
        %1091 = vmatpush1.bf16.msra.mxu0 %v925
        %1092 = vmatprep.subr.bf16.mxu0 %v930
        %1093 = vmatpush1.bf16.msra.mxu0 %v929
        %1094 = vmatprep.subr.bf16.mxu0 %v934
        %1095 = vmatpush1.bf16.msra.mxu0 %v933
        %1096 = vmatprep.subr.bf16.mxu0 %v938
        %1097 = vmatpush1.bf16.msra.mxu0 %v937
        %1098 = vmatprep.subr.bf16.mxu0 %v942
        %1099 = vmatpush1.bf16.msra.mxu0 %v941
        %1100 = vmatprep.subr.bf16.mxu0 %v946
        %1101 = vmatpush1.bf16.msra.mxu0 %v945
        %1102 = vmatprep.subr.bf16.mxu0 %v950
        %1103 = vmatpush1.bf16.msra.mxu0 %v949
        %1104 = vmatprep.subr.bf16.mxu0 %v954
        %1105 = vmatpush1.bf16.msra.mxu0 %v953
        %1106 = vmatprep.subr.bf16.mxu0 %v958
        %1107 = vmatpush1.bf16.msra.mxu0 %v957
        %1108 = vmatprep.subr.bf16.mxu0 %v962
        %1109 = vmatpush1.bf16.msra.mxu0 %v961
        %1110 = vmatprep.subr.bf16.mxu0 %v966
        %1111 = vmatpush1.bf16.msra.mxu0 %v965
        %1112 = vmatprep.subr.bf16.mxu0 %v970
        %1113 = vmatpush1.bf16.msra.mxu0 %v969
        %1114 = vmatprep.subr.bf16.mxu0 %v974
        %1115 = vmatpush1.bf16.msra.mxu0 %v973
        %1116 = vmatprep.subr.bf16.mxu0 %v978
        %1117 = vmatpush1.bf16.msra.mxu0 %v977
        %1118 = vmatprep.mubr.bf16.mxu0 %v658
        %1119 = vmatmul.mubr.bf16.gmra.mrb[0].mxu0 %v657
        %v1120 = vpop.f32.mrb[0].mxu0
        %v1121 = vadd.f32 0.0, %v1120
        %v1122 = vpop.f32.mrb[0].mxu0
        %v1123 = vadd.f32 0.0, %v1122
        %v1124 = vpop.f32.mrb[0].mxu0
        %v1125 = vadd.f32 0.0, %v1124
        %v1126 = vpop.f32.mrb[0].mxu0
        %v1127 = vadd.f32 0.0, %v1126
        %1128 = vdwg.mxu0
        %v1129 = vmul.f32 %v1078, 0.088388346
        %v1130 = vmul.f32 %v1080, 0.088388346
        %v1131 = vmul.f32 %v1082, 0.088388346
        %v1132 = vmul.f32 %v1084, 0.088388346
        %1133 = vst [vmem:[%s587] sm:$0xff] %v1121
        %1134 = vst [vmem:[%s587 + $0x8] sm:$0xff] %v1123
        %1135 = vst [vmem:[%s587 + $0x10] sm:$0xff] %v1125
        %1136 = vst [vmem:[%s587 + $0x18] sm:$0xff] %v1127
        %v1137 = vlaneseq
        %v1138 = vshrl.u32 %v1137, 7
        %v1139 = vlaneseq
        %v1140 = vand.u32 %v1139, 127
        %vm1141 = vcmp.ge.s32.totalorder %v1138, %v1140
        %v1142 = vsel %vm1141, 0.0, -1e+30
        %v1143 = vmul.f32 %v1121, %v606
        %1144 = vrot.lane.b32.xlu0 %v1121, 64
        %v1145 = vpop.permute.xlu0 %1144
        %v1146 = vmul.f32 %v1145, %v607
        %v1147 = vadd.f32 %v1143, %v1146
        %v1148 = vpack.c.bf16 %v1147, %v1147
        %v1149 = vpack.c.bf16 %v1123, %v1123
        %v1150 = vmul.f32 %v1129, %v606
        %1151 = vrot.lane.b32.xlu0 %v1129, 64
        %v1152 = vpop.permute.xlu0 %1151
        %v1153 = vmul.f32 %v1152, %v607
        %v1154 = vadd.f32 %v1150, %v1153
        %v1155 = vmul.f32 %v1130, %v606
        %1156 = vrot.lane.b32.xlu0 %v1130, 64
        %v1157 = vpop.permute.xlu0 %1156
        %v1158 = vmul.f32 %v1157, %v607
        %v1159 = vadd.f32 %v1155, %v1158
        %v1160 = vpack.c.bf16 %v1159, %v1154
        %1161 = vmatprep.subr.bf16.mxu0 0
        %1162 = vmatpush1.bf16.xpose.msra.mxu0 %v1148
        %1163 = vmatprep.subr.bf16.mxu0 0
        %1164 = vmatpush1.bf16.xpose.msra.mxu0 0
        %1165 = vmatprep.subr.bf16.mxu0 0
        %1166 = vmatpush1.bf16.xpose.msra.mxu0 0
        %1167 = vmatprep.subr.bf16.mxu0 0
        %1168 = vmatpush1.bf16.xpose.msra.mxu0 0
        %1169 = vmatprep.subr.bf16.mxu0 0
        %1170 = vmatpush1.bf16.xpose.msra.mxu0 0
        %1171 = vmatprep.subr.bf16.mxu0 0
        %1172 = vmatpush1.bf16.xpose.msra.mxu0 0
        %1173 = vmatprep.subr.bf16.mxu0 0
        %1174 = vmatpush1.bf16.xpose.msra.mxu0 0
        %1175 = vmatprep.subr.bf16.mxu0 0
        %1176 = vmatpush1.bf16.xpose.msra.mxu0 0
        %1177 = vmatprep.subr.bf16.mxu0 0
        %1178 = vmatpush1.bf16.xpose.msra.mxu0 0
        %1179 = vmatprep.subr.bf16.mxu0 0
        %1180 = vmatpush1.bf16.xpose.msra.mxu0 0
        %1181 = vmatprep.subr.bf16.mxu0 0
        %1182 = vmatpush1.bf16.xpose.msra.mxu0 0
        %1183 = vmatprep.subr.bf16.mxu0 0
        %1184 = vmatpush1.bf16.xpose.msra.mxu0 0
        %1185 = vmatprep.subr.bf16.mxu0 0
        %1186 = vmatpush1.bf16.xpose.msra.mxu0 0
        %1187 = vmatprep.subr.bf16.mxu0 0
        %1188 = vmatpush1.bf16.xpose.msra.mxu0 0
        %1189 = vmatprep.subr.bf16.mxu0 0
        %1190 = vmatpush1.bf16.xpose.msra.mxu0 0
        %1191 = vmatprep.subr.bf16.mxu0 0
        %1192 = vmatpush1.bf16.xpose.msra.mxu0 0
        %1193 = vmatprep.mubr.bf16.mxu0 0
        %1194 = vmatmul.mubr.bf16.gmra.mrb[0].mxu0 %v1160
        %v1195 = vpop.f32.mrb[0].mxu0
        %v1196 = vadd.f32 %v1142, %v1195
        %v1197 = vpop.f32.mrb[0].mxu0
        %v1198 = vpop.f32.mrb[0].mxu0
        %v1199 = vadd.f32 %v1142, %v1198
        %v1200 = vpop.f32.mrb[0].mxu0
        %1201 = vdwg.mxu0
        %vm1202 = vcmask 64512
        %v1203 = vsel %vm1202, %v1196, -inf
        %1204 = vmax.xlane.f32.xlu0 %v1203
        %v1205 = vpop.xlane.xlu0 %1204
        %v1206 = vsel %vm1202, %v1199, -inf
        %1207 = vmax.xlane.f32.xlu0 %v1206
        %v1208 = vpop.xlane.xlu0 %1207
        %v1209 = vsub.f32 %v1196, %v1205
        %v1210 = vsub.f32 %v1199, %v1208
        %v1211 = vmul.f32 %v1209, 1.442695
        %v1212 = vpow.pop %v1211
        %v1213 = vmul.f32 %v1210, 1.442695
        %v1214 = vpow.pop %v1213
        %v1215 = vsel %vm1202, %v1212, 0.0
        %1216 = vadd.xlane.f32.xlu0 %v1215
        %v1217 = vpop.xlane.xlu0 %1216
        %v1218 = vsel %vm1202, %v1214, 0.0
        %1219 = vadd.xlane.f32.xlu0 %v1218
        %v1220 = vpop.xlane.xlu0 %1219
        %v1221 = vrcp.pop %v1217
        %v1222 = vrcp.pop %v1220
        %v1223 = vmul.f32 %v1212, %v1221
        %v1224 = vmul.f32 %v1214, %v1222
        %v1225 = vpack.c.bf16 %v1224, %v1223
        %v1227 = vsel %vm1202, %v1225, 0
        %vm1229 = vcmask 1043456
        %v1231 = vsel %vm1229, %v1149, 0
        %1233 = vmatprep.subr.bf16.mxu0 0
        %1234 = vmatpush1.bf16.msra.mxu0 %v1231
        %1235 = vmatprep.subr.bf16.mxu0 0
        %1236 = vmatpush1.bf16.msra.mxu0 0
        %1237 = vmatprep.subr.bf16.mxu0 0
        %1238 = vmatpush1.bf16.msra.mxu0 0
        %1239 = vmatprep.subr.bf16.mxu0 0
        %1240 = vmatpush1.bf16.msra.mxu0 0
        %1241 = vmatprep.subr.bf16.mxu0 0
        %1242 = vmatpush1.bf16.msra.mxu0 0
        %1243 = vmatprep.subr.bf16.mxu0 0
        %1244 = vmatpush1.bf16.msra.mxu0 0
        %1245 = vmatprep.subr.bf16.mxu0 0
        %1246 = vmatpush1.bf16.msra.mxu0 0
        %1247 = vmatprep.subr.bf16.mxu0 0
        %1248 = vmatpush1.bf16.msra.mxu0 0
        %1249 = vmatprep.subr.bf16.mxu0 0
        %1250 = vmatpush1.bf16.msra.mxu0 0
        %1251 = vmatprep.subr.bf16.mxu0 0
        %1252 = vmatpush1.bf16.msra.mxu0 0
        %1253 = vmatprep.subr.bf16.mxu0 0
        %1254 = vmatpush1.bf16.msra.mxu0 0
        %1255 = vmatprep.subr.bf16.mxu0 0
        %1256 = vmatpush1.bf16.msra.mxu0 0
        %1257 = vmatprep.subr.bf16.mxu0 0
        %1258 = vmatpush1.bf16.msra.mxu0 0
        %1259 = vmatprep.subr.bf16.mxu0 0
        %1260 = vmatpush1.bf16.msra.mxu0 0
        %1261 = vmatprep.subr.bf16.mxu0 0
        %1262 = vmatpush1.bf16.msra.mxu0 0
        %1263 = vmatprep.subr.bf16.mxu0 0
        %1264 = vmatpush1.bf16.msra.mxu0 0
        %1265 = vmatprep.mubr.bf16.mxu0 0
        %1266 = vmatmul.mubr.bf16.gmra.mrb[0].mxu0 %v1227
        %v1267 = vpop.f32.mrb[0].mxu0
        %v1268 = vadd.f32 0.0, %v1267
        %v1269 = vpop.f32.mrb[0].mxu0
        %v1270 = vpop.f32.mrb[0].mxu0
        %v1271 = vadd.f32 0.0, %v1270
        %v1272 = vpop.f32.mrb[0].mxu0
        %1273 = vdwg.mxu0
        %v1274 = vmul.f32 %v1125, %v606
        %1275 = vrot.lane.b32.xlu0 %v1125, 64
        %v1276 = vpop.permute.xlu0 %1275
        %v1277 = vmul.f32 %v1276, %v607
        %v1278 = vadd.f32 %v1274, %v1277
        %v1279 = vpack.c.bf16 %v1278, %v1278
        %v1280 = vpack.c.bf16 %v1127, %v1127
        %v1281 = vmul.f32 %v1131, %v606
        %1282 = vrot.lane.b32.xlu0 %v1131, 64
        %v1283 = vpop.permute.xlu0 %1282
        %v1284 = vmul.f32 %v1283, %v607
        %v1285 = vadd.f32 %v1281, %v1284
        %v1286 = vmul.f32 %v1132, %v606
        %1287 = vrot.lane.b32.xlu0 %v1132, 64
        %v1288 = vpop.permute.xlu0 %1287
        %v1289 = vmul.f32 %v1288, %v607
        %v1290 = vadd.f32 %v1286, %v1289
        %v1291 = vpack.c.bf16 %v1290, %v1285
        %1292 = vmatprep.subr.bf16.mxu0 0
        %1293 = vmatpush1.bf16.xpose.msra.mxu0 %v1279
        %1294 = vmatprep.subr.bf16.mxu0 0
        %1295 = vmatpush1.bf16.xpose.msra.mxu0 0
        %1296 = vmatprep.subr.bf16.mxu0 0
        %1297 = vmatpush1.bf16.xpose.msra.mxu0 0
        %1298 = vmatprep.subr.bf16.mxu0 0
        %1299 = vmatpush1.bf16.xpose.msra.mxu0 0
        %1300 = vmatprep.subr.bf16.mxu0 0
        %1301 = vmatpush1.bf16.xpose.msra.mxu0 0
        %1302 = vmatprep.subr.bf16.mxu0 0
        %1303 = vmatpush1.bf16.xpose.msra.mxu0 0
        %1304 = vmatprep.subr.bf16.mxu0 0
        %1305 = vmatpush1.bf16.xpose.msra.mxu0 0
        %1306 = vmatprep.subr.bf16.mxu0 0
        %1307 = vmatpush1.bf16.xpose.msra.mxu0 0
        %1308 = vmatprep.subr.bf16.mxu0 0
        %1309 = vmatpush1.bf16.xpose.msra.mxu0 0
        %1310 = vmatprep.subr.bf16.mxu0 0
        %1311 = vmatpush1.bf16.xpose.msra.mxu0 0
        %1312 = vmatprep.subr.bf16.mxu0 0
        %1313 = vmatpush1.bf16.xpose.msra.mxu0 0
        %1314 = vmatprep.subr.bf16.mxu0 0
        %1315 = vmatpush1.bf16.xpose.msra.mxu0 0
        %1316 = vmatprep.subr.bf16.mxu0 0
        %1317 = vmatpush1.bf16.xpose.msra.mxu0 0
        %1318 = vmatprep.subr.bf16.mxu0 0
        %1319 = vmatpush1.bf16.xpose.msra.mxu0 0
        %1320 = vmatprep.subr.bf16.mxu0 0
        %1321 = vmatpush1.bf16.xpose.msra.mxu0 0
        %1322 = vmatprep.subr.bf16.mxu0 0
        %1323 = vmatpush1.bf16.xpose.msra.mxu0 0
        %1324 = vmatprep.mubr.bf16.mxu0 0
        %1325 = vmatmul.mubr.bf16.gmra.mrb[0].mxu0 %v1291
        %v1326 = vpop.f32.mrb[0].mxu0
        %v1327 = vadd.f32 %v1142, %v1326
        %v1328 = vpop.f32.mrb[0].mxu0
        %v1329 = vpop.f32.mrb[0].mxu0
        %v1330 = vadd.f32 %v1142, %v1329
        %v1331 = vpop.f32.mrb[0].mxu0
        %1332 = vdwg.mxu0
        %v1333 = vsel %vm1202, %v1327, -inf
        %1334 = vmax.xlane.f32.xlu0 %v1333
        %v1335 = vpop.xlane.xlu0 %1334
        %v1336 = vsel %vm1202, %v1330, -inf
        %1337 = vmax.xlane.f32.xlu0 %v1336
        %v1338 = vpop.xlane.xlu0 %1337
        %v1339 = vsub.f32 %v1327, %v1335
        %v1340 = vsub.f32 %v1330, %v1338
        %v1341 = vmul.f32 %v1339, 1.442695
        %v1342 = vpow.pop %v1341
        %v1343 = vmul.f32 %v1340, 1.442695
        %v1344 = vpow.pop %v1343
        %v1345 = vsel %vm1202, %v1342, 0.0
        %1346 = vadd.xlane.f32.xlu0 %v1345
        %v1347 = vpop.xlane.xlu0 %1346
        %v1348 = vsel %vm1202, %v1344, 0.0
        %1349 = vadd.xlane.f32.xlu0 %v1348
        %v1350 = vpop.xlane.xlu0 %1349
        %v1351 = vrcp.pop %v1347
        %v1352 = vrcp.pop %v1350
        %v1353 = vmul.f32 %v1342, %v1351
        %v1354 = vmul.f32 %v1344, %v1352
        %v1355 = vpack.c.bf16 %v1354, %v1353
        %v1357 = vsel %vm1202, %v1355, 0
        %v1360 = vsel %vm1229, %v1280, 0
        %1362 = vmatprep.subr.bf16.mxu0 0
        %1363 = vmatpush1.bf16.msra.mxu0 %v1360
        %1364 = vmatprep.subr.bf16.mxu0 0
        %1365 = vmatpush1.bf16.msra.mxu0 0
        %1366 = vmatprep.subr.bf16.mxu0 0
        %1367 = vmatpush1.bf16.msra.mxu0 0
        %1368 = vmatprep.subr.bf16.mxu0 0
        %1369 = vmatpush1.bf16.msra.mxu0 0
        %1370 = vmatprep.subr.bf16.mxu0 0
        %1371 = vmatpush1.bf16.msra.mxu0 0
        %1372 = vmatprep.subr.bf16.mxu0 0
        %1373 = vmatpush1.bf16.msra.mxu0 0
        %1374 = vmatprep.subr.bf16.mxu0 0
        %1375 = vmatpush1.bf16.msra.mxu0 0
        %1376 = vmatprep.subr.bf16.mxu0 0
        %1377 = vmatpush1.bf16.msra.mxu0 0
        %1378 = vmatprep.subr.bf16.mxu0 0
        %1379 = vmatpush1.bf16.msra.mxu0 0
        %1380 = vmatprep.subr.bf16.mxu0 0
        %1381 = vmatpush1.bf16.msra.mxu0 0
        %1382 = vmatprep.subr.bf16.mxu0 0
        %1383 = vmatpush1.bf16.msra.mxu0 0
        %1384 = vmatprep.subr.bf16.mxu0 0
        %1385 = vmatpush1.bf16.msra.mxu0 0
        %1386 = vmatprep.subr.bf16.mxu0 0
        %1387 = vmatpush1.bf16.msra.mxu0 0
        %1388 = vmatprep.subr.bf16.mxu0 0
        %1389 = vmatpush1.bf16.msra.mxu0 0
        %1390 = vmatprep.subr.bf16.mxu0 0
        %1391 = vmatpush1.bf16.msra.mxu0 0
        %1392 = vmatprep.subr.bf16.mxu0 0
        %1393 = vmatpush1.bf16.msra.mxu0 0
        %1394 = vmatprep.mubr.bf16.mxu0 0
        %1395 = vmatmul.mubr.bf16.gmra.mrb[0].mxu0 %v1357
        %v1396 = vpop.f32.mrb[0].mxu0
        %v1397 = vadd.f32 0.0, %v1396
        %v1398 = vpop.f32.mrb[0].mxu0
        %v1399 = vpop.f32.mrb[0].mxu0
        %v1400 = vadd.f32 0.0, %v1399
        %v1401 = vpop.f32.mrb[0].mxu0
        %1402 = vdwg.mxu0
        %v1403 = vpack.c.bf16 %v1397, %v1268
        %v1404 = vpack.c.bf16 %v1400, %v1271
        %v1405 = vld [vmem:[%s507] sm:$0xff]
        %v1406 = vld [vmem:[%s507 + $0x8] sm:$0xff]
        %v1407 = vld [vmem:[%s507 + $0x10] sm:$0xff]
        %v1408 = vld [vmem:[%s507 + $0x18] sm:$0xff]
        %v1409 = vld [vmem:[%s507 + $0x20] sm:$0xff]
        %v1410 = vld [vmem:[%s507 + $0x28] sm:$0xff]
        %v1411 = vld [vmem:[%s507 + $0x30] sm:$0xff]
        %v1412 = vld [vmem:[%s507 + $0x38] sm:$0xff]
        %v1413 = vld [vmem:[%s507 + $0x40] sm:$0xff]
        %v1414 = vld [vmem:[%s507 + $0x48] sm:$0xff]
        %v1415 = vld [vmem:[%s507 + $0x50] sm:$0xff]
        %v1416 = vld [vmem:[%s507 + $0x58] sm:$0xff]
        %v1417 = vld [vmem:[%s507 + $0x60] sm:$0xff]
        %v1418 = vld [vmem:[%s507 + $0x68] sm:$0xff]
        %v1419 = vld [vmem:[%s507 + $0x70] sm:$0xff]
        %v1420 = vld [vmem:[%s507 + $0x78] sm:$0xff]
        %v1421 = vld [vmem:[%s507 + $0x80] sm:$0xff]
        %v1422 = vld [vmem:[%s507 + $0x88] sm:$0xff]
        %v1423 = vld [vmem:[%s507 + $0x90] sm:$0xff]
        %v1424 = vld [vmem:[%s507 + $0x98] sm:$0xff]
        %v1425 = vld [vmem:[%s507 + $0xa0] sm:$0xff]
        %v1426 = vld [vmem:[%s507 + $0xa8] sm:$0xff]
        %v1427 = vld [vmem:[%s507 + $0xb0] sm:$0xff]
        %v1428 = vld [vmem:[%s507 + $0xb8] sm:$0xff]
        %v1429 = vld [vmem:[%s507 + $0xc0] sm:$0xff]
        %v1430 = vld [vmem:[%s507 + $0xc8] sm:$0xff]
        %v1431 = vld [vmem:[%s507 + $0xd0] sm:$0xff]
        %v1432 = vld [vmem:[%s507 + $0xd8] sm:$0xff]
        %v1433 = vld [vmem:[%s507 + $0xe0] sm:$0xff]
        %v1434 = vld [vmem:[%s507 + $0xe8] sm:$0xff]
        %v1435 = vld [vmem:[%s507 + $0xf0] sm:$0xff]
        %v1436 = vld [vmem:[%s507 + $0xf8] sm:$0xff]
        %v1469 = vunpack.c.l.b16 %v1405
        %v1470 = vunpack.c.h.b16 %v1405
        %v1471 = vunpack.c.l.b16 %v1406
        %v1472 = vunpack.c.h.b16 %v1406
        %v1473 = vunpack.c.l.b16 %v1407
        %v1474 = vunpack.c.h.b16 %v1407
        %v1475 = vunpack.c.l.b16 %v1408
        %v1476 = vunpack.c.h.b16 %v1408
        %v1477 = vunpack.c.l.b16 %v1409
        %v1478 = vunpack.c.h.b16 %v1409
        %v1479 = vunpack.c.l.b16 %v1410
        %v1480 = vunpack.c.h.b16 %v1410
        %v1481 = vunpack.c.l.b16 %v1411
        %v1482 = vunpack.c.h.b16 %v1411
        %v1483 = vunpack.c.l.b16 %v1412
        %v1484 = vunpack.c.h.b16 %v1412
        %v1485 = vunpack.c.l.b16 %v1413
        %v1486 = vunpack.c.h.b16 %v1413
        %v1487 = vunpack.c.l.b16 %v1414
        %v1488 = vunpack.c.h.b16 %v1414
        %v1489 = vunpack.c.l.b16 %v1415
        %v1490 = vunpack.c.h.b16 %v1415
        %v1491 = vunpack.c.l.b16 %v1416
        %v1492 = vunpack.c.h.b16 %v1416
        %v1493 = vunpack.c.l.b16 %v1417
        %v1494 = vunpack.c.h.b16 %v1417
        %v1495 = vunpack.c.l.b16 %v1418
        %v1496 = vunpack.c.h.b16 %v1418
        %v1497 = vunpack.c.l.b16 %v1419
        %v1498 = vunpack.c.h.b16 %v1419
        %v1499 = vunpack.c.l.b16 %v1420
        %v1500 = vunpack.c.h.b16 %v1420
        %v1501 = vunpack.c.l.b16 %v1421
        %v1502 = vunpack.c.h.b16 %v1421
        %v1503 = vunpack.c.l.b16 %v1422
        %v1504 = vunpack.c.h.b16 %v1422
        %v1505 = vunpack.c.l.b16 %v1423
        %v1506 = vunpack.c.h.b16 %v1423
        %v1507 = vunpack.c.l.b16 %v1424
        %v1508 = vunpack.c.h.b16 %v1424
        %v1509 = vunpack.c.l.b16 %v1425
        %v1510 = vunpack.c.h.b16 %v1425
        %v1511 = vunpack.c.l.b16 %v1426
        %v1512 = vunpack.c.h.b16 %v1426
        %v1513 = vunpack.c.l.b16 %v1427
        %v1514 = vunpack.c.h.b16 %v1427
        %v1515 = vunpack.c.l.b16 %v1428
        %v1516 = vunpack.c.h.b16 %v1428
        %v1517 = vunpack.c.l.b16 %v1429
        %v1518 = vunpack.c.h.b16 %v1429
        %v1519 = vunpack.c.l.b16 %v1430
        %v1520 = vunpack.c.h.b16 %v1430
        %v1521 = vunpack.c.l.b16 %v1431
        %v1522 = vunpack.c.h.b16 %v1431
        %v1523 = vunpack.c.l.b16 %v1432
        %v1524 = vunpack.c.h.b16 %v1432
        %v1525 = vunpack.c.l.b16 %v1433
        %v1526 = vunpack.c.h.b16 %v1433
        %v1527 = vunpack.c.l.b16 %v1434
        %v1528 = vunpack.c.h.b16 %v1434
        %v1529 = vunpack.c.l.b16 %v1435
        %v1530 = vunpack.c.h.b16 %v1435
        %v1531 = vunpack.c.l.b16 %v1436
        %v1532 = vunpack.c.h.b16 %v1436
        %v1533 = vpack.c.b16 %v1471, %v1469
        %v1534 = vpack.c.b16 %v1472, %v1470
        %v1535 = vpack.c.b16 %v1475, %v1473
        %v1536 = vpack.c.b16 %v1476, %v1474
        %v1537 = vpack.c.b16 %v1479, %v1477
        %v1538 = vpack.c.b16 %v1480, %v1478
        %v1539 = vpack.c.b16 %v1483, %v1481
        %v1540 = vpack.c.b16 %v1484, %v1482
        %v1541 = vpack.c.b16 %v1487, %v1485
        %v1542 = vpack.c.b16 %v1488, %v1486
        %v1543 = vpack.c.b16 %v1491, %v1489
        %v1544 = vpack.c.b16 %v1492, %v1490
        %v1545 = vpack.c.b16 %v1495, %v1493
        %v1546 = vpack.c.b16 %v1496, %v1494
        %v1547 = vpack.c.b16 %v1499, %v1497
        %v1548 = vpack.c.b16 %v1500, %v1498
        %v1549 = vpack.c.b16 %v1503, %v1501
        %v1550 = vpack.c.b16 %v1504, %v1502
        %v1551 = vpack.c.b16 %v1507, %v1505
        %v1552 = vpack.c.b16 %v1508, %v1506
        %v1553 = vpack.c.b16 %v1511, %v1509
        %v1554 = vpack.c.b16 %v1512, %v1510
        %v1555 = vpack.c.b16 %v1515, %v1513
        %v1556 = vpack.c.b16 %v1516, %v1514
        %v1557 = vpack.c.b16 %v1519, %v1517
        %v1558 = vpack.c.b16 %v1520, %v1518
        %v1559 = vpack.c.b16 %v1523, %v1521
        %v1560 = vpack.c.b16 %v1524, %v1522
        %v1561 = vpack.c.b16 %v1527, %v1525
        %v1562 = vpack.c.b16 %v1528, %v1526
        %v1563 = vpack.c.b16 %v1531, %v1529
        %v1564 = vpack.c.b16 %v1532, %v1530
        %1597 = vmatprep.subr.bf16.mxu0 %v1534
        %1598 = vmatpush1.bf16.msra.mxu0 %v1533
        %1599 = vmatprep.subr.bf16.mxu0 %v1536
        %1600 = vmatpush1.bf16.msra.mxu0 %v1535
        %1601 = vmatprep.subr.bf16.mxu0 %v1538
        %1602 = vmatpush1.bf16.msra.mxu0 %v1537
        %1603 = vmatprep.subr.bf16.mxu0 %v1540
        %1604 = vmatpush1.bf16.msra.mxu0 %v1539
        %1605 = vmatprep.subr.bf16.mxu0 %v1542
        %1606 = vmatpush1.bf16.msra.mxu0 %v1541
        %1607 = vmatprep.subr.bf16.mxu0 %v1544
        %1608 = vmatpush1.bf16.msra.mxu0 %v1543
        %1609 = vmatprep.subr.bf16.mxu0 %v1546
        %1610 = vmatpush1.bf16.msra.mxu0 %v1545
        %1611 = vmatprep.subr.bf16.mxu0 %v1548
        %1612 = vmatpush1.bf16.msra.mxu0 %v1547
        %1613 = vmatprep.subr.bf16.mxu0 %v1550
        %1614 = vmatpush1.bf16.msra.mxu0 %v1549
        %1615 = vmatprep.subr.bf16.mxu0 %v1552
        %1616 = vmatpush1.bf16.msra.mxu0 %v1551
        %1617 = vmatprep.subr.bf16.mxu0 %v1554
        %1618 = vmatpush1.bf16.msra.mxu0 %v1553
        %1619 = vmatprep.subr.bf16.mxu0 %v1556
        %1620 = vmatpush1.bf16.msra.mxu0 %v1555
        %1621 = vmatprep.subr.bf16.mxu0 %v1558
        %1622 = vmatpush1.bf16.msra.mxu0 %v1557
        %1623 = vmatprep.subr.bf16.mxu0 %v1560
        %1624 = vmatpush1.bf16.msra.mxu0 %v1559
        %1625 = vmatprep.subr.bf16.mxu0 %v1562
        %1626 = vmatpush1.bf16.msra.mxu0 %v1561
        %1627 = vmatprep.subr.bf16.mxu0 %v1564
        %1628 = vmatpush1.bf16.msra.mxu0 %v1563
        %1629 = vmatprep.mubr.bf16.mxu0 %v1404
        %1630 = vmatmul.mubr.bf16.gmra.mrb[0].mxu0 %v1403
        %v1631 = vpop.f32.mrb[0].mxu0
        %v1632 = vadd.f32 0.0, %v1631
        %v1633 = vpop.f32.mrb[0].mxu0
        %v1634 = vadd.f32 0.0, %v1633
        %v1635 = vpop.f32.mrb[0].mxu0
        %v1636 = vadd.f32 0.0, %v1635
        %v1637 = vpop.f32.mrb[0].mxu0
        %v1638 = vadd.f32 0.0, %v1637
        %1639 = vdwg.mxu0
        %v1640 = vadd.f32 %v609, %v1632
        %v1641 = vadd.f32 %v610, %v1634
        %v1642 = vadd.f32 %v611, %v1636
        %v1643 = vadd.f32 %v612, %v1638
        %v1644 = vmul.f32 %v1640, %v1640
        %v1645 = vmul.f32 %v1641, %v1641
        %v1646 = vmul.f32 %v1642, %v1642
        %v1647 = vmul.f32 %v1643, %v1643
        %v1648 = vadd.f32 %v1644, %v1645
        %1649 = vadd.xlane.f32.xlu0 %v1648
        %v1650 = vpop.xlane.xlu0 %1649
        %v1651 = vadd.f32 %v1646, %v1647
        %1652 = vadd.xlane.f32.xlu0 %v1651
        %v1653 = vpop.xlane.xlu0 %1652
        %v1654 = vmul.f32 %v1650, %v623
        %v1655 = vmul.f32 %v1653, %v623
        %v1656 = vadd.f32 %v1654, 1e-06
        %v1657 = vadd.f32 %v1655, 1e-06
        %v1658 = vrsqrt.pop %v1656
        %v1659 = vrsqrt.pop %v1657
        %v1660 = vmul.f32 %v1640, %v1658
        %v1661 = vmul.f32 %v1641, %v1658
        %v1662 = vmul.f32 %v1642, %v1659
        %v1663 = vmul.f32 %v1643, %v1659
        %v1664 = vlaneseq
        %v1665 = vshrl.u32 %v1664, 7
        %v1666 = vsub.s32 1, %v1665
        %v1667 = vrot.slane %v608, %v1666
        %v1668 = vlaneseq
        %v1669 = vshrl.u32 %v1668, 7
        %v1670 = vsub.s32 3, %v1669
        %v1671 = vrot.slane %v608, %v1670
        %v1674 = vlaneseq
        %v1675 = vshrl.u32 %v1674, 7
        %v1676 = vsub.s32 1, %v1675
        %v1677 = vrot.slane %v1667, %v1676
        %v1678 = vlaneseq
        %v1679 = vshrl.u32 %v1678, 7
        %v1680 = vsub.s32 1, %v1679
        %v1681 = vrot.slane %v1671, %v1680
        %v1682 = vmul.f32 %v1660, %v1677
        %v1683 = vmul.f32 %v1661, %v1681
        %v1684 = vmul.f32 %v1662, %v1677
        %v1685 = vmul.f32 %v1663, %v1681
        %v1686 = vpack.c.bf16 %v1684, %v1682
        %v1687 = vpack.c.bf16 %v1685, %v1683
        %v1688 = vld [vmem:[%s516] sm:$0xff]
        %v1689 = vld [vmem:[%s516 + $0x8] sm:$0xff]
        %v1690 = vld [vmem:[%s516 + $0x10] sm:$0xff]
        %v1691 = vld [vmem:[%s516 + $0x18] sm:$0xff]
        %v1692 = vld [vmem:[%s516 + $0x20] sm:$0xff]
        %v1693 = vld [vmem:[%s516 + $0x28] sm:$0xff]
        %v1694 = vld [vmem:[%s516 + $0x30] sm:$0xff]
        %v1695 = vld [vmem:[%s516 + $0x38] sm:$0xff]
        %v1696 = vld [vmem:[%s516 + $0x40] sm:$0xff]
        %v1697 = vld [vmem:[%s516 + $0x48] sm:$0xff]
        %v1698 = vld [vmem:[%s516 + $0x50] sm:$0xff]
        %v1699 = vld [vmem:[%s516 + $0x58] sm:$0xff]
        %v1700 = vld [vmem:[%s516 + $0x60] sm:$0xff]
        %v1701 = vld [vmem:[%s516 + $0x68] sm:$0xff]
        %v1702 = vld [vmem:[%s516 + $0x70] sm:$0xff]
        %v1703 = vld [vmem:[%s516 + $0x78] sm:$0xff]
        %v1704 = vld [vmem:[%s516 + $0x80] sm:$0xff]
        %v1705 = vld [vmem:[%s516 + $0x88] sm:$0xff]
        %v1706 = vld [vmem:[%s516 + $0x90] sm:$0xff]
        %v1707 = vld [vmem:[%s516 + $0x98] sm:$0xff]
        %v1708 = vld [vmem:[%s516 + $0xa0] sm:$0xff]
        %v1709 = vld [vmem:[%s516 + $0xa8] sm:$0xff]
        %v1710 = vld [vmem:[%s516 + $0xb0] sm:$0xff]
        %v1711 = vld [vmem:[%s516 + $0xb8] sm:$0xff]
        %v1712 = vld [vmem:[%s516 + $0xc0] sm:$0xff]
        %v1713 = vld [vmem:[%s516 + $0xc8] sm:$0xff]
        %v1714 = vld [vmem:[%s516 + $0xd0] sm:$0xff]
        %v1715 = vld [vmem:[%s516 + $0xd8] sm:$0xff]
        %v1716 = vld [vmem:[%s516 + $0xe0] sm:$0xff]
        %v1717 = vld [vmem:[%s516 + $0xe8] sm:$0xff]
        %v1718 = vld [vmem:[%s516 + $0xf0] sm:$0xff]
        %v1719 = vld [vmem:[%s516 + $0xf8] sm:$0xff]
        %v1720 = vld [vmem:[%s516 + $0x100] sm:$0xff]
        %v1721 = vld [vmem:[%s516 + $0x108] sm:$0xff]
        %v1722 = vld [vmem:[%s516 + $0x110] sm:$0xff]
        %v1723 = vld [vmem:[%s516 + $0x118] sm:$0xff]
        %v1724 = vld [vmem:[%s516 + $0x120] sm:$0xff]
        %v1725 = vld [vmem:[%s516 + $0x128] sm:$0xff]
        %v1726 = vld [vmem:[%s516 + $0x130] sm:$0xff]
        %v1727 = vld [vmem:[%s516 + $0x138] sm:$0xff]
        %v1728 = vld [vmem:[%s516 + $0x140] sm:$0xff]
        %v1729 = vld [vmem:[%s516 + $0x148] sm:$0xff]
        %v1730 = vld [vmem:[%s516 + $0x150] sm:$0xff]
        %v1731 = vld [vmem:[%s516 + $0x158] sm:$0xff]
        %v1732 = vld [vmem:[%s516 + $0x160] sm:$0xff]
        %v1733 = vld [vmem:[%s516 + $0x168] sm:$0xff]
        %v1734 = vld [vmem:[%s516 + $0x170] sm:$0xff]
        %v1735 = vld [vmem:[%s516 + $0x178] sm:$0xff]
        %v1736 = vld [vmem:[%s516 + $0x180] sm:$0xff]
        %v1737 = vld [vmem:[%s516 + $0x188] sm:$0xff]
        %v1738 = vld [vmem:[%s516 + $0x190] sm:$0xff]
        %v1739 = vld [vmem:[%s516 + $0x198] sm:$0xff]
        %v1740 = vld [vmem:[%s516 + $0x1a0] sm:$0xff]
        %v1741 = vld [vmem:[%s516 + $0x1a8] sm:$0xff]
        %v1742 = vld [vmem:[%s516 + $0x1b0] sm:$0xff]
        %v1743 = vld [vmem:[%s516 + $0x1b8] sm:$0xff]
        %v1744 = vld [vmem:[%s516 + $0x1c0] sm:$0xff]
        %v1745 = vld [vmem:[%s516 + $0x1c8] sm:$0xff]
        %v1746 = vld [vmem:[%s516 + $0x1d0] sm:$0xff]
        %v1747 = vld [vmem:[%s516 + $0x1d8] sm:$0xff]
        %v1748 = vld [vmem:[%s516 + $0x1e0] sm:$0xff]
        %v1749 = vld [vmem:[%s516 + $0x1e8] sm:$0xff]
        %v1750 = vld [vmem:[%s516 + $0x1f0] sm:$0xff]
        %v1751 = vld [vmem:[%s516 + $0x1f8] sm:$0xff]
        %v1752 = vld [vmem:[%s516 + $0x200] sm:$0xff]
        %v1753 = vld [vmem:[%s516 + $0x208] sm:$0xff]
        %v1754 = vld [vmem:[%s516 + $0x210] sm:$0xff]
        %v1755 = vld [vmem:[%s516 + $0x218] sm:$0xff]
        %v1756 = vld [vmem:[%s516 + $0x220] sm:$0xff]
        %v1757 = vld [vmem:[%s516 + $0x228] sm:$0xff]
        %v1758 = vld [vmem:[%s516 + $0x230] sm:$0xff]
        %v1759 = vld [vmem:[%s516 + $0x238] sm:$0xff]
        %v1760 = vld [vmem:[%s516 + $0x240] sm:$0xff]
        %v1761 = vld [vmem:[%s516 + $0x248] sm:$0xff]
        %v1762 = vld [vmem:[%s516 + $0x250] sm:$0xff]
        %v1763 = vld [vmem:[%s516 + $0x258] sm:$0xff]
        %v1764 = vld [vmem:[%s516 + $0x260] sm:$0xff]
        %v1765 = vld [vmem:[%s516 + $0x268] sm:$0xff]
        %v1766 = vld [vmem:[%s516 + $0x270] sm:$0xff]
        %v1767 = vld [vmem:[%s516 + $0x278] sm:$0xff]
        %v1768 = vld [vmem:[%s516 + $0x280] sm:$0xff]
        %v1769 = vld [vmem:[%s516 + $0x288] sm:$0xff]
        %v1770 = vld [vmem:[%s516 + $0x290] sm:$0xff]
        %v1771 = vld [vmem:[%s516 + $0x298] sm:$0xff]
        %v1772 = vld [vmem:[%s516 + $0x2a0] sm:$0xff]
        %v1773 = vld [vmem:[%s516 + $0x2a8] sm:$0xff]
        %v1774 = vld [vmem:[%s516 + $0x2b0] sm:$0xff]
        %v1775 = vld [vmem:[%s516 + $0x2b8] sm:$0xff]
        %v1776 = vld [vmem:[%s516 + $0x2c0] sm:$0xff]
        %v1777 = vld [vmem:[%s516 + $0x2c8] sm:$0xff]
        %v1778 = vld [vmem:[%s516 + $0x2d0] sm:$0xff]
        %v1779 = vld [vmem:[%s516 + $0x2d8] sm:$0xff]
        %v1780 = vld [vmem:[%s516 + $0x2e0] sm:$0xff]
        %v1781 = vld [vmem:[%s516 + $0x2e8] sm:$0xff]
        %v1782 = vld [vmem:[%s516 + $0x2f0] sm:$0xff]
        %v1783 = vld [vmem:[%s516 + $0x2f8] sm:$0xff]
        %v1784 = vld [vmem:[%s516 + $0x300] sm:$0xff]
        %v1785 = vld [vmem:[%s516 + $0x308] sm:$0xff]
        %v1786 = vld [vmem:[%s516 + $0x310] sm:$0xff]
        %v1787 = vld [vmem:[%s516 + $0x318] sm:$0xff]
        %v1788 = vld [vmem:[%s516 + $0x320] sm:$0xff]
        %v1789 = vld [vmem:[%s516 + $0x328] sm:$0xff]
        %v1790 = vld [vmem:[%s516 + $0x330] sm:$0xff]
        %v1791 = vld [vmem:[%s516 + $0x338] sm:$0xff]
        %v1792 = vld [vmem:[%s516 + $0x340] sm:$0xff]
        %v1793 = vld [vmem:[%s516 + $0x348] sm:$0xff]
        %v1794 = vld [vmem:[%s516 + $0x350] sm:$0xff]
        %v1795 = vld [vmem:[%s516 + $0x358] sm:$0xff]
        %v1796 = vld [vmem:[%s516 + $0x360] sm:$0xff]
        %v1797 = vld [vmem:[%s516 + $0x368] sm:$0xff]
        %v1798 = vld [vmem:[%s516 + $0x370] sm:$0xff]
        %v1799 = vld [vmem:[%s516 + $0x378] sm:$0xff]
        %v1800 = vld [vmem:[%s516 + $0x380] sm:$0xff]
        %v1801 = vld [vmem:[%s516 + $0x388] sm:$0xff]
        %v1802 = vld [vmem:[%s516 + $0x390] sm:$0xff]
        %v1803 = vld [vmem:[%s516 + $0x398] sm:$0xff]
        %v1804 = vld [vmem:[%s516 + $0x3a0] sm:$0xff]
        %v1805 = vld [vmem:[%s516 + $0x3a8] sm:$0xff]
        %v1806 = vld [vmem:[%s516 + $0x3b0] sm:$0xff]
        %v1807 = vld [vmem:[%s516 + $0x3b8] sm:$0xff]
        %v1808 = vld [vmem:[%s516 + $0x3c0] sm:$0xff]
        %v1809 = vld [vmem:[%s516 + $0x3c8] sm:$0xff]
        %v1810 = vld [vmem:[%s516 + $0x3d0] sm:$0xff]
        %v1811 = vld [vmem:[%s516 + $0x3d8] sm:$0xff]
        %v1812 = vld [vmem:[%s516 + $0x3e0] sm:$0xff]
        %v1813 = vld [vmem:[%s516 + $0x3e8] sm:$0xff]
        %v1814 = vld [vmem:[%s516 + $0x3f0] sm:$0xff]
        %v1815 = vld [vmem:[%s516 + $0x3f8] sm:$0xff]
        %v1944 = vunpack.c.l.b16 %v1688
        %v1945 = vunpack.c.h.b16 %v1688
        %v1946 = vunpack.c.l.b16 %v1689
        %v1947 = vunpack.c.h.b16 %v1689
        %v1948 = vunpack.c.l.b16 %v1690
        %v1949 = vunpack.c.h.b16 %v1690
        %v1950 = vunpack.c.l.b16 %v1691
        %v1951 = vunpack.c.h.b16 %v1691
        %v1952 = vunpack.c.l.b16 %v1692
        %v1953 = vunpack.c.h.b16 %v1692
        %v1954 = vunpack.c.l.b16 %v1693
        %v1955 = vunpack.c.h.b16 %v1693
        %v1956 = vunpack.c.l.b16 %v1694
        %v1957 = vunpack.c.h.b16 %v1694
        %v1958 = vunpack.c.l.b16 %v1695
        %v1959 = vunpack.c.h.b16 %v1695
        %v1960 = vunpack.c.l.b16 %v1696
        %v1961 = vunpack.c.h.b16 %v1696
        %v1962 = vunpack.c.l.b16 %v1697
        %v1963 = vunpack.c.h.b16 %v1697
        %v1964 = vunpack.c.l.b16 %v1698
        %v1965 = vunpack.c.h.b16 %v1698
        %v1966 = vunpack.c.l.b16 %v1699
        %v1967 = vunpack.c.h.b16 %v1699
        %v1968 = vunpack.c.l.b16 %v1700
        %v1969 = vunpack.c.h.b16 %v1700
        %v1970 = vunpack.c.l.b16 %v1701
        %v1971 = vunpack.c.h.b16 %v1701
        %v1972 = vunpack.c.l.b16 %v1702
        %v1973 = vunpack.c.h.b16 %v1702
        %v1974 = vunpack.c.l.b16 %v1703
        %v1975 = vunpack.c.h.b16 %v1703
        %v1976 = vunpack.c.l.b16 %v1704
        %v1977 = vunpack.c.h.b16 %v1704
        %v1978 = vunpack.c.l.b16 %v1705
        %v1979 = vunpack.c.h.b16 %v1705
        %v1980 = vunpack.c.l.b16 %v1706
        %v1981 = vunpack.c.h.b16 %v1706
        %v1982 = vunpack.c.l.b16 %v1707
        %v1983 = vunpack.c.h.b16 %v1707
        %v1984 = vunpack.c.l.b16 %v1708
        %v1985 = vunpack.c.h.b16 %v1708
        %v1986 = vunpack.c.l.b16 %v1709
        %v1987 = vunpack.c.h.b16 %v1709
        %v1988 = vunpack.c.l.b16 %v1710
        %v1989 = vunpack.c.h.b16 %v1710
        %v1990 = vunpack.c.l.b16 %v1711
        %v1991 = vunpack.c.h.b16 %v1711
        %v1992 = vunpack.c.l.b16 %v1712
        %v1993 = vunpack.c.h.b16 %v1712
        %v1994 = vunpack.c.l.b16 %v1713
        %v1995 = vunpack.c.h.b16 %v1713
        %v1996 = vunpack.c.l.b16 %v1714
        %v1997 = vunpack.c.h.b16 %v1714
        %v1998 = vunpack.c.l.b16 %v1715
        %v1999 = vunpack.c.h.b16 %v1715
        %v2000 = vunpack.c.l.b16 %v1716
        %v2001 = vunpack.c.h.b16 %v1716
        %v2002 = vunpack.c.l.b16 %v1717
        %v2003 = vunpack.c.h.b16 %v1717
        %v2004 = vunpack.c.l.b16 %v1718
        %v2005 = vunpack.c.h.b16 %v1718
        %v2006 = vunpack.c.l.b16 %v1719
        %v2007 = vunpack.c.h.b16 %v1719
        %v2008 = vunpack.c.l.b16 %v1720
        %v2009 = vunpack.c.h.b16 %v1720
        %v2010 = vunpack.c.l.b16 %v1721
        %v2011 = vunpack.c.h.b16 %v1721
        %v2012 = vunpack.c.l.b16 %v1722
        %v2013 = vunpack.c.h.b16 %v1722
        %v2014 = vunpack.c.l.b16 %v1723
        %v2015 = vunpack.c.h.b16 %v1723
        %v2016 = vunpack.c.l.b16 %v1724
        %v2017 = vunpack.c.h.b16 %v1724
        %v2018 = vunpack.c.l.b16 %v1725
        %v2019 = vunpack.c.h.b16 %v1725
        %v2020 = vunpack.c.l.b16 %v1726
        %v2021 = vunpack.c.h.b16 %v1726
        %v2022 = vunpack.c.l.b16 %v1727
        %v2023 = vunpack.c.h.b16 %v1727
        %v2024 = vunpack.c.l.b16 %v1728
        %v2025 = vunpack.c.h.b16 %v1728
        %v2026 = vunpack.c.l.b16 %v1729
        %v2027 = vunpack.c.h.b16 %v1729
        %v2028 = vunpack.c.l.b16 %v1730
        %v2029 = vunpack.c.h.b16 %v1730
        %v2030 = vunpack.c.l.b16 %v1731
        %v2031 = vunpack.c.h.b16 %v1731
        %v2032 = vunpack.c.l.b16 %v1732
        %v2033 = vunpack.c.h.b16 %v1732
        %v2034 = vunpack.c.l.b16 %v1733
        %v2035 = vunpack.c.h.b16 %v1733
        %v2036 = vunpack.c.l.b16 %v1734
        %v2037 = vunpack.c.h.b16 %v1734
        %v2038 = vunpack.c.l.b16 %v1735
        %v2039 = vunpack.c.h.b16 %v1735
        %v2040 = vunpack.c.l.b16 %v1736
        %v2041 = vunpack.c.h.b16 %v1736
        %v2042 = vunpack.c.l.b16 %v1737
        %v2043 = vunpack.c.h.b16 %v1737
        %v2044 = vunpack.c.l.b16 %v1738
        %v2045 = vunpack.c.h.b16 %v1738
        %v2046 = vunpack.c.l.b16 %v1739
        %v2047 = vunpack.c.h.b16 %v1739
        %v2048 = vunpack.c.l.b16 %v1740
        %v2049 = vunpack.c.h.b16 %v1740
        %v2050 = vunpack.c.l.b16 %v1741
        %v2051 = vunpack.c.h.b16 %v1741
        %v2052 = vunpack.c.l.b16 %v1742
        %v2053 = vunpack.c.h.b16 %v1742
        %v2054 = vunpack.c.l.b16 %v1743
        %v2055 = vunpack.c.h.b16 %v1743
        %v2056 = vunpack.c.l.b16 %v1744
        %v2057 = vunpack.c.h.b16 %v1744
        %v2058 = vunpack.c.l.b16 %v1745
        %v2059 = vunpack.c.h.b16 %v1745
        %v2060 = vunpack.c.l.b16 %v1746
        %v2061 = vunpack.c.h.b16 %v1746
        %v2062 = vunpack.c.l.b16 %v1747
        %v2063 = vunpack.c.h.b16 %v1747
        %v2064 = vunpack.c.l.b16 %v1748
        %v2065 = vunpack.c.h.b16 %v1748
        %v2066 = vunpack.c.l.b16 %v1749
        %v2067 = vunpack.c.h.b16 %v1749
        %v2068 = vunpack.c.l.b16 %v1750
        %v2069 = vunpack.c.h.b16 %v1750
        %v2070 = vunpack.c.l.b16 %v1751
        %v2071 = vunpack.c.h.b16 %v1751
        %v2072 = vunpack.c.l.b16 %v1752
        %v2073 = vunpack.c.h.b16 %v1752
        %v2074 = vunpack.c.l.b16 %v1753
        %v2075 = vunpack.c.h.b16 %v1753
        %v2076 = vunpack.c.l.b16 %v1754
        %v2077 = vunpack.c.h.b16 %v1754
        %v2078 = vunpack.c.l.b16 %v1755
        %v2079 = vunpack.c.h.b16 %v1755
        %v2080 = vunpack.c.l.b16 %v1756
        %v2081 = vunpack.c.h.b16 %v1756
        %v2082 = vunpack.c.l.b16 %v1757
        %v2083 = vunpack.c.h.b16 %v1757
        %v2084 = vunpack.c.l.b16 %v1758
        %v2085 = vunpack.c.h.b16 %v1758
        %v2086 = vunpack.c.l.b16 %v1759
        %v2087 = vunpack.c.h.b16 %v1759
        %v2088 = vunpack.c.l.b16 %v1760
        %v2089 = vunpack.c.h.b16 %v1760
        %v2090 = vunpack.c.l.b16 %v1761
        %v2091 = vunpack.c.h.b16 %v1761
        %v2092 = vunpack.c.l.b16 %v1762
        %v2093 = vunpack.c.h.b16 %v1762
        %v2094 = vunpack.c.l.b16 %v1763
        %v2095 = vunpack.c.h.b16 %v1763
        %v2096 = vunpack.c.l.b16 %v1764
        %v2097 = vunpack.c.h.b16 %v1764
        %v2098 = vunpack.c.l.b16 %v1765
        %v2099 = vunpack.c.h.b16 %v1765
        %v2100 = vunpack.c.l.b16 %v1766
        %v2101 = vunpack.c.h.b16 %v1766
        %v2102 = vunpack.c.l.b16 %v1767
        %v2103 = vunpack.c.h.b16 %v1767
        %v2104 = vunpack.c.l.b16 %v1768
        %v2105 = vunpack.c.h.b16 %v1768
        %v2106 = vunpack.c.l.b16 %v1769
        %v2107 = vunpack.c.h.b16 %v1769
        %v2108 = vunpack.c.l.b16 %v1770
        %v2109 = vunpack.c.h.b16 %v1770
        %v2110 = vunpack.c.l.b16 %v1771
        %v2111 = vunpack.c.h.b16 %v1771
        %v2112 = vunpack.c.l.b16 %v1772
        %v2113 = vunpack.c.h.b16 %v1772
        %v2114 = vunpack.c.l.b16 %v1773
        %v2115 = vunpack.c.h.b16 %v1773
        %v2116 = vunpack.c.l.b16 %v1774
        %v2117 = vunpack.c.h.b16 %v1774
        %v2118 = vunpack.c.l.b16 %v1775
        %v2119 = vunpack.c.h.b16 %v1775
        %v2120 = vunpack.c.l.b16 %v1776
        %v2121 = vunpack.c.h.b16 %v1776
        %v2122 = vunpack.c.l.b16 %v1777
        %v2123 = vunpack.c.h.b16 %v1777
        %v2124 = vunpack.c.l.b16 %v1778
        %v2125 = vunpack.c.h.b16 %v1778
        %v2126 = vunpack.c.l.b16 %v1779
        %v2127 = vunpack.c.h.b16 %v1779
        %v2128 = vunpack.c.l.b16 %v1780
        %v2129 = vunpack.c.h.b16 %v1780
        %v2130 = vunpack.c.l.b16 %v1781
        %v2131 = vunpack.c.h.b16 %v1781
        %v2132 = vunpack.c.l.b16 %v1782
        %v2133 = vunpack.c.h.b16 %v1782
        %v2134 = vunpack.c.l.b16 %v1783
        %v2135 = vunpack.c.h.b16 %v1783
        %v2136 = vunpack.c.l.b16 %v1784
        %v2137 = vunpack.c.h.b16 %v1784
        %v2138 = vunpack.c.l.b16 %v1785
        %v2139 = vunpack.c.h.b16 %v1785
        %v2140 = vunpack.c.l.b16 %v1786
        %v2141 = vunpack.c.h.b16 %v1786
        %v2142 = vunpack.c.l.b16 %v1787
        %v2143 = vunpack.c.h.b16 %v1787
        %v2144 = vunpack.c.l.b16 %v1788
        %v2145 = vunpack.c.h.b16 %v1788
        %v2146 = vunpack.c.l.b16 %v1789
        %v2147 = vunpack.c.h.b16 %v1789
        %v2148 = vunpack.c.l.b16 %v1790
        %v2149 = vunpack.c.h.b16 %v1790
        %v2150 = vunpack.c.l.b16 %v1791
        %v2151 = vunpack.c.h.b16 %v1791
        %v2152 = vunpack.c.l.b16 %v1792
        %v2153 = vunpack.c.h.b16 %v1792
        %v2154 = vunpack.c.l.b16 %v1793
        %v2155 = vunpack.c.h.b16 %v1793
        %v2156 = vunpack.c.l.b16 %v1794
        %v2157 = vunpack.c.h.b16 %v1794
        %v2158 = vunpack.c.l.b16 %v1795
        %v2159 = vunpack.c.h.b16 %v1795
        %v2160 = vunpack.c.l.b16 %v1796
        %v2161 = vunpack.c.h.b16 %v1796
        %v2162 = vunpack.c.l.b16 %v1797
        %v2163 = vunpack.c.h.b16 %v1797
        %v2164 = vunpack.c.l.b16 %v1798
        %v2165 = vunpack.c.h.b16 %v1798
        %v2166 = vunpack.c.l.b16 %v1799
        %v2167 = vunpack.c.h.b16 %v1799
        %v2168 = vunpack.c.l.b16 %v1800
        %v2169 = vunpack.c.h.b16 %v1800
        %v2170 = vunpack.c.l.b16 %v1801
        %v2171 = vunpack.c.h.b16 %v1801
        %v2172 = vunpack.c.l.b16 %v1802
        %v2173 = vunpack.c.h.b16 %v1802
        %v2174 = vunpack.c.l.b16 %v1803
        %v2175 = vunpack.c.h.b16 %v1803
        %v2176 = vunpack.c.l.b16 %v1804
        %v2177 = vunpack.c.h.b16 %v1804
        %v2178 = vunpack.c.l.b16 %v1805
        %v2179 = vunpack.c.h.b16 %v1805
        %v2180 = vunpack.c.l.b16 %v1806
        %v2181 = vunpack.c.h.b16 %v1806
        %v2182 = vunpack.c.l.b16 %v1807
        %v2183 = vunpack.c.h.b16 %v1807
        %v2184 = vunpack.c.l.b16 %v1808
        %v2185 = vunpack.c.h.b16 %v1808
        %v2186 = vunpack.c.l.b16 %v1809
        %v2187 = vunpack.c.h.b16 %v1809
        %v2188 = vunpack.c.l.b16 %v1810
        %v2189 = vunpack.c.h.b16 %v1810
        %v2190 = vunpack.c.l.b16 %v1811
        %v2191 = vunpack.c.h.b16 %v1811
        %v2192 = vunpack.c.l.b16 %v1812
        %v2193 = vunpack.c.h.b16 %v1812
        %v2194 = vunpack.c.l.b16 %v1813
        %v2195 = vunpack.c.h.b16 %v1813
        %v2196 = vunpack.c.l.b16 %v1814
        %v2197 = vunpack.c.h.b16 %v1814
        %v2198 = vunpack.c.l.b16 %v1815
        %v2199 = vunpack.c.h.b16 %v1815
        %v2200 = vpack.c.b16 %v1952, %v1944
        %v2201 = vpack.c.b16 %v1953, %v1945
        %v2202 = vpack.c.b16 %v1954, %v1946
        %v2203 = vpack.c.b16 %v1955, %v1947
        %v2204 = vpack.c.b16 %v1956, %v1948
        %v2205 = vpack.c.b16 %v1957, %v1949
        %v2206 = vpack.c.b16 %v1958, %v1950
        %v2207 = vpack.c.b16 %v1959, %v1951
        %v2208 = vpack.c.b16 %v1968, %v1960
        %v2209 = vpack.c.b16 %v1969, %v1961
        %v2210 = vpack.c.b16 %v1970, %v1962
        %v2211 = vpack.c.b16 %v1971, %v1963
        %v2212 = vpack.c.b16 %v1972, %v1964
        %v2213 = vpack.c.b16 %v1973, %v1965
        %v2214 = vpack.c.b16 %v1974, %v1966
        %v2215 = vpack.c.b16 %v1975, %v1967
        %v2216 = vpack.c.b16 %v1984, %v1976
        %v2217 = vpack.c.b16 %v1985, %v1977
        %v2218 = vpack.c.b16 %v1986, %v1978
        %v2219 = vpack.c.b16 %v1987, %v1979
        %v2220 = vpack.c.b16 %v1988, %v1980
        %v2221 = vpack.c.b16 %v1989, %v1981
        %v2222 = vpack.c.b16 %v1990, %v1982
        %v2223 = vpack.c.b16 %v1991, %v1983
        %v2224 = vpack.c.b16 %v2000, %v1992
        %v2225 = vpack.c.b16 %v2001, %v1993
        %v2226 = vpack.c.b16 %v2002, %v1994
        %v2227 = vpack.c.b16 %v2003, %v1995
        %v2228 = vpack.c.b16 %v2004, %v1996
        %v2229 = vpack.c.b16 %v2005, %v1997
        %v2230 = vpack.c.b16 %v2006, %v1998
        %v2231 = vpack.c.b16 %v2007, %v1999
        %v2232 = vpack.c.b16 %v2016, %v2008
        %v2233 = vpack.c.b16 %v2017, %v2009
        %v2234 = vpack.c.b16 %v2018, %v2010
        %v2235 = vpack.c.b16 %v2019, %v2011
        %v2236 = vpack.c.b16 %v2020, %v2012
        %v2237 = vpack.c.b16 %v2021, %v2013
        %v2238 = vpack.c.b16 %v2022, %v2014
        %v2239 = vpack.c.b16 %v2023, %v2015
        %v2240 = vpack.c.b16 %v2032, %v2024
        %v2241 = vpack.c.b16 %v2033, %v2025
        %v2242 = vpack.c.b16 %v2034, %v2026
        %v2243 = vpack.c.b16 %v2035, %v2027
        %v2244 = vpack.c.b16 %v2036, %v2028
        %v2245 = vpack.c.b16 %v2037, %v2029
        %v2246 = vpack.c.b16 %v2038, %v2030
        %v2247 = vpack.c.b16 %v2039, %v2031
        %v2248 = vpack.c.b16 %v2048, %v2040
        %v2249 = vpack.c.b16 %v2049, %v2041
        %v2250 = vpack.c.b16 %v2050, %v2042
        %v2251 = vpack.c.b16 %v2051, %v2043
        %v2252 = vpack.c.b16 %v2052, %v2044
        %v2253 = vpack.c.b16 %v2053, %v2045
        %v2254 = vpack.c.b16 %v2054, %v2046
        %v2255 = vpack.c.b16 %v2055, %v2047
        %v2256 = vpack.c.b16 %v2064, %v2056
        %v2257 = vpack.c.b16 %v2065, %v2057
        %v2258 = vpack.c.b16 %v2066, %v2058
        %v2259 = vpack.c.b16 %v2067, %v2059
        %v2260 = vpack.c.b16 %v2068, %v2060
        %v2261 = vpack.c.b16 %v2069, %v2061
        %v2262 = vpack.c.b16 %v2070, %v2062
        %v2263 = vpack.c.b16 %v2071, %v2063
        %v2264 = vpack.c.b16 %v2080, %v2072
        %v2265 = vpack.c.b16 %v2081, %v2073
        %v2266 = vpack.c.b16 %v2082, %v2074
        %v2267 = vpack.c.b16 %v2083, %v2075
        %v2268 = vpack.c.b16 %v2084, %v2076
        %v2269 = vpack.c.b16 %v2085, %v2077
        %v2270 = vpack.c.b16 %v2086, %v2078
        %v2271 = vpack.c.b16 %v2087, %v2079
        %v2272 = vpack.c.b16 %v2096, %v2088
        %v2273 = vpack.c.b16 %v2097, %v2089
        %v2274 = vpack.c.b16 %v2098, %v2090
        %v2275 = vpack.c.b16 %v2099, %v2091
        %v2276 = vpack.c.b16 %v2100, %v2092
        %v2277 = vpack.c.b16 %v2101, %v2093
        %v2278 = vpack.c.b16 %v2102, %v2094
        %v2279 = vpack.c.b16 %v2103, %v2095
        %v2280 = vpack.c.b16 %v2112, %v2104
        %v2281 = vpack.c.b16 %v2113, %v2105
        %v2282 = vpack.c.b16 %v2114, %v2106
        %v2283 = vpack.c.b16 %v2115, %v2107
        %v2284 = vpack.c.b16 %v2116, %v2108
        %v2285 = vpack.c.b16 %v2117, %v2109
        %v2286 = vpack.c.b16 %v2118, %v2110
        %v2287 = vpack.c.b16 %v2119, %v2111
        %v2288 = vpack.c.b16 %v2128, %v2120
        %v2289 = vpack.c.b16 %v2129, %v2121
        %v2290 = vpack.c.b16 %v2130, %v2122
        %v2291 = vpack.c.b16 %v2131, %v2123
        %v2292 = vpack.c.b16 %v2132, %v2124
        %v2293 = vpack.c.b16 %v2133, %v2125
        %v2294 = vpack.c.b16 %v2134, %v2126
        %v2295 = vpack.c.b16 %v2135, %v2127
        %v2296 = vpack.c.b16 %v2144, %v2136
        %v2297 = vpack.c.b16 %v2145, %v2137
        %v2298 = vpack.c.b16 %v2146, %v2138
        %v2299 = vpack.c.b16 %v2147, %v2139
        %v2300 = vpack.c.b16 %v2148, %v2140
        %v2301 = vpack.c.b16 %v2149, %v2141
        %v2302 = vpack.c.b16 %v2150, %v2142
        %v2303 = vpack.c.b16 %v2151, %v2143
        %v2304 = vpack.c.b16 %v2160, %v2152
        %v2305 = vpack.c.b16 %v2161, %v2153
        %v2306 = vpack.c.b16 %v2162, %v2154
        %v2307 = vpack.c.b16 %v2163, %v2155
        %v2308 = vpack.c.b16 %v2164, %v2156
        %v2309 = vpack.c.b16 %v2165, %v2157
        %v2310 = vpack.c.b16 %v2166, %v2158
        %v2311 = vpack.c.b16 %v2167, %v2159
        %v2312 = vpack.c.b16 %v2176, %v2168
        %v2313 = vpack.c.b16 %v2177, %v2169
        %v2314 = vpack.c.b16 %v2178, %v2170
        %v2315 = vpack.c.b16 %v2179, %v2171
        %v2316 = vpack.c.b16 %v2180, %v2172
        %v2317 = vpack.c.b16 %v2181, %v2173
        %v2318 = vpack.c.b16 %v2182, %v2174
        %v2319 = vpack.c.b16 %v2183, %v2175
        %v2320 = vpack.c.b16 %v2192, %v2184
        %v2321 = vpack.c.b16 %v2193, %v2185
        %v2322 = vpack.c.b16 %v2194, %v2186
        %v2323 = vpack.c.b16 %v2195, %v2187
        %v2324 = vpack.c.b16 %v2196, %v2188
        %v2325 = vpack.c.b16 %v2197, %v2189
        %v2326 = vpack.c.b16 %v2198, %v2190
        %v2327 = vpack.c.b16 %v2199, %v2191
        %2456 = vmatprep.subr.bf16.mxu0 %v2201
        %2457 = vmatpush1.bf16.msra.mxu0 %v2200
        %2458 = vmatprep.subr.bf16.mxu0 %v2209
        %2459 = vmatpush1.bf16.msra.mxu0 %v2208
        %2460 = vmatprep.subr.bf16.mxu0 %v2217
        %2461 = vmatpush1.bf16.msra.mxu0 %v2216
        %2462 = vmatprep.subr.bf16.mxu0 %v2225
        %2463 = vmatpush1.bf16.msra.mxu0 %v2224
        %2464 = vmatprep.subr.bf16.mxu0 %v2233
        %2465 = vmatpush1.bf16.msra.mxu0 %v2232
        %2466 = vmatprep.subr.bf16.mxu0 %v2241
        %2467 = vmatpush1.bf16.msra.mxu0 %v2240
        %2468 = vmatprep.subr.bf16.mxu0 %v2249
        %2469 = vmatpush1.bf16.msra.mxu0 %v2248
        %2470 = vmatprep.subr.bf16.mxu0 %v2257
        %2471 = vmatpush1.bf16.msra.mxu0 %v2256
        %2472 = vmatprep.subr.bf16.mxu0 %v2265
        %2473 = vmatpush1.bf16.msra.mxu0 %v2264
        %2474 = vmatprep.subr.bf16.mxu0 %v2273
        %2475 = vmatpush1.bf16.msra.mxu0 %v2272
        %2476 = vmatprep.subr.bf16.mxu0 %v2281
        %2477 = vmatpush1.bf16.msra.mxu0 %v2280
        %2478 = vmatprep.subr.bf16.mxu0 %v2289
        %2479 = vmatpush1.bf16.msra.mxu0 %v2288
        %2480 = vmatprep.subr.bf16.mxu0 %v2297
        %2481 = vmatpush1.bf16.msra.mxu0 %v2296
        %2482 = vmatprep.subr.bf16.mxu0 %v2305
        %2483 = vmatpush1.bf16.msra.mxu0 %v2304
        %2484 = vmatprep.subr.bf16.mxu0 %v2313
        %2485 = vmatpush1.bf16.msra.mxu0 %v2312
        %2486 = vmatprep.subr.bf16.mxu0 %v2321
        %2487 = vmatpush1.bf16.msra.mxu0 %v2320
        %2488 = vmatprep.mubr.bf16.mxu0 %v1687
        %2489 = vmatmul.mubr.bf16.gmra.mrb[0].mxu0 %v1686
        %v2490 = vpop.f32.mrb[0].mxu0
        %v2491 = vadd.f32 0.0, %v2490
        %v2492 = vpop.f32.mrb[0].mxu0
        %v2493 = vadd.f32 0.0, %v2492
        %v2494 = vpop.f32.mrb[0].mxu0
        %v2495 = vadd.f32 0.0, %v2494
        %v2496 = vpop.f32.mrb[0].mxu0
        %v2497 = vadd.f32 0.0, %v2496
        %2498 = vdwg.mxu0
        %2499 = vmatprep.subr.bf16.mxu0 %v2203
        %2500 = vmatpush1.bf16.msra.mxu0 %v2202
        %2501 = vmatprep.subr.bf16.mxu0 %v2211
        %2502 = vmatpush1.bf16.msra.mxu0 %v2210
        %2503 = vmatprep.subr.bf16.mxu0 %v2219
        %2504 = vmatpush1.bf16.msra.mxu0 %v2218
        %2505 = vmatprep.subr.bf16.mxu0 %v2227
        %2506 = vmatpush1.bf16.msra.mxu0 %v2226
        %2507 = vmatprep.subr.bf16.mxu0 %v2235
        %2508 = vmatpush1.bf16.msra.mxu0 %v2234
        %2509 = vmatprep.subr.bf16.mxu0 %v2243
        %2510 = vmatpush1.bf16.msra.mxu0 %v2242
        %2511 = vmatprep.subr.bf16.mxu0 %v2251
        %2512 = vmatpush1.bf16.msra.mxu0 %v2250
        %2513 = vmatprep.subr.bf16.mxu0 %v2259
        %2514 = vmatpush1.bf16.msra.mxu0 %v2258
        %2515 = vmatprep.subr.bf16.mxu0 %v2267
        %2516 = vmatpush1.bf16.msra.mxu0 %v2266
        %2517 = vmatprep.subr.bf16.mxu0 %v2275
        %2518 = vmatpush1.bf16.msra.mxu0 %v2274
        %2519 = vmatprep.subr.bf16.mxu0 %v2283
        %2520 = vmatpush1.bf16.msra.mxu0 %v2282
        %2521 = vmatprep.subr.bf16.mxu0 %v2291
        %2522 = vmatpush1.bf16.msra.mxu0 %v2290
        %2523 = vmatprep.subr.bf16.mxu0 %v2299
        %2524 = vmatpush1.bf16.msra.mxu0 %v2298
        %2525 = vmatprep.subr.bf16.mxu0 %v2307
        %2526 = vmatpush1.bf16.msra.mxu0 %v2306
        %2527 = vmatprep.subr.bf16.mxu0 %v2315
        %2528 = vmatpush1.bf16.msra.mxu0 %v2314
        %2529 = vmatprep.subr.bf16.mxu0 %v2323
        %2530 = vmatpush1.bf16.msra.mxu0 %v2322
        %2531 = vmatprep.mubr.bf16.mxu0 %v1687
        %2532 = vmatmul.mubr.bf16.gmra.mrb[0].mxu0 %v1686
        %v2533 = vpop.f32.mrb[0].mxu0
        %v2534 = vadd.f32 0.0, %v2533
        %v2535 = vpop.f32.mrb[0].mxu0
        %v2536 = vadd.f32 0.0, %v2535
        %v2537 = vpop.f32.mrb[0].mxu0
        %v2538 = vadd.f32 0.0, %v2537
        %v2539 = vpop.f32.mrb[0].mxu0
        %v2540 = vadd.f32 0.0, %v2539
        %2541 = vdwg.mxu0
        %2542 = vmatprep.subr.bf16.mxu0 %v2205
        %2543 = vmatpush1.bf16.msra.mxu0 %v2204
        %2544 = vmatprep.subr.bf16.mxu0 %v2213
        %2545 = vmatpush1.bf16.msra.mxu0 %v2212
        %2546 = vmatprep.subr.bf16.mxu0 %v2221
        %2547 = vmatpush1.bf16.msra.mxu0 %v2220
        %2548 = vmatprep.subr.bf16.mxu0 %v2229
        %2549 = vmatpush1.bf16.msra.mxu0 %v2228
        %2550 = vmatprep.subr.bf16.mxu0 %v2237
        %2551 = vmatpush1.bf16.msra.mxu0 %v2236
        %2552 = vmatprep.subr.bf16.mxu0 %v2245
        %2553 = vmatpush1.bf16.msra.mxu0 %v2244
        %2554 = vmatprep.subr.bf16.mxu0 %v2253
        %2555 = vmatpush1.bf16.msra.mxu0 %v2252
        %2556 = vmatprep.subr.bf16.mxu0 %v2261
        %2557 = vmatpush1.bf16.msra.mxu0 %v2260
        %2558 = vmatprep.subr.bf16.mxu0 %v2269
        %2559 = vmatpush1.bf16.msra.mxu0 %v2268
        %2560 = vmatprep.subr.bf16.mxu0 %v2277
        %2561 = vmatpush1.bf16.msra.mxu0 %v2276
        %2562 = vmatprep.subr.bf16.mxu0 %v2285
        %2563 = vmatpush1.bf16.msra.mxu0 %v2284
        %2564 = vmatprep.subr.bf16.mxu0 %v2293
        %2565 = vmatpush1.bf16.msra.mxu0 %v2292
        %2566 = vmatprep.subr.bf16.mxu0 %v2301
        %2567 = vmatpush1.bf16.msra.mxu0 %v2300
        %2568 = vmatprep.subr.bf16.mxu0 %v2309
        %2569 = vmatpush1.bf16.msra.mxu0 %v2308
        %2570 = vmatprep.subr.bf16.mxu0 %v2317
        %2571 = vmatpush1.bf16.msra.mxu0 %v2316
        %2572 = vmatprep.subr.bf16.mxu0 %v2325
        %2573 = vmatpush1.bf16.msra.mxu0 %v2324
        %2574 = vmatprep.mubr.bf16.mxu0 %v1687
        %2575 = vmatmul.mubr.bf16.gmra.mrb[0].mxu0 %v1686
        %v2576 = vpop.f32.mrb[0].mxu0
        %v2577 = vadd.f32 0.0, %v2576
        %v2578 = vpop.f32.mrb[0].mxu0
        %v2579 = vadd.f32 0.0, %v2578
        %v2580 = vpop.f32.mrb[0].mxu0
        %v2581 = vadd.f32 0.0, %v2580
        %v2582 = vpop.f32.mrb[0].mxu0
        %v2583 = vadd.f32 0.0, %v2582
        %2584 = vdwg.mxu0
        %2585 = vmatprep.subr.bf16.mxu0 %v2207
        %2586 = vmatpush1.bf16.msra.mxu0 %v2206
        %2587 = vmatprep.subr.bf16.mxu0 %v2215
        %2588 = vmatpush1.bf16.msra.mxu0 %v2214
        %2589 = vmatprep.subr.bf16.mxu0 %v2223
        %2590 = vmatpush1.bf16.msra.mxu0 %v2222
        %2591 = vmatprep.subr.bf16.mxu0 %v2231
        %2592 = vmatpush1.bf16.msra.mxu0 %v2230
        %2593 = vmatprep.subr.bf16.mxu0 %v2239
        %2594 = vmatpush1.bf16.msra.mxu0 %v2238
        %2595 = vmatprep.subr.bf16.mxu0 %v2247
        %2596 = vmatpush1.bf16.msra.mxu0 %v2246
        %2597 = vmatprep.subr.bf16.mxu0 %v2255
        %2598 = vmatpush1.bf16.msra.mxu0 %v2254
        %2599 = vmatprep.subr.bf16.mxu0 %v2263
        %2600 = vmatpush1.bf16.msra.mxu0 %v2262
        %2601 = vmatprep.subr.bf16.mxu0 %v2271
        %2602 = vmatpush1.bf16.msra.mxu0 %v2270
        %2603 = vmatprep.subr.bf16.mxu0 %v2279
        %2604 = vmatpush1.bf16.msra.mxu0 %v2278
        %2605 = vmatprep.subr.bf16.mxu0 %v2287
        %2606 = vmatpush1.bf16.msra.mxu0 %v2286
        %2607 = vmatprep.subr.bf16.mxu0 %v2295
        %2608 = vmatpush1.bf16.msra.mxu0 %v2294
        %2609 = vmatprep.subr.bf16.mxu0 %v2303
        %2610 = vmatpush1.bf16.msra.mxu0 %v2302
        %2611 = vmatprep.subr.bf16.mxu0 %v2311
        %2612 = vmatpush1.bf16.msra.mxu0 %v2310
        %2613 = vmatprep.subr.bf16.mxu0 %v2319
        %2614 = vmatpush1.bf16.msra.mxu0 %v2318
        %2615 = vmatprep.subr.bf16.mxu0 %v2327
        %2616 = vmatpush1.bf16.msra.mxu0 %v2326
        %2617 = vmatprep.mubr.bf16.mxu0 %v1687
        %2618 = vmatmul.mubr.bf16.gmra.mrb[0].mxu0 %v1686
        %v2619 = vpop.f32.mrb[0].mxu0
        %v2620 = vadd.f32 0.0, %v2619
        %v2621 = vpop.f32.mrb[0].mxu0
        %v2622 = vadd.f32 0.0, %v2621
        %v2623 = vpop.f32.mrb[0].mxu0
        %v2624 = vadd.f32 0.0, %v2623
        %v2625 = vpop.f32.mrb[0].mxu0
        %v2626 = vadd.f32 0.0, %v2625
        %2627 = vdwg.mxu0
        %v2628 = vxor.u32 %v2491, 2147483648
        %v2629 = vxor.u32 %v2493, 2147483648
        %v2630 = vxor.u32 %v2534, 2147483648
        %v2631 = vxor.u32 %v2536, 2147483648
        %v2632 = vxor.u32 %v2495, 2147483648
        %v2633 = vxor.u32 %v2497, 2147483648
        %v2634 = vxor.u32 %v2538, 2147483648
        %v2635 = vxor.u32 %v2540, 2147483648
        %v2636 = vmul.f32 %v2628, 1.442695
        %v2637 = vpow.pop %v2636
        %v2638 = vmul.f32 %v2629, 1.442695
        %v2639 = vpow.pop %v2638
        %v2640 = vmul.f32 %v2630, 1.442695
        %v2641 = vpow.pop %v2640
        %v2642 = vmul.f32 %v2631, 1.442695
        %v2643 = vpow.pop %v2642
        %v2644 = vmul.f32 %v2632, 1.442695
        %v2645 = vpow.pop %v2644
        %v2646 = vmul.f32 %v2633, 1.442695
        %v2647 = vpow.pop %v2646
        %v2648 = vmul.f32 %v2634, 1.442695
        %v2649 = vpow.pop %v2648
        %v2650 = vmul.f32 %v2635, 1.442695
        %v2651 = vpow.pop %v2650
        %v2652 = vadd.f32 %v2637, 1.0
        %v2653 = vadd.f32 %v2639, 1.0
        %v2654 = vadd.f32 %v2641, 1.0
        %v2655 = vadd.f32 %v2643, 1.0
        %v2656 = vadd.f32 %v2645, 1.0
        %v2657 = vadd.f32 %v2647, 1.0
        %v2658 = vadd.f32 %v2649, 1.0
        %v2659 = vadd.f32 %v2651, 1.0
        %v2660 = vrcp.pop %v2652
        %v2661 = vmul.f32 1.0, %v2660
        %v2662 = vrcp.pop %v2653
        %v2663 = vmul.f32 1.0, %v2662
        %v2664 = vrcp.pop %v2654
        %v2665 = vmul.f32 1.0, %v2664
        %v2666 = vrcp.pop %v2655
        %v2667 = vmul.f32 1.0, %v2666
        %v2668 = vrcp.pop %v2656
        %v2669 = vmul.f32 1.0, %v2668
        %v2670 = vrcp.pop %v2657
        %v2671 = vmul.f32 1.0, %v2670
        %v2672 = vrcp.pop %v2658
        %v2673 = vmul.f32 1.0, %v2672
        %v2674 = vrcp.pop %v2659
        %v2675 = vmul.f32 1.0, %v2674
        %v2676 = vmul.f32 %v2491, %v2661
        %v2677 = vmul.f32 %v2493, %v2663
        %v2678 = vmul.f32 %v2534, %v2665
        %v2679 = vmul.f32 %v2536, %v2667
        %v2680 = vmul.f32 %v2495, %v2669
        %v2681 = vmul.f32 %v2497, %v2671
        %v2682 = vmul.f32 %v2538, %v2673
        %v2683 = vmul.f32 %v2540, %v2675
        %v2684 = vmul.f32 %v2676, %v2577
        %v2685 = vmul.f32 %v2677, %v2579
        %v2686 = vmul.f32 %v2678, %v2620
        %v2687 = vmul.f32 %v2679, %v2622
        %v2688 = vmul.f32 %v2680, %v2581
        %v2689 = vmul.f32 %v2681, %v2583
        %v2690 = vmul.f32 %v2682, %v2624
        %v2691 = vmul.f32 %v2683, %v2626
        %v2692 = vpack.c.bf16 %v2688, %v2684
        %v2693 = vpack.c.bf16 %v2689, %v2685
        %v2694 = vpack.c.bf16 %v2690, %v2686
        %v2695 = vpack.c.bf16 %v2691, %v2687
        %v2696 = vld [vmem:[%s525] sm:$0xff]
        %v2697 = vld [vmem:[%s525 + $0x8] sm:$0xff]
        %v2698 = vld [vmem:[%s525 + $0x10] sm:$0xff]
        %v2699 = vld [vmem:[%s525 + $0x18] sm:$0xff]
        %v2700 = vld [vmem:[%s525 + $0x20] sm:$0xff]
        %v2701 = vld [vmem:[%s525 + $0x28] sm:$0xff]
        %v2702 = vld [vmem:[%s525 + $0x30] sm:$0xff]
        %v2703 = vld [vmem:[%s525 + $0x38] sm:$0xff]
        %v2704 = vld [vmem:[%s525 + $0x40] sm:$0xff]
        %v2705 = vld [vmem:[%s525 + $0x48] sm:$0xff]
        %v2706 = vld [vmem:[%s525 + $0x50] sm:$0xff]
        %v2707 = vld [vmem:[%s525 + $0x58] sm:$0xff]
        %v2708 = vld [vmem:[%s525 + $0x60] sm:$0xff]
        %v2709 = vld [vmem:[%s525 + $0x68] sm:$0xff]
        %v2710 = vld [vmem:[%s525 + $0x70] sm:$0xff]
        %v2711 = vld [vmem:[%s525 + $0x78] sm:$0xff]
        %v2712 = vld [vmem:[%s525 + $0x80] sm:$0xff]
        %v2713 = vld [vmem:[%s525 + $0x88] sm:$0xff]
        %v2714 = vld [vmem:[%s525 + $0x90] sm:$0xff]
        %v2715 = vld [vmem:[%s525 + $0x98] sm:$0xff]
        %v2716 = vld [vmem:[%s525 + $0xa0] sm:$0xff]
        %v2717 = vld [vmem:[%s525 + $0xa8] sm:$0xff]
        %v2718 = vld [vmem:[%s525 + $0xb0] sm:$0xff]
        %v2719 = vld [vmem:[%s525 + $0xb8] sm:$0xff]
        %v2720 = vld [vmem:[%s525 + $0xc0] sm:$0xff]
        %v2721 = vld [vmem:[%s525 + $0xc8] sm:$0xff]
        %v2722 = vld [vmem:[%s525 + $0xd0] sm:$0xff]
        %v2723 = vld [vmem:[%s525 + $0xd8] sm:$0xff]
        %v2724 = vld [vmem:[%s525 + $0xe0] sm:$0xff]
        %v2725 = vld [vmem:[%s525 + $0xe8] sm:$0xff]
        %v2726 = vld [vmem:[%s525 + $0xf0] sm:$0xff]
        %v2727 = vld [vmem:[%s525 + $0xf8] sm:$0xff]
        %v2728 = vld [vmem:[%s525 + $0x100] sm:$0xff]
        %v2729 = vld [vmem:[%s525 + $0x108] sm:$0xff]
        %v2730 = vld [vmem:[%s525 + $0x110] sm:$0xff]
        %v2731 = vld [vmem:[%s525 + $0x118] sm:$0xff]
        %v2732 = vld [vmem:[%s525 + $0x120] sm:$0xff]
        %v2733 = vld [vmem:[%s525 + $0x128] sm:$0xff]
        %v2734 = vld [vmem:[%s525 + $0x130] sm:$0xff]
        %v2735 = vld [vmem:[%s525 + $0x138] sm:$0xff]
        %v2736 = vld [vmem:[%s525 + $0x140] sm:$0xff]
        %v2737 = vld [vmem:[%s525 + $0x148] sm:$0xff]
        %v2738 = vld [vmem:[%s525 + $0x150] sm:$0xff]
        %v2739 = vld [vmem:[%s525 + $0x158] sm:$0xff]
        %v2740 = vld [vmem:[%s525 + $0x160] sm:$0xff]
        %v2741 = vld [vmem:[%s525 + $0x168] sm:$0xff]
        %v2742 = vld [vmem:[%s525 + $0x170] sm:$0xff]
        %v2743 = vld [vmem:[%s525 + $0x178] sm:$0xff]
        %v2744 = vld [vmem:[%s525 + $0x180] sm:$0xff]
        %v2745 = vld [vmem:[%s525 + $0x188] sm:$0xff]
        %v2746 = vld [vmem:[%s525 + $0x190] sm:$0xff]
        %v2747 = vld [vmem:[%s525 + $0x198] sm:$0xff]
        %v2748 = vld [vmem:[%s525 + $0x1a0] sm:$0xff]
        %v2749 = vld [vmem:[%s525 + $0x1a8] sm:$0xff]
        %v2750 = vld [vmem:[%s525 + $0x1b0] sm:$0xff]
        %v2751 = vld [vmem:[%s525 + $0x1b8] sm:$0xff]
        %v2752 = vld [vmem:[%s525 + $0x1c0] sm:$0xff]
        %v2753 = vld [vmem:[%s525 + $0x1c8] sm:$0xff]
        %v2754 = vld [vmem:[%s525 + $0x1d0] sm:$0xff]
        %v2755 = vld [vmem:[%s525 + $0x1d8] sm:$0xff]
        %v2756 = vld [vmem:[%s525 + $0x1e0] sm:$0xff]
        %v2757 = vld [vmem:[%s525 + $0x1e8] sm:$0xff]
        %v2758 = vld [vmem:[%s525 + $0x1f0] sm:$0xff]
        %v2759 = vld [vmem:[%s525 + $0x1f8] sm:$0xff]
        %v2824 = vunpack.c.l.b16 %v2696
        %v2825 = vunpack.c.h.b16 %v2696
        %v2826 = vunpack.c.l.b16 %v2697
        %v2827 = vunpack.c.h.b16 %v2697
        %v2828 = vunpack.c.l.b16 %v2698
        %v2829 = vunpack.c.h.b16 %v2698
        %v2830 = vunpack.c.l.b16 %v2699
        %v2831 = vunpack.c.h.b16 %v2699
        %v2832 = vunpack.c.l.b16 %v2700
        %v2833 = vunpack.c.h.b16 %v2700
        %v2834 = vunpack.c.l.b16 %v2701
        %v2835 = vunpack.c.h.b16 %v2701
        %v2836 = vunpack.c.l.b16 %v2702
        %v2837 = vunpack.c.h.b16 %v2702
        %v2838 = vunpack.c.l.b16 %v2703
        %v2839 = vunpack.c.h.b16 %v2703
        %v2840 = vunpack.c.l.b16 %v2704
        %v2841 = vunpack.c.h.b16 %v2704
        %v2842 = vunpack.c.l.b16 %v2705
        %v2843 = vunpack.c.h.b16 %v2705
        %v2844 = vunpack.c.l.b16 %v2706
        %v2845 = vunpack.c.h.b16 %v2706
        %v2846 = vunpack.c.l.b16 %v2707
        %v2847 = vunpack.c.h.b16 %v2707
        %v2848 = vunpack.c.l.b16 %v2708
        %v2849 = vunpack.c.h.b16 %v2708
        %v2850 = vunpack.c.l.b16 %v2709
        %v2851 = vunpack.c.h.b16 %v2709
        %v2852 = vunpack.c.l.b16 %v2710
        %v2853 = vunpack.c.h.b16 %v2710
        %v2854 = vunpack.c.l.b16 %v2711
        %v2855 = vunpack.c.h.b16 %v2711
        %v2856 = vunpack.c.l.b16 %v2712
        %v2857 = vunpack.c.h.b16 %v2712
        %v2858 = vunpack.c.l.b16 %v2713
        %v2859 = vunpack.c.h.b16 %v2713
        %v2860 = vunpack.c.l.b16 %v2714
        %v2861 = vunpack.c.h.b16 %v2714
        %v2862 = vunpack.c.l.b16 %v2715
        %v2863 = vunpack.c.h.b16 %v2715
        %v2864 = vunpack.c.l.b16 %v2716
        %v2865 = vunpack.c.h.b16 %v2716
        %v2866 = vunpack.c.l.b16 %v2717
        %v2867 = vunpack.c.h.b16 %v2717
        %v2868 = vunpack.c.l.b16 %v2718
        %v2869 = vunpack.c.h.b16 %v2718
        %v2870 = vunpack.c.l.b16 %v2719
        %v2871 = vunpack.c.h.b16 %v2719
        %v2872 = vunpack.c.l.b16 %v2720
        %v2873 = vunpack.c.h.b16 %v2720
        %v2874 = vunpack.c.l.b16 %v2721
        %v2875 = vunpack.c.h.b16 %v2721
        %v2876 = vunpack.c.l.b16 %v2722
        %v2877 = vunpack.c.h.b16 %v2722
        %v2878 = vunpack.c.l.b16 %v2723
        %v2879 = vunpack.c.h.b16 %v2723
        %v2880 = vunpack.c.l.b16 %v2724
        %v2881 = vunpack.c.h.b16 %v2724
        %v2882 = vunpack.c.l.b16 %v2725
        %v2883 = vunpack.c.h.b16 %v2725
        %v2884 = vunpack.c.l.b16 %v2726
        %v2885 = vunpack.c.h.b16 %v2726
        %v2886 = vunpack.c.l.b16 %v2727
        %v2887 = vunpack.c.h.b16 %v2727
        %v2888 = vunpack.c.l.b16 %v2728
        %v2889 = vunpack.c.h.b16 %v2728
        %v2890 = vunpack.c.l.b16 %v2729
        %v2891 = vunpack.c.h.b16 %v2729
        %v2892 = vunpack.c.l.b16 %v2730
        %v2893 = vunpack.c.h.b16 %v2730
        %v2894 = vunpack.c.l.b16 %v2731
        %v2895 = vunpack.c.h.b16 %v2731
        %v2896 = vunpack.c.l.b16 %v2732
        %v2897 = vunpack.c.h.b16 %v2732
        %v2898 = vunpack.c.l.b16 %v2733
        %v2899 = vunpack.c.h.b16 %v2733
        %v2900 = vunpack.c.l.b16 %v2734
        %v2901 = vunpack.c.h.b16 %v2734
        %v2902 = vunpack.c.l.b16 %v2735
        %v2903 = vunpack.c.h.b16 %v2735
        %v2904 = vunpack.c.l.b16 %v2736
        %v2905 = vunpack.c.h.b16 %v2736
        %v2906 = vunpack.c.l.b16 %v2737
        %v2907 = vunpack.c.h.b16 %v2737
        %v2908 = vunpack.c.l.b16 %v2738
        %v2909 = vunpack.c.h.b16 %v2738
        %v2910 = vunpack.c.l.b16 %v2739
        %v2911 = vunpack.c.h.b16 %v2739
        %v2912 = vunpack.c.l.b16 %v2740
        %v2913 = vunpack.c.h.b16 %v2740
        %v2914 = vunpack.c.l.b16 %v2741
        %v2915 = vunpack.c.h.b16 %v2741
        %v2916 = vunpack.c.l.b16 %v2742
        %v2917 = vunpack.c.h.b16 %v2742
        %v2918 = vunpack.c.l.b16 %v2743
        %v2919 = vunpack.c.h.b16 %v2743
        %v2920 = vunpack.c.l.b16 %v2744
        %v2921 = vunpack.c.h.b16 %v2744
        %v2922 = vunpack.c.l.b16 %v2745
        %v2923 = vunpack.c.h.b16 %v2745
        %v2924 = vunpack.c.l.b16 %v2746
        %v2925 = vunpack.c.h.b16 %v2746
        %v2926 = vunpack.c.l.b16 %v2747
        %v2927 = vunpack.c.h.b16 %v2747
        %v2928 = vunpack.c.l.b16 %v2748
        %v2929 = vunpack.c.h.b16 %v2748
        %v2930 = vunpack.c.l.b16 %v2749
        %v2931 = vunpack.c.h.b16 %v2749
        %v2932 = vunpack.c.l.b16 %v2750
        %v2933 = vunpack.c.h.b16 %v2750
        %v2934 = vunpack.c.l.b16 %v2751
        %v2935 = vunpack.c.h.b16 %v2751
        %v2936 = vunpack.c.l.b16 %v2752
        %v2937 = vunpack.c.h.b16 %v2752
        %v2938 = vunpack.c.l.b16 %v2753
        %v2939 = vunpack.c.h.b16 %v2753
        %v2940 = vunpack.c.l.b16 %v2754
        %v2941 = vunpack.c.h.b16 %v2754
        %v2942 = vunpack.c.l.b16 %v2755
        %v2943 = vunpack.c.h.b16 %v2755
        %v2944 = vunpack.c.l.b16 %v2756
        %v2945 = vunpack.c.h.b16 %v2756
        %v2946 = vunpack.c.l.b16 %v2757
        %v2947 = vunpack.c.h.b16 %v2757
        %v2948 = vunpack.c.l.b16 %v2758
        %v2949 = vunpack.c.h.b16 %v2758
        %v2950 = vunpack.c.l.b16 %v2759
        %v2951 = vunpack.c.h.b16 %v2759
        %v2952 = vpack.c.b16 %v2826, %v2824
        %v2953 = vpack.c.b16 %v2827, %v2825
        %v2954 = vpack.c.b16 %v2830, %v2828
        %v2955 = vpack.c.b16 %v2831, %v2829
        %v2956 = vpack.c.b16 %v2834, %v2832
        %v2957 = vpack.c.b16 %v2835, %v2833
        %v2958 = vpack.c.b16 %v2838, %v2836
        %v2959 = vpack.c.b16 %v2839, %v2837
        %v2960 = vpack.c.b16 %v2842, %v2840
        %v2961 = vpack.c.b16 %v2843, %v2841
        %v2962 = vpack.c.b16 %v2846, %v2844
        %v2963 = vpack.c.b16 %v2847, %v2845
        %v2964 = vpack.c.b16 %v2850, %v2848
        %v2965 = vpack.c.b16 %v2851, %v2849
        %v2966 = vpack.c.b16 %v2854, %v2852
        %v2967 = vpack.c.b16 %v2855, %v2853
        %v2968 = vpack.c.b16 %v2858, %v2856
        %v2969 = vpack.c.b16 %v2859, %v2857
        %v2970 = vpack.c.b16 %v2862, %v2860
        %v2971 = vpack.c.b16 %v2863, %v2861
        %v2972 = vpack.c.b16 %v2866, %v2864
        %v2973 = vpack.c.b16 %v2867, %v2865
        %v2974 = vpack.c.b16 %v2870, %v2868
        %v2975 = vpack.c.b16 %v2871, %v2869
        %v2976 = vpack.c.b16 %v2874, %v2872
        %v2977 = vpack.c.b16 %v2875, %v2873
        %v2978 = vpack.c.b16 %v2878, %v2876
        %v2979 = vpack.c.b16 %v2879, %v2877
        %v2980 = vpack.c.b16 %v2882, %v2880
        %v2981 = vpack.c.b16 %v2883, %v2881
        %v2982 = vpack.c.b16 %v2886, %v2884
        %v2983 = vpack.c.b16 %v2887, %v2885
        %v2984 = vpack.c.b16 %v2890, %v2888
        %v2985 = vpack.c.b16 %v2891, %v2889
        %v2986 = vpack.c.b16 %v2894, %v2892
        %v2987 = vpack.c.b16 %v2895, %v2893
        %v2988 = vpack.c.b16 %v2898, %v2896
        %v2989 = vpack.c.b16 %v2899, %v2897
        %v2990 = vpack.c.b16 %v2902, %v2900
        %v2991 = vpack.c.b16 %v2903, %v2901
        %v2992 = vpack.c.b16 %v2906, %v2904
        %v2993 = vpack.c.b16 %v2907, %v2905
        %v2994 = vpack.c.b16 %v2910, %v2908
        %v2995 = vpack.c.b16 %v2911, %v2909
        %v2996 = vpack.c.b16 %v2914, %v2912
        %v2997 = vpack.c.b16 %v2915, %v2913
        %v2998 = vpack.c.b16 %v2918, %v2916
        %v2999 = vpack.c.b16 %v2919, %v2917
        %v3000 = vpack.c.b16 %v2922, %v2920
        %v3001 = vpack.c.b16 %v2923, %v2921
        %v3002 = vpack.c.b16 %v2926, %v2924
        %v3003 = vpack.c.b16 %v2927, %v2925
        %v3004 = vpack.c.b16 %v2930, %v2928
        %v3005 = vpack.c.b16 %v2931, %v2929
        %v3006 = vpack.c.b16 %v2934, %v2932
        %v3007 = vpack.c.b16 %v2935, %v2933
        %v3008 = vpack.c.b16 %v2938, %v2936
        %v3009 = vpack.c.b16 %v2939, %v2937
        %v3010 = vpack.c.b16 %v2942, %v2940
        %v3011 = vpack.c.b16 %v2943, %v2941
        %v3012 = vpack.c.b16 %v2946, %v2944
        %v3013 = vpack.c.b16 %v2947, %v2945
        %v3014 = vpack.c.b16 %v2950, %v2948
        %v3015 = vpack.c.b16 %v2951, %v2949
        %3080 = vmatprep.subr.bf16.mxu0 %v2953
        %3081 = vmatpush1.bf16.msra.mxu0 %v2952
        %3082 = vmatprep.subr.bf16.mxu0 %v2955
        %3083 = vmatpush1.bf16.msra.mxu0 %v2954
        %3084 = vmatprep.subr.bf16.mxu0 %v2957
        %3085 = vmatpush1.bf16.msra.mxu0 %v2956
        %3086 = vmatprep.subr.bf16.mxu0 %v2959
        %3087 = vmatpush1.bf16.msra.mxu0 %v2958
        %3088 = vmatprep.subr.bf16.mxu0 %v2961
        %3089 = vmatpush1.bf16.msra.mxu0 %v2960
        %3090 = vmatprep.subr.bf16.mxu0 %v2963
        %3091 = vmatpush1.bf16.msra.mxu0 %v2962
        %3092 = vmatprep.subr.bf16.mxu0 %v2965
        %3093 = vmatpush1.bf16.msra.mxu0 %v2964
        %3094 = vmatprep.subr.bf16.mxu0 %v2967
        %3095 = vmatpush1.bf16.msra.mxu0 %v2966
        %3096 = vmatprep.subr.bf16.mxu0 %v2969
        %3097 = vmatpush1.bf16.msra.mxu0 %v2968
        %3098 = vmatprep.subr.bf16.mxu0 %v2971
        %3099 = vmatpush1.bf16.msra.mxu0 %v2970
        %3100 = vmatprep.subr.bf16.mxu0 %v2973
        %3101 = vmatpush1.bf16.msra.mxu0 %v2972
        %3102 = vmatprep.subr.bf16.mxu0 %v2975
        %3103 = vmatpush1.bf16.msra.mxu0 %v2974
        %3104 = vmatprep.subr.bf16.mxu0 %v2977
        %3105 = vmatpush1.bf16.msra.mxu0 %v2976
        %3106 = vmatprep.subr.bf16.mxu0 %v2979
        %3107 = vmatpush1.bf16.msra.mxu0 %v2978
        %3108 = vmatprep.subr.bf16.mxu0 %v2981
        %3109 = vmatpush1.bf16.msra.mxu0 %v2980
        %3110 = vmatprep.subr.bf16.mxu0 %v2983
        %3111 = vmatpush1.bf16.msra.mxu0 %v2982
        %3112 = vmatprep.mubr.bf16.mxu0 %v2693
        %3113 = vmatmul.mubr.bf16.gmra.mrb[0].mxu0 %v2692
        %v3114 = vpop.f32.mrb[0].mxu0
        %v3115 = vadd.f32 0.0, %v3114
        %v3116 = vpop.f32.mrb[0].mxu0
        %v3117 = vadd.f32 0.0, %v3116
        %v3118 = vpop.f32.mrb[0].mxu0
        %v3119 = vadd.f32 0.0, %v3118
        %v3120 = vpop.f32.mrb[0].mxu0
        %v3121 = vadd.f32 0.0, %v3120
        %3122 = vdwg.mxu0
        %3123 = vmatprep.subr.bf16.mxu0 %v2985
        %3124 = vmatpush1.bf16.msra.mxu0 %v2984
        %3125 = vmatprep.subr.bf16.mxu0 %v2987
        %3126 = vmatpush1.bf16.msra.mxu0 %v2986
        %3127 = vmatprep.subr.bf16.mxu0 %v2989
        %3128 = vmatpush1.bf16.msra.mxu0 %v2988
        %3129 = vmatprep.subr.bf16.mxu0 %v2991
        %3130 = vmatpush1.bf16.msra.mxu0 %v2990
        %3131 = vmatprep.subr.bf16.mxu0 %v2993
        %3132 = vmatpush1.bf16.msra.mxu0 %v2992
        %3133 = vmatprep.subr.bf16.mxu0 %v2995
        %3134 = vmatpush1.bf16.msra.mxu0 %v2994
        %3135 = vmatprep.subr.bf16.mxu0 %v2997
        %3136 = vmatpush1.bf16.msra.mxu0 %v2996
        %3137 = vmatprep.subr.bf16.mxu0 %v2999
        %3138 = vmatpush1.bf16.msra.mxu0 %v2998
        %3139 = vmatprep.subr.bf16.mxu0 %v3001
        %3140 = vmatpush1.bf16.msra.mxu0 %v3000
        %3141 = vmatprep.subr.bf16.mxu0 %v3003
        %3142 = vmatpush1.bf16.msra.mxu0 %v3002
        %3143 = vmatprep.subr.bf16.mxu0 %v3005
        %3144 = vmatpush1.bf16.msra.mxu0 %v3004
        %3145 = vmatprep.subr.bf16.mxu0 %v3007
        %3146 = vmatpush1.bf16.msra.mxu0 %v3006
        %3147 = vmatprep.subr.bf16.mxu0 %v3009
        %3148 = vmatpush1.bf16.msra.mxu0 %v3008
        %3149 = vmatprep.subr.bf16.mxu0 %v3011
        %3150 = vmatpush1.bf16.msra.mxu0 %v3010
        %3151 = vmatprep.subr.bf16.mxu0 %v3013
        %3152 = vmatpush1.bf16.msra.mxu0 %v3012
        %3153 = vmatprep.subr.bf16.mxu0 %v3015
        %3154 = vmatpush1.bf16.msra.mxu0 %v3014
        %3155 = vmatprep.mubr.bf16.mxu0 %v2695
        %3156 = vmatmul.mubr.bf16.gmra.mrb[0].mxu0 %v2694
        %v3157 = vpop.f32.mrb[0].mxu0
        %v3158 = vadd.f32 %v3115, %v3157
        %v3159 = vpop.f32.mrb[0].mxu0
        %v3160 = vadd.f32 %v3117, %v3159
        %v3161 = vpop.f32.mrb[0].mxu0
        %v3162 = vadd.f32 %v3119, %v3161
        %v3163 = vpop.f32.mrb[0].mxu0
        %v3164 = vadd.f32 %v3121, %v3163
        %3165 = vdwg.mxu0
        %v3166 = vadd.f32 %v1640, %v3158
        %v3167 = vadd.f32 %v1641, %v3160
        %v3168 = vadd.f32 %v1642, %v3162
        %v3169 = vadd.f32 %v1643, %v3164
        %3170 = vst [vmem:[#allocation2] sm:$0xff] %v3166
        %3171 = vst [vmem:[#allocation2 + $0x8] sm:$0xff] %v3167
        %3172 = vst [vmem:[#allocation2 + $0x10] sm:$0xff] %v3168
        %3173 = vst [vmem:[#allocation2 + $0x18] sm:$0xff] %v3169
        %p3174 = scmp.eq.s32.totalorder %s36, 1
        // Predicated region
        $region97: #{tpu_custom_call.1} parent=59 // pred_check
          %p3175 = pneg %p3174
        $region98: #{tpu_custom_call.1} parent=59 // pred_check_branch
          %3177 = sbr.rel (%p3175) target = $region100
        $region99: #{tpu_custom_call.1} parent=59 // pred_region
          %v3178 = vld [vmem:[%s8] sm:$0x3]
          %v3179 = vmul.f32 %v3166, %v3166
          %v3180 = vmul.f32 %v3167, %v3167
          %v3181 = vmul.f32 %v3168, %v3168
          %v3182 = vmul.f32 %v3169, %v3169
          %v3183 = vadd.f32 %v3179, %v3180
          %3184 = vadd.xlane.f32.xlu0 %v3183
          %v3185 = vpop.xlane.xlu0 %3184
          %v3186 = vadd.f32 %v3181, %v3182
          %3187 = vadd.xlane.f32.xlu0 %v3186
          %v3188 = vpop.xlane.xlu0 %3187
          %v3189 = vmul.f32 %v3185, %v623
          %v3190 = vmul.f32 %v3188, %v623
          %v3191 = vadd.f32 %v3189, 1e-06
          %v3192 = vadd.f32 %v3190, 1e-06
          %v3193 = vrsqrt.pop %v3191
          %v3194 = vrsqrt.pop %v3192
          %v3195 = vmul.f32 %v3166, %v3193
          %v3196 = vmul.f32 %v3167, %v3193
          %v3197 = vmul.f32 %v3168, %v3194
          %v3198 = vmul.f32 %v3169, %v3194
          %v3200 = vlaneseq
          %v3201 = vshrl.u32 %v3200, 7
          %v3202 = vsub.s32 0, %v3201
          %v3203 = vrot.slane %v3178, %v3202
          %v3204 = vlaneseq
          %v3205 = vshrl.u32 %v3204, 7
          %v3206 = vsub.s32 1, %v3205
          %v3207 = vrot.slane %v3178, %v3206
          %v3210 = vmul.f32 %v3195, %v3203
          %v3211 = vmul.f32 %v3196, %v3207
          %v3212 = vmul.f32 %v3197, %v3203
          %v3213 = vmul.f32 %v3198, %v3207
          %v3214 = vpack.c.bf16 %v3212, %v3210
          %v3215 = vpack.c.bf16 %v3213, %v3211
          %v3216 = vld [vmem:[#allocation15] sm:$0xff]
          %v3217 = vld [vmem:[#allocation15 + $0x8] sm:$0xff]
          %v3218 = vld [vmem:[#allocation15 + $0x10] sm:$0xff]
          %v3219 = vld [vmem:[#allocation15 + $0x18] sm:$0xff]
          %v3220 = vld [vmem:[#allocation15 + $0x20] sm:$0xff]
          %v3221 = vld [vmem:[#allocation15 + $0x28] sm:$0xff]
          %v3222 = vld [vmem:[#allocation15 + $0x30] sm:$0xff]
          %v3223 = vld [vmem:[#allocation15 + $0x38] sm:$0xff]
          %v3224 = vld [vmem:[#allocation15 + $0x40] sm:$0xff]
          %v3225 = vld [vmem:[#allocation15 + $0x48] sm:$0xff]
          %v3226 = vld [vmem:[#allocation15 + $0x50] sm:$0xff]
          %v3227 = vld [vmem:[#allocation15 + $0x58] sm:$0xff]
          %v3228 = vld [vmem:[#allocation15 + $0x60] sm:$0xff]
          %v3229 = vld [vmem:[#allocation15 + $0x68] sm:$0xff]
          %v3230 = vld [vmem:[#allocation15 + $0x70] sm:$0xff]
          %v3231 = vld [vmem:[#allocation15 + $0x78] sm:$0xff]
          %v3232 = vld [vmem:[#allocation15 + $0x80] sm:$0xff]
          %v3233 = vld [vmem:[#allocation15 + $0x88] sm:$0xff]
          %v3234 = vld [vmem:[#allocation15 + $0x90] sm:$0xff]
          %v3235 = vld [vmem:[#allocation15 + $0x98] sm:$0xff]
          %v3236 = vld [vmem:[#allocation15 + $0xa0] sm:$0xff]
          %v3237 = vld [vmem:[#allocation15 + $0xa8] sm:$0xff]
          %v3238 = vld [vmem:[#allocation15 + $0xb0] sm:$0xff]
          %v3239 = vld [vmem:[#allocation15 + $0xb8] sm:$0xff]
          %v3240 = vld [vmem:[#allocation15 + $0xc0] sm:$0xff]
          %v3241 = vld [vmem:[#allocation15 + $0xc8] sm:$0xff]
          %v3242 = vld [vmem:[#allocation15 + $0xd0] sm:$0xff]
          %v3243 = vld [vmem:[#allocation15 + $0xd8] sm:$0xff]
          %v3244 = vld [vmem:[#allocation15 + $0xe0] sm:$0xff]
          %v3245 = vld [vmem:[#allocation15 + $0xe8] sm:$0xff]
          %v3246 = vld [vmem:[#allocation15 + $0xf0] sm:$0xff]
          %v3247 = vld [vmem:[#allocation15 + $0xf8] sm:$0xff]
          %v3248 = vld [vmem:[#allocation15 + $0x100] sm:$0xff]
          %v3249 = vld [vmem:[#allocation15 + $0x108] sm:$0xff]
          %v3250 = vld [vmem:[#allocation15 + $0x110] sm:$0xff]
          %v3251 = vld [vmem:[#allocation15 + $0x118] sm:$0xff]
          %v3252 = vld [vmem:[#allocation15 + $0x120] sm:$0xff]
          %v3253 = vld [vmem:[#allocation15 + $0x128] sm:$0xff]
          %v3254 = vld [vmem:[#allocation15 + $0x130] sm:$0xff]
          %v3255 = vld [vmem:[#allocation15 + $0x138] sm:$0xff]
          %v3256 = vld [vmem:[#allocation15 + $0x140] sm:$0xff]
          %v3257 = vld [vmem:[#allocation15 + $0x148] sm:$0xff]
          %v3258 = vld [vmem:[#allocation15 + $0x150] sm:$0xff]
          %v3259 = vld [vmem:[#allocation15 + $0x158] sm:$0xff]
          %v3260 = vld [vmem:[#allocation15 + $0x160] sm:$0xff]
          %v3261 = vld [vmem:[#allocation15 + $0x168] sm:$0xff]
          %v3262 = vld [vmem:[#allocation15 + $0x170] sm:$0xff]
          %v3263 = vld [vmem:[#allocation15 + $0x178] sm:$0xff]
          %v3264 = vld [vmem:[#allocation15 + $0x180] sm:$0xff]
          %v3265 = vld [vmem:[#allocation15 + $0x188] sm:$0xff]
          %v3266 = vld [vmem:[#allocation15 + $0x190] sm:$0xff]
          %v3267 = vld [vmem:[#allocation15 + $0x198] sm:$0xff]
          %v3268 = vld [vmem:[#allocation15 + $0x1a0] sm:$0xff]
          %v3269 = vld [vmem:[#allocation15 + $0x1a8] sm:$0xff]
          %v3270 = vld [vmem:[#allocation15 + $0x1b0] sm:$0xff]
          %v3271 = vld [vmem:[#allocation15 + $0x1b8] sm:$0xff]
          %v3272 = vld [vmem:[#allocation15 + $0x1c0] sm:$0xff]
          %v3273 = vld [vmem:[#allocation15 + $0x1c8] sm:$0xff]
          %v3274 = vld [vmem:[#allocation15 + $0x1d0] sm:$0xff]
          %v3275 = vld [vmem:[#allocation15 + $0x1d8] sm:$0xff]
          %v3276 = vld [vmem:[#allocation15 + $0x1e0] sm:$0xff]
          %v3277 = vld [vmem:[#allocation15 + $0x1e8] sm:$0xff]
          %v3278 = vld [vmem:[#allocation15 + $0x1f0] sm:$0xff]
          %v3279 = vld [vmem:[#allocation15 + $0x1f8] sm:$0xff]
          %v3344 = vunpack.c.l.b16 %v3216
          %v3345 = vunpack.c.h.b16 %v3216
          %v3346 = vunpack.c.l.b16 %v3217
          %v3347 = vunpack.c.h.b16 %v3217
          %v3348 = vunpack.c.l.b16 %v3218
          %v3349 = vunpack.c.h.b16 %v3218
          %v3350 = vunpack.c.l.b16 %v3219
          %v3351 = vunpack.c.h.b16 %v3219
          %v3352 = vunpack.c.l.b16 %v3220
          %v3353 = vunpack.c.h.b16 %v3220
          %v3354 = vunpack.c.l.b16 %v3221
          %v3355 = vunpack.c.h.b16 %v3221
          %v3356 = vunpack.c.l.b16 %v3222
          %v3357 = vunpack.c.h.b16 %v3222
          %v3358 = vunpack.c.l.b16 %v3223
          %v3359 = vunpack.c.h.b16 %v3223
          %v3360 = vunpack.c.l.b16 %v3224
          %v3361 = vunpack.c.h.b16 %v3224
          %v3362 = vunpack.c.l.b16 %v3225
          %v3363 = vunpack.c.h.b16 %v3225
          %v3364 = vunpack.c.l.b16 %v3226
          %v3365 = vunpack.c.h.b16 %v3226
          %v3366 = vunpack.c.l.b16 %v3227
          %v3367 = vunpack.c.h.b16 %v3227
          %v3368 = vunpack.c.l.b16 %v3228
          %v3369 = vunpack.c.h.b16 %v3228
          %v3370 = vunpack.c.l.b16 %v3229
          %v3371 = vunpack.c.h.b16 %v3229
          %v3372 = vunpack.c.l.b16 %v3230
          %v3373 = vunpack.c.h.b16 %v3230
          %v3374 = vunpack.c.l.b16 %v3231
          %v3375 = vunpack.c.h.b16 %v3231
          %v3376 = vunpack.c.l.b16 %v3232
          %v3377 = vunpack.c.h.b16 %v3232
          %v3378 = vunpack.c.l.b16 %v3233
          %v3379 = vunpack.c.h.b16 %v3233
          %v3380 = vunpack.c.l.b16 %v3234
          %v3381 = vunpack.c.h.b16 %v3234
          %v3382 = vunpack.c.l.b16 %v3235
          %v3383 = vunpack.c.h.b16 %v3235
          %v3384 = vunpack.c.l.b16 %v3236
          %v3385 = vunpack.c.h.b16 %v3236
          %v3386 = vunpack.c.l.b16 %v3237
          %v3387 = vunpack.c.h.b16 %v3237
          %v3388 = vunpack.c.l.b16 %v3238
          %v3389 = vunpack.c.h.b16 %v3238
          %v3390 = vunpack.c.l.b16 %v3239
          %v3391 = vunpack.c.h.b16 %v3239
          %v3392 = vunpack.c.l.b16 %v3240
          %v3393 = vunpack.c.h.b16 %v3240
          %v3394 = vunpack.c.l.b16 %v3241
          %v3395 = vunpack.c.h.b16 %v3241
          %v3396 = vunpack.c.l.b16 %v3242
          %v3397 = vunpack.c.h.b16 %v3242
          %v3398 = vunpack.c.l.b16 %v3243
          %v3399 = vunpack.c.h.b16 %v3243
          %v3400 = vunpack.c.l.b16 %v3244
          %v3401 = vunpack.c.h.b16 %v3244
          %v3402 = vunpack.c.l.b16 %v3245
          %v3403 = vunpack.c.h.b16 %v3245
          %v3404 = vunpack.c.l.b16 %v3246
          %v3405 = vunpack.c.h.b16 %v3246
          %v3406 = vunpack.c.l.b16 %v3247
          %v3407 = vunpack.c.h.b16 %v3247
          %v3408 = vunpack.c.l.b16 %v3248
          %v3409 = vunpack.c.h.b16 %v3248
          %v3410 = vunpack.c.l.b16 %v3249
          %v3411 = vunpack.c.h.b16 %v3249
          %v3412 = vunpack.c.l.b16 %v3250
          %v3413 = vunpack.c.h.b16 %v3250
          %v3414 = vunpack.c.l.b16 %v3251
          %v3415 = vunpack.c.h.b16 %v3251
          %v3416 = vunpack.c.l.b16 %v3252
          %v3417 = vunpack.c.h.b16 %v3252
          %v3418 = vunpack.c.l.b16 %v3253
          %v3419 = vunpack.c.h.b16 %v3253
          %v3420 = vunpack.c.l.b16 %v3254
          %v3421 = vunpack.c.h.b16 %v3254
          %v3422 = vunpack.c.l.b16 %v3255
          %v3423 = vunpack.c.h.b16 %v3255
          %v3424 = vunpack.c.l.b16 %v3256
          %v3425 = vunpack.c.h.b16 %v3256
          %v3426 = vunpack.c.l.b16 %v3257
          %v3427 = vunpack.c.h.b16 %v3257
          %v3428 = vunpack.c.l.b16 %v3258
          %v3429 = vunpack.c.h.b16 %v3258
          %v3430 = vunpack.c.l.b16 %v3259
          %v3431 = vunpack.c.h.b16 %v3259
          %v3432 = vunpack.c.l.b16 %v3260
          %v3433 = vunpack.c.h.b16 %v3260
          %v3434 = vunpack.c.l.b16 %v3261
          %v3435 = vunpack.c.h.b16 %v3261
          %v3436 = vunpack.c.l.b16 %v3262
          %v3437 = vunpack.c.h.b16 %v3262
          %v3438 = vunpack.c.l.b16 %v3263
          %v3439 = vunpack.c.h.b16 %v3263
          %v3440 = vunpack.c.l.b16 %v3264
          %v3441 = vunpack.c.h.b16 %v3264
          %v3442 = vunpack.c.l.b16 %v3265
          %v3443 = vunpack.c.h.b16 %v3265
          %v3444 = vunpack.c.l.b16 %v3266
          %v3445 = vunpack.c.h.b16 %v3266
          %v3446 = vunpack.c.l.b16 %v3267
          %v3447 = vunpack.c.h.b16 %v3267
          %v3448 = vunpack.c.l.b16 %v3268
          %v3449 = vunpack.c.h.b16 %v3268
          %v3450 = vunpack.c.l.b16 %v3269
          %v3451 = vunpack.c.h.b16 %v3269
          %v3452 = vunpack.c.l.b16 %v3270
          %v3453 = vunpack.c.h.b16 %v3270
          %v3454 = vunpack.c.l.b16 %v3271
          %v3455 = vunpack.c.h.b16 %v3271
          %v3456 = vunpack.c.l.b16 %v3272
          %v3457 = vunpack.c.h.b16 %v3272
          %v3458 = vunpack.c.l.b16 %v3273
          %v3459 = vunpack.c.h.b16 %v3273
          %v3460 = vunpack.c.l.b16 %v3274
          %v3461 = vunpack.c.h.b16 %v3274
          %v3462 = vunpack.c.l.b16 %v3275
          %v3463 = vunpack.c.h.b16 %v3275
          %v3464 = vunpack.c.l.b16 %v3276
          %v3465 = vunpack.c.h.b16 %v3276
          %v3466 = vunpack.c.l.b16 %v3277
          %v3467 = vunpack.c.h.b16 %v3277
          %v3468 = vunpack.c.l.b16 %v3278
          %v3469 = vunpack.c.h.b16 %v3278
          %v3470 = vunpack.c.l.b16 %v3279
          %v3471 = vunpack.c.h.b16 %v3279
          %v3472 = vpack.c.b16 %v3348, %v3344
          %v3473 = vpack.c.b16 %v3349, %v3345
          %v3474 = vpack.c.b16 %v3350, %v3346
          %v3475 = vpack.c.b16 %v3351, %v3347
          %v3476 = vpack.c.b16 %v3356, %v3352
          %v3477 = vpack.c.b16 %v3357, %v3353
          %v3478 = vpack.c.b16 %v3358, %v3354
          %v3479 = vpack.c.b16 %v3359, %v3355
          %v3480 = vpack.c.b16 %v3364, %v3360
          %v3481 = vpack.c.b16 %v3365, %v3361
          %v3482 = vpack.c.b16 %v3366, %v3362
          %v3483 = vpack.c.b16 %v3367, %v3363
          %v3484 = vpack.c.b16 %v3372, %v3368
          %v3485 = vpack.c.b16 %v3373, %v3369
          %v3486 = vpack.c.b16 %v3374, %v3370
          %v3487 = vpack.c.b16 %v3375, %v3371
          %v3488 = vpack.c.b16 %v3380, %v3376
          %v3489 = vpack.c.b16 %v3381, %v3377
          %v3490 = vpack.c.b16 %v3382, %v3378
          %v3491 = vpack.c.b16 %v3383, %v3379
          %v3492 = vpack.c.b16 %v3388, %v3384
          %v3493 = vpack.c.b16 %v3389, %v3385
          %v3494 = vpack.c.b16 %v3390, %v3386
          %v3495 = vpack.c.b16 %v3391, %v3387
          %v3496 = vpack.c.b16 %v3396, %v3392
          %v3497 = vpack.c.b16 %v3397, %v3393
          %v3498 = vpack.c.b16 %v3398, %v3394
          %v3499 = vpack.c.b16 %v3399, %v3395
          %v3500 = vpack.c.b16 %v3404, %v3400
          %v3501 = vpack.c.b16 %v3405, %v3401
          %v3502 = vpack.c.b16 %v3406, %v3402
          %v3503 = vpack.c.b16 %v3407, %v3403
          %v3504 = vpack.c.b16 %v3412, %v3408
          %v3505 = vpack.c.b16 %v3413, %v3409
          %v3506 = vpack.c.b16 %v3414, %v3410
          %v3507 = vpack.c.b16 %v3415, %v3411
          %v3508 = vpack.c.b16 %v3420, %v3416
          %v3509 = vpack.c.b16 %v3421, %v3417
          %v3510 = vpack.c.b16 %v3422, %v3418
          %v3511 = vpack.c.b16 %v3423, %v3419
          %v3512 = vpack.c.b16 %v3428, %v3424
          %v3513 = vpack.c.b16 %v3429, %v3425
          %v3514 = vpack.c.b16 %v3430, %v3426
          %v3515 = vpack.c.b16 %v3431, %v3427
          %v3516 = vpack.c.b16 %v3436, %v3432
          %v3517 = vpack.c.b16 %v3437, %v3433
          %v3518 = vpack.c.b16 %v3438, %v3434
          %v3519 = vpack.c.b16 %v3439, %v3435
          %v3520 = vpack.c.b16 %v3444, %v3440
          %v3521 = vpack.c.b16 %v3445, %v3441
          %v3522 = vpack.c.b16 %v3446, %v3442
          %v3523 = vpack.c.b16 %v3447, %v3443
          %v3524 = vpack.c.b16 %v3452, %v3448
          %v3525 = vpack.c.b16 %v3453, %v3449
          %v3526 = vpack.c.b16 %v3454, %v3450
          %v3527 = vpack.c.b16 %v3455, %v3451
          %v3528 = vpack.c.b16 %v3460, %v3456
          %v3529 = vpack.c.b16 %v3461, %v3457
          %v3530 = vpack.c.b16 %v3462, %v3458
          %v3531 = vpack.c.b16 %v3463, %v3459
          %v3532 = vpack.c.b16 %v3468, %v3464
          %v3533 = vpack.c.b16 %v3469, %v3465
          %v3534 = vpack.c.b16 %v3470, %v3466
          %v3535 = vpack.c.b16 %v3471, %v3467
          %3600 = vmatprep.subr.bf16.mxu0 %v3473
          %3601 = vmatpush1.bf16.msra.mxu0 %v3472
          %3602 = vmatprep.subr.bf16.mxu0 %v3477
          %3603 = vmatpush1.bf16.msra.mxu0 %v3476
          %3604 = vmatprep.subr.bf16.mxu0 %v3481
          %3605 = vmatpush1.bf16.msra.mxu0 %v3480
          %3606 = vmatprep.subr.bf16.mxu0 %v3485
          %3607 = vmatpush1.bf16.msra.mxu0 %v3484
          %3608 = vmatprep.subr.bf16.mxu0 %v3489
          %3609 = vmatpush1.bf16.msra.mxu0 %v3488
          %3610 = vmatprep.subr.bf16.mxu0 %v3493
          %3611 = vmatpush1.bf16.msra.mxu0 %v3492
          %3612 = vmatprep.subr.bf16.mxu0 %v3497
          %3613 = vmatpush1.bf16.msra.mxu0 %v3496
          %3614 = vmatprep.subr.bf16.mxu0 %v3501
          %3615 = vmatpush1.bf16.msra.mxu0 %v3500
          %3616 = vmatprep.subr.bf16.mxu0 %v3505
          %3617 = vmatpush1.bf16.msra.mxu0 %v3504
          %3618 = vmatprep.subr.bf16.mxu0 %v3509
          %3619 = vmatpush1.bf16.msra.mxu0 %v3508
          %3620 = vmatprep.subr.bf16.mxu0 %v3513
          %3621 = vmatpush1.bf16.msra.mxu0 %v3512
          %3622 = vmatprep.subr.bf16.mxu0 %v3517
          %3623 = vmatpush1.bf16.msra.mxu0 %v3516
          %3624 = vmatprep.subr.bf16.mxu0 %v3521
          %3625 = vmatpush1.bf16.msra.mxu0 %v3520
          %3626 = vmatprep.subr.bf16.mxu0 %v3525
          %3627 = vmatpush1.bf16.msra.mxu0 %v3524
          %3628 = vmatprep.subr.bf16.mxu0 %v3529
          %3629 = vmatpush1.bf16.msra.mxu0 %v3528
          %3630 = vmatprep.subr.bf16.mxu0 %v3533
          %3631 = vmatpush1.bf16.msra.mxu0 %v3532
          %3632 = vmatprep.mubr.bf16.mxu0 %v3215
          %3633 = vmatmul.mubr.bf16.gmra.mrb[0].mxu0 %v3214
          %v3634 = vpop.f32.mrb[0].mxu0
          %v3635 = vadd.f32 0.0, %v3634
          %v3636 = vpop.f32.mrb[0].mxu0
          %v3637 = vadd.f32 0.0, %v3636
          %v3638 = vpop.f32.mrb[0].mxu0
          %v3639 = vadd.f32 0.0, %v3638
          %v3640 = vpop.f32.mrb[0].mxu0
          %v3641 = vadd.f32 0.0, %v3640
          %3642 = vdwg.mxu0
          %3643 = vmatprep.subr.bf16.mxu0 %v3475
          %3644 = vmatpush1.bf16.msra.mxu0 %v3474
          %3645 = vmatprep.subr.bf16.mxu0 %v3479
          %3646 = vmatpush1.bf16.msra.mxu0 %v3478
          %3647 = vmatprep.subr.bf16.mxu0 %v3483
          %3648 = vmatpush1.bf16.msra.mxu0 %v3482
          %3649 = vmatprep.subr.bf16.mxu0 %v3487
          %3650 = vmatpush1.bf16.msra.mxu0 %v3486
          %3651 = vmatprep.subr.bf16.mxu0 %v3491
          %3652 = vmatpush1.bf16.msra.mxu0 %v3490
          %3653 = vmatprep.subr.bf16.mxu0 %v3495
          %3654 = vmatpush1.bf16.msra.mxu0 %v3494
          %3655 = vmatprep.subr.bf16.mxu0 %v3499
          %3656 = vmatpush1.bf16.msra.mxu0 %v3498
          %3657 = vmatprep.subr.bf16.mxu0 %v3503
          %3658 = vmatpush1.bf16.msra.mxu0 %v3502
          %3659 = vmatprep.subr.bf16.mxu0 %v3507
          %3660 = vmatpush1.bf16.msra.mxu0 %v3506
          %3661 = vmatprep.subr.bf16.mxu0 %v3511
          %3662 = vmatpush1.bf16.msra.mxu0 %v3510
          %3663 = vmatprep.subr.bf16.mxu0 %v3515
          %3664 = vmatpush1.bf16.msra.mxu0 %v3514
          %3665 = vmatprep.subr.bf16.mxu0 %v3519
          %3666 = vmatpush1.bf16.msra.mxu0 %v3518
          %3667 = vmatprep.subr.bf16.mxu0 %v3523
          %3668 = vmatpush1.bf16.msra.mxu0 %v3522
          %3669 = vmatprep.subr.bf16.mxu0 %v3527
          %3670 = vmatpush1.bf16.msra.mxu0 %v3526
          %3671 = vmatprep.subr.bf16.mxu0 %v3531
          %3672 = vmatpush1.bf16.msra.mxu0 %v3530
          %3673 = vmatprep.subr.bf16.mxu0 %v3535
          %3674 = vmatpush1.bf16.msra.mxu0 %v3534
          %3675 = vmatprep.mubr.bf16.mxu0 %v3215
          %3676 = vmatmul.mubr.bf16.gmra.mrb[0].mxu0 %v3214
          %v3677 = vpop.f32.mrb[0].mxu0
          %v3678 = vadd.f32 0.0, %v3677
          %v3679 = vpop.f32.mrb[0].mxu0
          %v3680 = vadd.f32 0.0, %v3679
          %v3681 = vpop.f32.mrb[0].mxu0
          %v3682 = vadd.f32 0.0, %v3681
          %v3683 = vpop.f32.mrb[0].mxu0
          %v3684 = vadd.f32 0.0, %v3683
          %3685 = vdwg.mxu0
          %3686 = vst [vmem:[#allocation17] sm:$0xff] %v3635
          %3687 = vst [vmem:[#allocation17 + $0x8] sm:$0xff] %v3637
          %3688 = vst [vmem:[#allocation17 + $0x10] sm:$0xff] %v3678
          %3689 = vst [vmem:[#allocation17 + $0x18] sm:$0xff] %v3680
          %3690 = vst [vmem:[#allocation17 + $0x20] sm:$0xff] %v3639
          %3691 = vst [vmem:[#allocation17 + $0x28] sm:$0xff] %v3641
          %3692 = vst [vmem:[#allocation17 + $0x30] sm:$0xff] %v3682
          %3693 = vst [vmem:[#allocation17 + $0x38] sm:$0xff] %v3684
        $region100: #{tpu_custom_call.1} parent=59 // pred_fallthru
          _
        %s3694 = sand.u32 %s300, 1
        %s3695 = scalar_lea.sflag [#allocation19], %s3694
        %s3696 = sand.u32 %s300, 1
        %s3697 = smul.addr %s3696, 32
        %s3698 = scalar_lea.vmem [#allocation18], %s3697
        // Predicated region
        $region101: #{tpu_custom_call.1} parent=59 // pred_check
          %p3699 = pneg %p284
        $region102: #{tpu_custom_call.1} parent=59 // pred_check_branch
          %3701 = sbr.rel (%p3699) target = $region104
        $region103: #{tpu_custom_call.1} parent=59 // pred_region
          %s3703 = ssub.s32 1024, 1024
          %3704 = vsyncadd [#allocation5], %s3703
          %s3705 = sshll.u32 [#allocation17], 4
          %s3706 = int_to_ptr.vmem [resolvable:$true] %s3705
          %3711 = dma.vmem_to_hbm [thread:$0]  %s3706, 1024, %s10, [#allocation5], 512, 512, 32
        $region104: #{tpu_custom_call.1} parent=59 // pred_fallthru
          _
        // Predicated region
        $region105: #{tpu_custom_call.1} parent=59 // pred_check
          %p3712 = pneg %p310
        $region106: #{tpu_custom_call.1} parent=59 // pred_check_branch
          %3714 = sbr.rel (%p3712) target = $region108
        $region107: #{tpu_custom_call.1} parent=59 // pred_region
          %s3716 = ssub.s32 512, 512
          %3717 = vsyncadd %s3695, %s3716
          %s3718 = smul.addr %s36, 4
          %s3719 = smul.addr %s3718, 128
          %s3720 = scalar_lea.hbm %s11, %s3719
          %s3721 = sshll.u32 %s3698, 4
          %s3722 = int_to_ptr.vmem [resolvable:$true] %s3721
          %3727 = dma.vmem_to_hbm [thread:$0]  %s3722, 512, %s3720, %s3695, 256, 256, 16
        $region108: #{tpu_custom_call.1} parent=59 // pred_fallthru
          _
        // Predicated region
        $region109: #{tpu_custom_call.1} parent=59 // pred_check
          %p3728 = pneg %p284
        $region110: #{tpu_custom_call.1} parent=59 // pred_check_branch
          %3730 = sbr.rel (%p3728) target = $region112
        $region111: #{tpu_custom_call.1} parent=59 // pred_region
          %3731 = dma.done [#allocation5], 1024
        $region112: #{tpu_custom_call.1} parent=59 // pred_fallthru
          _
      $region60: #{tpu_custom_call.1} parent=5 // pred_fallthru
        _
      %p3732 = scmp.le.s32.totalorder 2, %s31
      // Predicated region
      $region113: #{tpu_custom_call.1} parent=5 // pred_check
        %p3733 = pneg %p3732
      $region114: #{tpu_custom_call.1} parent=5 // pred_check_branch
        %3735 = sbr.rel (%p3733) target = $region116
      $region115: #{tpu_custom_call.1} parent=5 // pred_region
        %s3736 = ssub.s32 %s31, 2
        // Predicated region
        $region117: #{tpu_custom_call.1} parent=115 // pred_check
          %p3737 = pneg %p316
        $region118: #{tpu_custom_call.1} parent=115 // pred_check_branch
          %3739 = sbr.rel (%p3737) target = $region120
        $region119: #{tpu_custom_call.1} parent=115 // pred_region
          %s3740 = sand.u32 %s301, 1
          %s3741 = scalar_lea.sflag [#allocation19], %s3740
          %s3742 = sand.u32 %s301, 1
          %s3743 = smul.addr %s3742, 32
          %s3744 = scalar_lea.vmem [#allocation18], %s3743
          %3745 = dma.done %s3741, 512
        $region120: #{tpu_custom_call.1} parent=115 // pred_fallthru
          _
      $region116: #{tpu_custom_call.1} parent=5 // pred_fallthru
        _
    $region6: #{tpu_custom_call.1} parent=1 // loop_footer
      %s35 = sadd.s32 1, %s31
    $region7: #{tpu_custom_call.1} parent=1 // loop_footer_branch
      %30 = sbr.rel target = $region3
    $region8: #{tpu_custom_call.1} parent=1 // loop_exit
      _
    %3746 = vsyncpa [#allocation4], 1
    %s3747 = scalar_lea.sflag [#allocation4], 1
    %3748 = vsyncpa %s3747, 1
    %3749 = vsyncpa [#allocation7], 1
    %3750 = vsyncpa [#allocation10], 1
    %s3751 = scalar_lea.sflag [#allocation10], 1
    %3752 = vsyncpa %s3751, 1
    %3753 = vsyncpa [#allocation13], 1
    %s3754 = scalar_lea.sflag [#allocation13], 1
    %3755 = vsyncpa %s3754, 1
    %3756 = vsyncpa [#allocation16], 1
    %3757 = vsyncpa [#allocation5], 1
    %s3758 = scalar_lea.sflag [#allocation5], 1
    %3759 = vsyncpa %s3758, 1
    %3760 = vsyncpa [#allocation19], 1
    %s3761 = scalar_lea.sflag [#allocation19], 1
    %3762 = vsyncpa %s3761, 1

</llo_original>
